<compile_context>
chip_gen: v7x
topology: tpu7x:2x2x1
jax: 0.10.0
libtpu: 0.0.40
codegen_flags: <defaults>
</compile_context>

<pallas_src>
import functools

import jax
import jax.numpy as jnp
from jax.experimental import pallas as pl
from jax.experimental.pallas import tpu as pltpu

LANE = 128
TF = 128          # feature tile (lane dim of conv output / pooled features)


def _round_up(x, m):
    return ((x + m - 1) // m) * m


def _pick_rows_per_band(H, Wp2, cap=256):
    """Largest divisor of H whose band (R * Wp2 positions) fits the vreg budget."""
    best = 1
    for r in range(1, H + 1):
        if H % r == 0 and r * Wp2 <= cap:
            best = r
    return best


# -----------------------------------------------------------------------------
# Fused kernel: 3x3 conv stem (9 shifted-tap matmuls, bf16 MXU / f32 acc)
# + bias + ReLU + global average pool, for one (image, feature-tile) pair.
#
#   x_ref   : (P_pad, C)   bf16  zero-padded image, rows flattened: p = hp*Wp2+wp
#   w_ref   : (9, C, TF)   bf16  conv weight, tap-major
#   cb_ref  : (1, TF)      f32   conv bias
#   mask_ref: (TPB, 1)     f32   per-band column mask (1.0 = real output column)
#   o_ref   : (1, 8, TF)   f32   pooled features (row-broadcast x8, lane-dense)
#   acc_ref : (TPB, TF)    f32   per-position partial sums, reduced once at end
# -----------------------------------------------------------------------------
def _conv_gap_kernel(x_ref, w_ref, cb_ref, mask_ref, o_ref, acc_ref, *,
                     Wp2, NB, TPB, inv_hw):
    acc_ref[...] = jnp.zeros_like(acc_ref)
    mask = mask_ref[...]                                   # (TPB, 1)

    def band_step(b):
        base = b * TPB                                     # band starts on a row boundary
        ft = jnp.zeros((TPB, TF), jnp.float32)
        for t in range(9):                                 # static unroll over 3x3 taps
            di, dj = divmod(t, 3)
            src = x_ref[pl.ds(base + di * Wp2 + dj, TPB), :]        # (TPB, C) bf16
            ft = ft + jnp.dot(src, w_ref[t],
                              preferred_element_type=jnp.float32)   # (TPB, TF) f32
        ft = jnp.maximum(ft + cb_ref[...], 0.0) * mask     # bias + ReLU, drop W-halo cols
        acc_ref[...] += ft                                 # dense VALU accumulation

    if NB <= 8:                                            # short trip count: fully static
        for b in range(NB):
            band_step(b)
    else:
        def body(b, carry):
            band_step(b)
            return carry
        jax.lax.fori_loop(0, NB, body, 0)

    pooled = jnp.sum(acc_ref[...], axis=0, keepdims=True) * inv_hw  # (1, TF), one reduce
    o_ref[...] = jnp.broadcast_to(pooled[None], o_ref.shape).astype(o_ref.dtype)


# -----------------------------------------------------------------------------
# Wrapper: layout plumbing (pad / flatten / bf16 cast), pallas_call, FC head.
# -----------------------------------------------------------------------------
@jax.jit
def img_classifier_forward(x_nchw, params):
    N, C, H, W = x_nchw.shape
    Hp2, Wp2 = H + 2, W + 2
    F_pad = params["conv_w_taps"].shape[-1]
    NF = F_pad // TF
    n_features, n_class = params["fc_w"].shape

    R = _pick_rows_per_band(H, Wp2)         # image rows per inner band (divides H)
    TPB = R * Wp2                           # positions per band
    NB = H // R                             # bands per image (exact, no tail)
    P_pad = _round_up(Hp2 * Wp2 + 2, 8)     # covers max tap offset of the last band
    inv_hw = 1.0 / float(H * W)

    # bf16 cast FIRST, then pad/flatten: ~1x input bytes, no im2col, no f32 blowup.
    xb = x_nchw.astype(jnp.bfloat16)
    xp = jnp.pad(xb, ((0, 0), (0, 0), (1, 1), (1, 1)))               # (N, C, Hp2, Wp2)
    xpf = jnp.transpose(xp, (0, 2, 3, 1)).reshape(N, Hp2 * Wp2, C)   # (N, P, C)
    xpf = jnp.pad(xpf, ((0, 0), (0, P_pad - Hp2 * Wp2), (0, 0)))

    # Column-validity mask for one band (band-independent: bands start on rows).
    col = jnp.arange(TPB, dtype=jnp.int32) % Wp2
    col_mask = (col < W).astype(jnp.float32).reshape(TPB, 1)

    kernel = functools.partial(_conv_gap_kernel, Wp2=Wp2, NB=NB, TPB=TPB,
                               inv_hw=inv_hw)

    flops = 2 * N * H * W * 9 * C * F_pad
    bytes_accessed = (N * P_pad * C * 2 + 9 * C * F_pad * 2 + F_pad * 4
                      + TPB * 4 + N * 8 * F_pad * 4)

    # VMEM budget from actual (tiling-padded) block sizes, clamped to sane limits.
    vmem_need = (2 * _round_up(P_pad, 16) * LANE * 2        # x block (double-buffered)
                 + 2 * 9 * 16 * LANE * 2                    # conv weight block
                 + 2 * 8 * LANE * 4                         # conv bias block
                 + 2 * _round_up(TPB, 16) * LANE * 4        # column-mask block
                 + _round_up(TPB, 8) * TF * 4               # GAP accumulator scratch
                 + 2 * 8 * TF * 4)                          # pooled output block
    vmem_limit = int(min(100 * 2 ** 20, max(32 * 2 ** 20, 2 * vmem_need)))

    pooled8 = pl.pallas_call(
        kernel,
        out_shape=jax.ShapeDtypeStruct((N, 8, F_pad), jnp.float32),
        grid=(N, NF),
        in_specs=[
            pl.BlockSpec((None, P_pad, C), lambda n, f: (n, 0, 0)),  # whole padded image
            pl.BlockSpec((9, C, TF), lambda n, f: (0, 0, f)),        # conv weight tile
            pl.BlockSpec((1, TF), lambda n, f: (0, f)),              # conv bias tile
            pl.BlockSpec((TPB, 1), lambda n, f: (0, 0)),             # column mask
        ],
        out_specs=pl.BlockSpec((1, 8, TF), lambda n, f: (n, 0, f)),
        scratch_shapes=[pltpu.VMEM((TPB, TF), jnp.float32)],
        compiler_params=pltpu.CompilerParams(
            dimension_semantics=("parallel", "parallel"),
            vmem_limit_bytes=vmem_limit),
        cost_estimate=pl.CostEstimate(flops=flops, transcendentals=0,
                                      bytes_accessed=bytes_accessed),
    )(xpf, params["conv_w_taps"], params["conv_b_row"], col_mask)

    # FC head in XLA: batched GEMM across N, padded feature columns sliced off.
    pooled = pooled8[:, 0, :n_features]                              # (N, n_features)
    return pooled @ params["fc_w"] + params["fc_b"]                  # (N, n_class)


# -----------------------------------------------------------------------------
# Parameter construction (PyTorch layouts -> kernel layouts) and JAX reference.
# -----------------------------------------------------------------------------
def init_params(key, in_ch, n_features, n_class):
    k1, k2, k3, k4 = jax.random.split(key, 4)
    F_pad = _round_up(n_features, TF)

    # Conv2d weight, PyTorch layout [F, Cin, 3, 3] -> tap-major [9, Cin, F_pad].
    conv_w = jax.random.normal(k1, (n_features, in_ch, 3, 3), jnp.float32) * 0.1
    w_taps = jnp.transpose(conv_w, (2, 3, 1, 0)).reshape(9, in_ch, n_features)
    w_taps = jnp.pad(w_taps, ((0, 0), (0, 0), (0, F_pad - n_features)))

    conv_b = jax.random.normal(k2, (n_features,), jnp.float32) * 0.1
    conv_b_row = jnp.pad(conv_b, (0, F_pad - n_features)).reshape(1, F_pad)

    # Linear head, PyTorch layout [n_class, F]; applied as pooled @ W.T + b in XLA.
    fc_w_pt = jax.random.normal(k3, (n_class, n_features), jnp.float32) * 0.1
    fc_b = jax.random.normal(k4, (n_class,), jnp.float32) * 0.1

    return {
        "conv_w_taps": w_taps.astype(jnp.bfloat16),
        "conv_b_row": conv_b_row,
        "fc_w": fc_w_pt.T,                       # (n_features, n_class)
        "fc_b": fc_b.reshape(1, n_class),
        # raw copies for the pure-JAX reference
        "conv_w_raw": conv_w,
        "conv_b_raw": conv_b,
    }


def reference_forward(x_nchw, params):
    """Pure-JAX reference (same intentional bf16 quantization of x / conv weight)."""
    xq = x_nchw.astype(jnp.bfloat16).astype(jnp.float32)
    wq = params["conv_w_raw"].astype(jnp.bfloat16).astype(jnp.float32)
    y = jax.lax.conv_general_dilated(
        xq, wq, window_strides=(1, 1), padding="SAME",
        dimension_numbers=("NCHW", "OIHW", "NCHW"),
        precision=jax.lax.Precision.HIGHEST)
    y = jnp.maximum(y + params["conv_b_raw"][None, :, None, None], 0.0)
    pooled = y.mean(axis=(2, 3))
    return pooled @ params["fc_w"] + params["fc_b"]


if __name__ == "__main__":
    # Small shapes consistent with an image-classifier forward.
    N, Cin, H, W = 2, 4, 16, 16
    n_features, n_class = 32, 8

    key = jax.random.PRNGKey(0)
    kx, kp = jax.random.split(key)
    x = jax.random.normal(kx, (N, Cin, H, W), jnp.float32)   # NCHW, as in PyTorch
    params = init_params(kp, Cin, n_features, n_class)

    logits = jax.block_until_ready(img_classifier_forward(x, params))
    ref = reference_forward(x, params)

    assert logits.shape == (N, n_class)
    err = float(jnp.max(jnp.abs(logits - ref)))
    # tolerance reflects the intentional bf16 quantization of x / conv weights
    assert jnp.allclose(logits, ref, atol=1e-2, rtol=1e-2), err
    print("KERNEL_OK")
</pallas_src>

<mosaic_0001>
module attributes {stable_mosaic.version = 11 : i64} {
  func.func @_conv_gap_kernel(%arg0: i32, %arg1: i32, %arg2: memref<1x328x4xbf16, #tpu.memory_space<vmem>>, %arg3: memref<9x4x128xbf16, #tpu.memory_space<vmem>>, %arg4: memref<1x128xf32, #tpu.memory_space<vmem>>, %arg5: memref<144x1xf32, #tpu.memory_space<vmem>>, %arg6: memref<1x8x128xf32, #tpu.memory_space<vmem>>, %arg7: memref<144x128xf32, #tpu.memory_space<vmem>>) attributes {dimension_semantics = [#tpu.dimension_semantics<parallel>, #tpu.dimension_semantics<parallel>], iteration_bounds = array<i64: 2, 1>, scalar_prefetch = 0 : i64, scratch_operands = 1 : i64, tpu.core_type = #tpu.core_type<tc>, window_params = [{transform_indices = @transform_0, window_bounds = array<i64: 1, 328, 4>}, {transform_indices = @transform_1, window_bounds = array<i64: 9, 4, 128>}, {transform_indices = @transform_2, window_bounds = array<i64: 1, 128>}, {pipeline_mode = #tpu.pipeline_mode<synchronous>, transform_indices = @transform_3, window_bounds = array<i64: 144, 1>}, {transform_indices = @transform_4, window_bounds = array<i64: 1, 8, 128>}]} {
    %cst = arith.constant 0.000000e+00 : f32
    %0 = vector.broadcast %cst : f32 to vector<144x128xf32>
    %c0 = arith.constant 0 : index
    %c0_0 = arith.constant 0 : index
    %1 = vector.load %arg7[%c0, %c0_0] : memref<144x128xf32, #tpu.memory_space<vmem>>, vector<144x128xf32>
    tpu.vector_store %arg7[%c0, %c0_0], %0 {strides = array<i32>} : memref<144x128xf32, #tpu.memory_space<vmem>>, vector<144x128xf32>,
    %c0_1 = arith.constant 0 : index
    %c0_2 = arith.constant 0 : index
    %2 = vector.load %arg5[%c0_1, %c0_2] : memref<144x1xf32, #tpu.memory_space<vmem>>, vector<144x1xf32>
    %cst_3 = arith.constant 0.000000e+00 : f32
    %3 = vector.broadcast %cst_3 : f32 to vector<144x128xf32>
    %c0_4 = arith.constant 0 : index
    %c0_5 = arith.constant 0 : index
    %c0_6 = arith.constant 0 : index
    %4 = vector.load %arg2[%c0_4, %c0_5, %c0_6] : memref<1x328x4xbf16, #tpu.memory_space<vmem>>, vector<1x144x4xbf16>
    %5 = vector.shape_cast %4 : vector<1x144x4xbf16> to vector<144x4xbf16>
    %c0_7 = arith.constant 0 : index
    %c0_8 = arith.constant 0 : index
    %c0_9 = arith.constant 0 : index
    %6 = vector.load %arg3[%c0_7, %c0_8, %c0_9] : memref<9x4x128xbf16, #tpu.memory_space<vmem>>, vector<1x4x128xbf16>
    %7 = vector.shape_cast %6 : vector<1x4x128xbf16> to vector<4x128xbf16>
    %cst_10 = arith.constant dense<0.000000e+00> : vector<144x128xf32>
    %8 = tpu.matmul %5, %7, %cst_10 {dimension_numbers = #tpu.dot_dimension_numbers<[1], [0], [0], [1], [0, 0, 1, 1], [], []>} : vector<144x4xbf16>, vector<4x128xbf16>, vector<144x128xf32> -> vector<144x128xf32>
    %9 = arith.addf %3, %8 : vector<144x128xf32>
    %c0_11 = arith.constant 0 : index
    %c1 = arith.constant 1 : index
    %c0_12 = arith.constant 0 : index
    %10 = vector.load %arg2[%c0_11, %c1, %c0_12] : memref<1x328x4xbf16, #tpu.memory_space<vmem>>, vector<1x144x4xbf16>
    %11 = vector.shape_cast %10 : vector<1x144x4xbf16> to vector<144x4xbf16>
    %c1_13 = arith.constant 1 : index
    %c0_14 = arith.constant 0 : index
    %c0_15 = arith.constant 0 : index
    %12 = vector.load %arg3[%c1_13, %c0_14, %c0_15] : memref<9x4x128xbf16, #tpu.memory_space<vmem>>, vector<1x4x128xbf16>
    %13 = vector.shape_cast %12 : vector<1x4x128xbf16> to vector<4x128xbf16>
    %cst_16 = arith.constant dense<0.000000e+00> : vector<144x128xf32>
    %14 = tpu.matmul %11, %13, %cst_16 {dimension_numbers = #tpu.dot_dimension_numbers<[1], [0], [0], [1], [0, 0, 1, 1], [], []>} : vector<144x4xbf16>, vector<4x128xbf16>, vector<144x128xf32> -> vector<144x128xf32>
    %15 = arith.addf %9, %14 : vector<144x128xf32>
    %c0_17 = arith.constant 0 : index
    %c2 = arith.constant 2 : index
    %c0_18 = arith.constant 0 : index
    %16 = vector.load %arg2[%c0_17, %c2, %c0_18] : memref<1x328x4xbf16, #tpu.memory_space<vmem>>, vector<1x144x4xbf16>
    %17 = vector.shape_cast %16 : vector<1x144x4xbf16> to vector<144x4xbf16>
    %c2_19 = arith.constant 2 : index
    %c0_20 = arith.constant 0 : index
    %c0_21 = arith.constant 0 : index
    %18 = vector.load %arg3[%c2_19, %c0_20, %c0_21] : memref<9x4x128xbf16, #tpu.memory_space<vmem>>, vector<1x4x128xbf16>
    %19 = vector.shape_cast %18 : vector<1x4x128xbf16> to vector<4x128xbf16>
    %cst_22 = arith.constant dense<0.000000e+00> : vector<144x128xf32>
    %20 = tpu.matmul %17, %19, %cst_22 {dimension_numbers = #tpu.dot_dimension_numbers<[1], [0], [0], [1], [0, 0, 1, 1], [], []>} : vector<144x4xbf16>, vector<4x128xbf16>, vector<144x128xf32> -> vector<144x128xf32>
    %21 = arith.addf %15, %20 : vector<144x128xf32>
    %c0_23 = arith.constant 0 : index
    %c18 = arith.constant 18 : index
    %c0_24 = arith.constant 0 : index
    %22 = vector.load %arg2[%c0_23, %c18, %c0_24] : memref<1x328x4xbf16, #tpu.memory_space<vmem>>, vector<1x144x4xbf16>
    %23 = vector.shape_cast %22 : vector<1x144x4xbf16> to vector<144x4xbf16>
    %c3 = arith.constant 3 : index
    %c0_25 = arith.constant 0 : index
    %c0_26 = arith.constant 0 : index
    %24 = vector.load %arg3[%c3, %c0_25, %c0_26] : memref<9x4x128xbf16, #tpu.memory_space<vmem>>, vector<1x4x128xbf16>
    %25 = vector.shape_cast %24 : vector<1x4x128xbf16> to vector<4x128xbf16>
    %cst_27 = arith.constant dense<0.000000e+00> : vector<144x128xf32>
    %26 = tpu.matmul %23, %25, %cst_27 {dimension_numbers = #tpu.dot_dimension_numbers<[1], [0], [0], [1], [0, 0, 1, 1], [], []>} : vector<144x4xbf16>, vector<4x128xbf16>, vector<144x128xf32> -> vector<144x128xf32>
    %27 = arith.addf %21, %26 : vector<144x128xf32>
    %c0_28 = arith.constant 0 : index
    %c19 = arith.constant 19 : index
    %c0_29 = arith.constant 0 : index
    %28 = vector.load %arg2[%c0_28, %c19, %c0_29] : memref<1x328x4xbf16, #tpu.memory_space<vmem>>, vector<1x144x4xbf16>
    %29 = vector.shape_cast %28 : vector<1x144x4xbf16> to vector<144x4xbf16>
    %c4 = arith.constant 4 : index
    %c0_30 = arith.constant 0 : index
    %c0_31 = arith.constant 0 : index
    %30 = vector.load %arg3[%c4, %c0_30, %c0_31] : memref<9x4x128xbf16, #tpu.memory_space<vmem>>, vector<1x4x128xbf16>
    %31 = vector.shape_cast %30 : vector<1x4x128xbf16> to vector<4x128xbf16>
    %cst_32 = arith.constant dense<0.000000e+00> : vector<144x128xf32>
    %32 = tpu.matmul %29, %31, %cst_32 {dimension_numbers = #tpu.dot_dimension_numbers<[1], [0], [0], [1], [0, 0, 1, 1], [], []>} : vector<144x4xbf16>, vector<4x128xbf16>, vector<144x128xf32> -> vector<144x128xf32>
    %33 = arith.addf %27, %32 : vector<144x128xf32>
    %c0_33 = arith.constant 0 : index
    %c20 = arith.constant 20 : index
    %c0_34 = arith.constant 0 : index
    %34 = vector.load %arg2[%c0_33, %c20, %c0_34] : memref<1x328x4xbf16, #tpu.memory_space<vmem>>, vector<1x144x4xbf16>
    %35 = vector.shape_cast %34 : vector<1x144x4xbf16> to vector<144x4xbf16>
    %c5 = arith.constant 5 : index
    %c0_35 = arith.constant 0 : index
    %c0_36 = arith.constant 0 : index
    %36 = vector.load %arg3[%c5, %c0_35, %c0_36] : memref<9x4x128xbf16, #tpu.memory_space<vmem>>, vector<1x4x128xbf16>
    %37 = vector.shape_cast %36 : vector<1x4x128xbf16> to vector<4x128xbf16>
    %cst_37 = arith.constant dense<0.000000e+00> : vector<144x128xf32>
    %38 = tpu.matmul %35, %37, %cst_37 {dimension_numbers = #tpu.dot_dimension_numbers<[1], [0], [0], [1], [0, 0, 1, 1], [], []>} : vector<144x4xbf16>, vector<4x128xbf16>, vector<144x128xf32> -> vector<144x128xf32>
    %39 = arith.addf %33, %38 : vector<144x128xf32>
    %c0_38 = arith.constant 0 : index
    %c36 = arith.constant 36 : index
    %c0_39 = arith.constant 0 : index
    %40 = vector.load %arg2[%c0_38, %c36, %c0_39] : memref<1x328x4xbf16, #tpu.memory_space<vmem>>, vector<1x144x4xbf16>
    %41 = vector.shape_cast %40 : vector<1x144x4xbf16> to vector<144x4xbf16>
    %c6 = arith.constant 6 : index
    %c0_40 = arith.constant 0 : index
    %c0_41 = arith.constant 0 : index
    %42 = vector.load %arg3[%c6, %c0_40, %c0_41] : memref<9x4x128xbf16, #tpu.memory_space<vmem>>, vector<1x4x128xbf16>
    %43 = vector.shape_cast %42 : vector<1x4x128xbf16> to vector<4x128xbf16>
    %cst_42 = arith.constant dense<0.000000e+00> : vector<144x128xf32>
    %44 = tpu.matmul %41, %43, %cst_42 {dimension_numbers = #tpu.dot_dimension_numbers<[1], [0], [0], [1], [0, 0, 1, 1], [], []>} : vector<144x4xbf16>, vector<4x128xbf16>, vector<144x128xf32> -> vector<144x128xf32>
    %45 = arith.addf %39, %44 : vector<144x128xf32>
    %c0_43 = arith.constant 0 : index
    %c37 = arith.constant 37 : index
    %c0_44 = arith.constant 0 : index
    %46 = vector.load %arg2[%c0_43, %c37, %c0_44] : memref<1x328x4xbf16, #tpu.memory_space<vmem>>, vector<1x144x4xbf16>
    %47 = vector.shape_cast %46 : vector<1x144x4xbf16> to vector<144x4xbf16>
    %c7 = arith.constant 7 : index
    %c0_45 = arith.constant 0 : index
    %c0_46 = arith.constant 0 : index
    %48 = vector.load %arg3[%c7, %c0_45, %c0_46] : memref<9x4x128xbf16, #tpu.memory_space<vmem>>, vector<1x4x128xbf16>
    %49 = vector.shape_cast %48 : vector<1x4x128xbf16> to vector<4x128xbf16>
    %cst_47 = arith.constant dense<0.000000e+00> : vector<144x128xf32>
    %50 = tpu.matmul %47, %49, %cst_47 {dimension_numbers = #tpu.dot_dimension_numbers<[1], [0], [0], [1], [0, 0, 1, 1], [], []>} : vector<144x4xbf16>, vector<4x128xbf16>, vector<144x128xf32> -> vector<144x128xf32>
    %51 = arith.addf %45, %50 : vector<144x128xf32>
    %c0_48 = arith.constant 0 : index
    %c38 = arith.constant 38 : index
    %c0_49 = arith.constant 0 : index
    %52 = vector.load %arg2[%c0_48, %c38, %c0_49] : memref<1x328x4xbf16, #tpu.memory_space<vmem>>, vector<1x144x4xbf16>
    %53 = vector.shape_cast %52 : vector<1x144x4xbf16> to vector<144x4xbf16>
    %c8 = arith.constant 8 : index
    %c0_50 = arith.constant 0 : index
    %c0_51 = arith.constant 0 : index
    %54 = vector.load %arg3[%c8, %c0_50, %c0_51] : memref<9x4x128xbf16, #tpu.memory_space<vmem>>, vector<1x4x128xbf16>
    %55 = vector.shape_cast %54 : vector<1x4x128xbf16> to vector<4x128xbf16>
    %cst_52 = arith.constant dense<0.000000e+00> : vector<144x128xf32>
    %56 = tpu.matmul %53, %55, %cst_52 {dimension_numbers = #tpu.dot_dimension_numbers<[1], [0], [0], [1], [0, 0, 1, 1], [], []>} : vector<144x4xbf16>, vector<4x128xbf16>, vector<144x128xf32> -> vector<144x128xf32>
    %57 = arith.addf %51, %56 : vector<144x128xf32>
    %c0_53 = arith.constant 0 : index
    %c0_54 = arith.constant 0 : index
    %58 = vector.load %arg4[%c0_53, %c0_54] : memref<1x128xf32, #tpu.memory_space<vmem>>, vector<1x128xf32>
    %59 = vector.broadcast %58 : vector<1x128xf32> to vector<144x128xf32>
    %60 = arith.addf %57, %59 : vector<144x128xf32>
    %cst_55 = arith.constant 0.000000e+00 : f32
    %61 = vector.broadcast %cst_55 : f32 to vector<144x128xf32>
    %62 = arith.maximumf %60, %61 : vector<144x128xf32>
    %63 = vector.broadcast %2 : vector<144x1xf32> to vector<144x128xf32>
    %64 = arith.mulf %62, %63 : vector<144x128xf32>
    %c0_56 = arith.constant 0 : index
    %c0_57 = arith.constant 0 : index
    %65 = vector.load %arg7[%c0_56, %c0_57] : memref<144x128xf32, #tpu.memory_space<vmem>>, vector<144x128xf32>
    %66 = arith.addf %65, %64 : vector<144x128xf32>
    %c0_58 = arith.constant 0 : index
    %c0_59 = arith.constant 0 : index
    %67 = vector.load %arg7[%c0_58, %c0_59] : memref<144x128xf32, #tpu.memory_space<vmem>>, vector<144x128xf32>
    tpu.vector_store %arg7[%c0_58, %c0_59], %66 {strides = array<i32>} : memref<144x128xf32, #tpu.memory_space<vmem>>, vector<144x128xf32>,
    %cst_60 = arith.constant 0.000000e+00 : f32
    %68 = vector.broadcast %cst_60 : f32 to vector<144x128xf32>
    %c0_61 = arith.constant 0 : index
    %c144 = arith.constant 144 : index
    %c0_62 = arith.constant 0 : index
    %69 = vector.load %arg2[%c0_61, %c144, %c0_62] : memref<1x328x4xbf16, #tpu.memory_space<vmem>>, vector<1x144x4xbf16>
    %70 = vector.shape_cast %69 : vector<1x144x4xbf16> to vector<144x4xbf16>
    %c0_63 = arith.constant 0 : index
    %c0_64 = arith.constant 0 : index
    %c0_65 = arith.constant 0 : index
    %71 = vector.load %arg3[%c0_63, %c0_64, %c0_65] : memref<9x4x128xbf16, #tpu.memory_space<vmem>>, vector<1x4x128xbf16>
    %72 = vector.shape_cast %71 : vector<1x4x128xbf16> to vector<4x128xbf16>
    %cst_66 = arith.constant dense<0.000000e+00> : vector<144x128xf32>
    %73 = tpu.matmul %70, %72, %cst_66 {dimension_numbers = #tpu.dot_dimension_numbers<[1], [0], [0], [1], [0, 0, 1, 1], [], []>} : vector<144x4xbf16>, vector<4x128xbf16>, vector<144x128xf32> -> vector<144x128xf32>
    %74 = arith.addf %68, %73 : vector<144x128xf32>
    %c0_67 = arith.constant 0 : index
    %c145 = arith.constant 145 : index
    %c0_68 = arith.constant 0 : index
    %75 = vector.load %arg2[%c0_67, %c145, %c0_68] : memref<1x328x4xbf16, #tpu.memory_space<vmem>>, vector<1x144x4xbf16>
    %76 = vector.shape_cast %75 : vector<1x144x4xbf16> to vector<144x4xbf16>
    %c1_69 = arith.constant 1 : index
    %c0_70 = arith.constant 0 : index
    %c0_71 = arith.constant 0 : index
    %77 = vector.load %arg3[%c1_69, %c0_70, %c0_71] : memref<9x4x128xbf16, #tpu.memory_space<vmem>>, vector<1x4x128xbf16>
    %78 = vector.shape_cast %77 : vector<1x4x128xbf16> to vector<4x128xbf16>
    %cst_72 = arith.constant dense<0.000000e+00> : vector<144x128xf32>
    %79 = tpu.matmul %76, %78, %cst_72 {dimension_numbers = #tpu.dot_dimension_numbers<[1], [0], [0], [1], [0, 0, 1, 1], [], []>} : vector<144x4xbf16>, vector<4x128xbf16>, vector<144x128xf32> -> vector<144x128xf32>
    %80 = arith.addf %74, %79 : vector<144x128xf32>
    %c0_73 = arith.constant 0 : index
    %c146 = arith.constant 146 : index
    %c0_74 = arith.constant 0 : index
    %81 = vector.load %arg2[%c0_73, %c146, %c0_74] : memref<1x328x4xbf16, #tpu.memory_space<vmem>>, vector<1x144x4xbf16>
    %82 = vector.shape_cast %81 : vector<1x144x4xbf16> to vector<144x4xbf16>
    %c2_75 = arith.constant 2 : index
    %c0_76 = arith.constant 0 : index
    %c0_77 = arith.constant 0 : index
    %83 = vector.load %arg3[%c2_75, %c0_76, %c0_77] : memref<9x4x128xbf16, #tpu.memory_space<vmem>>, vector<1x4x128xbf16>
    %84 = vector.shape_cast %83 : vector<1x4x128xbf16> to vector<4x128xbf16>
    %cst_78 = arith.constant dense<0.000000e+00> : vector<144x128xf32>
    %85 = tpu.matmul %82, %84, %cst_78 {dimension_numbers = #tpu.dot_dimension_numbers<[1], [0], [0], [1], [0, 0, 1, 1], [], []>} : vector<144x4xbf16>, vector<4x128xbf16>, vector<144x128xf32> -> vector<144x128xf32>
    %86 = arith.addf %80, %85 : vector<144x128xf32>
    %c0_79 = arith.constant 0 : index
    %c162 = arith.constant 162 : index
    %c0_80 = arith.constant 0 : index
    %87 = vector.load %arg2[%c0_79, %c162, %c0_80] : memref<1x328x4xbf16, #tpu.memory_space<vmem>>, vector<1x144x4xbf16>
    %88 = vector.shape_cast %87 : vector<1x144x4xbf16> to vector<144x4xbf16>
    %c3_81 = arith.constant 3 : index
    %c0_82 = arith.constant 0 : index
    %c0_83 = arith.constant 0 : index
    %89 = vector.load %arg3[%c3_81, %c0_82, %c0_83] : memref<9x4x128xbf16, #tpu.memory_space<vmem>>, vector<1x4x128xbf16>
    %90 = vector.shape_cast %89 : vector<1x4x128xbf16> to vector<4x128xbf16>
    %cst_84 = arith.constant dense<0.000000e+00> : vector<144x128xf32>
    %91 = tpu.matmul %88, %90, %cst_84 {dimension_numbers = #tpu.dot_dimension_numbers<[1], [0], [0], [1], [0, 0, 1, 1], [], []>} : vector<144x4xbf16>, vector<4x128xbf16>, vector<144x128xf32> -> vector<144x128xf32>
    %92 = arith.addf %86, %91 : vector<144x128xf32>
    %c0_85 = arith.constant 0 : index
    %c163 = arith.constant 163 : index
    %c0_86 = arith.constant 0 : index
    %93 = vector.load %arg2[%c0_85, %c163, %c0_86] : memref<1x328x4xbf16, #tpu.memory_space<vmem>>, vector<1x144x4xbf16>
    %94 = vector.shape_cast %93 : vector<1x144x4xbf16> to vector<144x4xbf16>
    %c4_87 = arith.constant 4 : index
    %c0_88 = arith.constant 0 : index
    %c0_89 = arith.constant 0 : index
    %95 = vector.load %arg3[%c4_87, %c0_88, %c0_89] : memref<9x4x128xbf16, #tpu.memory_space<vmem>>, vector<1x4x128xbf16>
    %96 = vector.shape_cast %95 : vector<1x4x128xbf16> to vector<4x128xbf16>
    %cst_90 = arith.constant dense<0.000000e+00> : vector<144x128xf32>
    %97 = tpu.matmul %94, %96, %cst_90 {dimension_numbers = #tpu.dot_dimension_numbers<[1], [0], [0], [1], [0, 0, 1, 1], [], []>} : vector<144x4xbf16>, vector<4x128xbf16>, vector<144x128xf32> -> vector<144x128xf32>
    %98 = arith.addf %92, %97 : vector<144x128xf32>
    %c0_91 = arith.constant 0 : index
    %c164 = arith.constant 164 : index
    %c0_92 = arith.constant 0 : index
    %99 = vector.load %arg2[%c0_91, %c164, %c0_92] : memref<1x328x4xbf16, #tpu.memory_space<vmem>>, vector<1x144x4xbf16>
    %100 = vector.shape_cast %99 : vector<1x144x4xbf16> to vector<144x4xbf16>
    %c5_93 = arith.constant 5 : index
    %c0_94 = arith.constant 0 : index
    %c0_95 = arith.constant 0 : index
    %101 = vector.load %arg3[%c5_93, %c0_94, %c0_95] : memref<9x4x128xbf16, #tpu.memory_space<vmem>>, vector<1x4x128xbf16>
    %102 = vector.shape_cast %101 : vector<1x4x128xbf16> to vector<4x128xbf16>
    %cst_96 = arith.constant dense<0.000000e+00> : vector<144x128xf32>
    %103 = tpu.matmul %100, %102, %cst_96 {dimension_numbers = #tpu.dot_dimension_numbers<[1], [0], [0], [1], [0, 0, 1, 1], [], []>} : vector<144x4xbf16>, vector<4x128xbf16>, vector<144x128xf32> -> vector<144x128xf32>
    %104 = arith.addf %98, %103 : vector<144x128xf32>
    %c0_97 = arith.constant 0 : index
    %c180 = arith.constant 180 : index
    %c0_98 = arith.constant 0 : index
    %105 = vector.load %arg2[%c0_97, %c180, %c0_98] : memref<1x328x4xbf16, #tpu.memory_space<vmem>>, vector<1x144x4xbf16>
    %106 = vector.shape_cast %105 : vector<1x144x4xbf16> to vector<144x4xbf16>
    %c6_99 = arith.constant 6 : index
    %c0_100 = arith.constant 0 : index
    %c0_101 = arith.constant 0 : index
    %107 = vector.load %arg3[%c6_99, %c0_100, %c0_101] : memref<9x4x128xbf16, #tpu.memory_space<vmem>>, vector<1x4x128xbf16>
    %108 = vector.shape_cast %107 : vector<1x4x128xbf16> to vector<4x128xbf16>
    %cst_102 = arith.constant dense<0.000000e+00> : vector<144x128xf32>
    %109 = tpu.matmul %106, %108, %cst_102 {dimension_numbers = #tpu.dot_dimension_numbers<[1], [0], [0], [1], [0, 0, 1, 1], [], []>} : vector<144x4xbf16>, vector<4x128xbf16>, vector<144x128xf32> -> vector<144x128xf32>
    %110 = arith.addf %104, %109 : vector<144x128xf32>
    %c0_103 = arith.constant 0 : index
    %c181 = arith.constant 181 : index
    %c0_104 = arith.constant 0 : index
    %111 = vector.load %arg2[%c0_103, %c181, %c0_104] : memref<1x328x4xbf16, #tpu.memory_space<vmem>>, vector<1x144x4xbf16>
    %112 = vector.shape_cast %111 : vector<1x144x4xbf16> to vector<144x4xbf16>
    %c7_105 = arith.constant 7 : index
    %c0_106 = arith.constant 0 : index
    %c0_107 = arith.constant 0 : index
    %113 = vector.load %arg3[%c7_105, %c0_106, %c0_107] : memref<9x4x128xbf16, #tpu.memory_space<vmem>>, vector<1x4x128xbf16>
    %114 = vector.shape_cast %113 : vector<1x4x128xbf16> to vector<4x128xbf16>
    %cst_108 = arith.constant dense<0.000000e+00> : vector<144x128xf32>
    %115 = tpu.matmul %112, %114, %cst_108 {dimension_numbers = #tpu.dot_dimension_numbers<[1], [0], [0], [1], [0, 0, 1, 1], [], []>} : vector<144x4xbf16>, vector<4x128xbf16>, vector<144x128xf32> -> vector<144x128xf32>
    %116 = arith.addf %110, %115 : vector<144x128xf32>
    %c0_109 = arith.constant 0 : index
    %c182 = arith.constant 182 : index
    %c0_110 = arith.constant 0 : index
    %117 = vector.load %arg2[%c0_109, %c182, %c0_110] : memref<1x328x4xbf16, #tpu.memory_space<vmem>>, vector<1x144x4xbf16>
    %118 = vector.shape_cast %117 : vector<1x144x4xbf16> to vector<144x4xbf16>
    %c8_111 = arith.constant 8 : index
    %c0_112 = arith.constant 0 : index
    %c0_113 = arith.constant 0 : index
    %119 = vector.load %arg3[%c8_111, %c0_112, %c0_113] : memref<9x4x128xbf16, #tpu.memory_space<vmem>>, vector<1x4x128xbf16>
    %120 = vector.shape_cast %119 : vector<1x4x128xbf16> to vector<4x128xbf16>
    %cst_114 = arith.constant dense<0.000000e+00> : vector<144x128xf32>
    %121 = tpu.matmul %118, %120, %cst_114 {dimension_numbers = #tpu.dot_dimension_numbers<[1], [0], [0], [1], [0, 0, 1, 1], [], []>} : vector<144x4xbf16>, vector<4x128xbf16>, vector<144x128xf32> -> vector<144x128xf32>
    %122 = arith.addf %116, %121 : vector<144x128xf32>
    %c0_115 = arith.constant 0 : index
    %c0_116 = arith.constant 0 : index
    %123 = vector.load %arg4[%c0_115, %c0_116] : memref<1x128xf32, #tpu.memory_space<vmem>>, vector<1x128xf32>
    %124 = vector.broadcast %123 : vector<1x128xf32> to vector<144x128xf32>
    %125 = arith.addf %122, %124 : vector<144x128xf32>
    %cst_117 = arith.constant 0.000000e+00 : f32
    %126 = vector.broadcast %cst_117 : f32 to vector<144x128xf32>
    %127 = arith.maximumf %125, %126 : vector<144x128xf32>
    %128 = vector.broadcast %2 : vector<144x1xf32> to vector<144x128xf32>
    %129 = arith.mulf %127, %128 : vector<144x128xf32>
    %c0_118 = arith.constant 0 : index
    %c0_119 = arith.constant 0 : index
    %130 = vector.load %arg7[%c0_118, %c0_119] : memref<144x128xf32, #tpu.memory_space<vmem>>, vector<144x128xf32>
    %131 = arith.addf %130, %129 : vector<144x128xf32>
    %c0_120 = arith.constant 0 : index
    %c0_121 = arith.constant 0 : index
    %132 = vector.load %arg7[%c0_120, %c0_121] : memref<144x128xf32, #tpu.memory_space<vmem>>, vector<144x128xf32>
    tpu.vector_store %arg7[%c0_120, %c0_121], %131 {strides = array<i32>} : memref<144x128xf32, #tpu.memory_space<vmem>>, vector<144x128xf32>,
    %c0_122 = arith.constant 0 : index
    %c0_123 = arith.constant 0 : index
    %133 = vector.load %arg7[%c0_122, %c0_123] : memref<144x128xf32, #tpu.memory_space<vmem>>, vector<144x128xf32>
    %cst_124 = arith.constant dense<0.000000e+00> : vector<128xf32>
    %134 = vector.multi_reduction <add>, %133, %cst_124 [0] : vector<144x128xf32> to vector<128xf32>
    %135 = vector.shape_cast %134 : vector<128xf32> to vector<1x128xf32>
    %cst_125 = arith.constant 3.906250e-03 : f32
    %136 = vector.broadcast %cst_125 : f32 to vector<1x128xf32>
    %137 = arith.mulf %135, %136 : vector<1x128xf32>
    %138 = vector.shape_cast %137 : vector<1x128xf32> to vector<1x1x128xf32>
    %139 = vector.shape_cast %138 : vector<1x1x128xf32> to vector<1x1x128xf32>
    %140 = vector.broadcast %139 : vector<1x1x128xf32> to vector<1x8x128xf32>
    %c0_126 = arith.constant 0 : index
    %c0_127 = arith.constant 0 : index
    %c0_128 = arith.constant 0 : index
    %141 = vector.load %arg6[%c0_126, %c0_127, %c0_128] : memref<1x8x128xf32, #tpu.memory_space<vmem>>, vector<1x8x128xf32>
    tpu.vector_store %arg6[%c0_126, %c0_127, %c0_128], %140 {strides = array<i32>} : memref<1x8x128xf32, #tpu.memory_space<vmem>>, vector<1x8x128xf32>,
    return
  }
  func.func @transform_0(%arg0: i32, %arg1: i32) -> (i32, i32, i32) {
    %c0_i32 = arith.constant 0 : i32
    %c0_i32_0 = arith.constant 0 : i32
    %c0_i32_1 = arith.constant 0 : i32
    return %arg0, %c0_i32, %c0_i32_0 : i32, i32, i32
  }
  func.func @transform_1(%arg0: i32, %arg1: i32) -> (i32, i32, i32) {
    %c0_i32 = arith.constant 0 : i32
    %c0_i32_0 = arith.constant 0 : i32
    %c0_i32_1 = arith.constant 0 : i32
    return %c0_i32, %c0_i32_0, %arg1 : i32, i32, i32
  }
  func.func @transform_2(%arg0: i32, %arg1: i32) -> (i32, i32) {
    %c0_i32 = arith.constant 0 : i32
    %c0_i32_0 = arith.constant 0 : i32
    return %c0_i32, %arg1 : i32, i32
  }
  func.func @transform_3(%arg0: i32, %arg1: i32) -> (i32, i32) {
    %c0_i32 = arith.constant 0 : i32
    %c0_i32_0 = arith.constant 0 : i32
    %c0_i32_1 = arith.constant 0 : i32
    return %c0_i32, %c0_i32_0 : i32, i32
  }
  func.func @transform_4(%arg0: i32, %arg1: i32) -> (i32, i32, i32) {
    %c0_i32 = arith.constant 0 : i32
    %c0_i32_0 = arith.constant 0 : i32
    return %arg0, %c0_i32, %arg1 : i32, i32, i32
  }
}

</mosaic_0001>

<llo_original>
// kernel: img_classifier_forward.1
$region0: #{img_classifier_forward.1}
  #allocation0 [shape = 'u32[]', space=smem, size = 0x4, offset = 0x4, fixed_abs, tag = 'smem constant byte address 0x4 - core index']
  #allocation1 [shape = 'u32[144,128]{1,0:T(1,128)}', space=vmem, size = 0x12000, scoped, tag = 'internal scratch']
  #allocation2 [shape = 'f32[144,128]{1,0:T(8,128)}', space=vmem, size = 0x12000, scoped, tag = 'scratch operand']
  %s0 = inlined_call_operand.vmem [shape: bf16[2,328,4], index: 0, kind: input, shape index: {}]
  %s1 = inlined_call_operand.vmem [shape: bf16[9,4,128], index: 1, kind: input, shape index: {}]
  %s2 = inlined_call_operand.vmem [shape: f32[1,128], index: 2, kind: input, shape index: {}]
  %s3 = inlined_call_operand.vmem [shape: f32[144,1], index: 3, kind: input, shape index: {}]
  %s4 = inlined_call_operand.vmem [shape: f32[2,8,128], index: 4, kind: output, shape index: {}]
  %s5 = sld [smem:[#allocation0]]
  $region49: #{img_classifier_forward.1} parent=0
    _
  %s7 = ssub.s32 1, %s5
  %s8 = scalar_select 0, %s7, %s5
  loop: start=0, step=1, limit=4
  $region2: #{img_classifier_forward.1} parent=0 // loop_pre_header
    _
  $region3: #{img_classifier_forward.1} parent=0 // loop_header
    %s10 = sphi 0, %s14
    %p11 = scmp.ge.s32.totalorder %s10, 4
    %s17 = sphi 0, %s29
    %s18 = sphi 0, %s25
    %s19 = sphi 0, %s17
    %s20 = sphi 0, %s18
    %s21 = sphi 0, %s19
    %s22 = sphi 0, %s20
    %s32 = sphi 0, %s34
    %s35 = sphi 0, %s32
    %s36 = sphi 0, %s35
    %s52 = sphi 0, %s36
    %s58 = sphi 0, %s60
    %s61 = sphi 0, %s58
    %s62 = sphi 0, %s61
    %s78 = sphi 0, %s62
    %s84 = sphi 0, %s86
    %s87 = sphi 0, %s84
    %s88 = sphi 0, %s87
    %s104 = sphi 0, %s88
    %s108 = sphi 0, %s108
    %s110 = sphi 0, %s108
    %s111 = sphi 0, %s110
    %s125 = sphi 0, %s111
    %s133 = sphi 0, %s135
    %s136 = sphi 0, %s133
    %s137 = sphi 0, %s136
    %s153 = sphi 0, %s137
  $region4: #{img_classifier_forward.1} parent=0 // loop_header_branch
    %13 = sbr.rel (%p11) target = $region8
  $region5: #{img_classifier_forward.1} parent=0 // loop_body
    %s15 = ssub.s32 %s10, 1
    %s16 = ssub.s32 %s10, 2
    %s23 = sadd.s32 1, %s18
    %p24 = scmp.ge.s32.totalorder %s23, 1
    %s25 = scalar_select %p24, 0, %s23
    %s26 = sadd.s32 1, %s17
    %s27 = scalar_select %p24, %s26, %s17
    %p28 = scmp.ge.s32.totalorder %s27, 2
    %s29 = scalar_select %p28, 0, %s27
    %s30 = ssub.s32 %s17, %s29
    %p31 = scmp.eq.s32.totalorder %s30, 0
    %s33 = sadd.s32 %s32, 1
    %s34 = scalar_select %p31, %s32, %s33
    %p37 = pneg %p31
    %p38 = scmp.eq.s32.totalorder %s10, 1
    %p39 = por %p37, %p38
    %p40 = scmp.ne.s32.totalorder %s32, %s35
    %p41 = scmp.eq.s32.totalorder %s10, 0
    %p42 = por %p40, %p41
    %p43 = scmp.ne.s32.totalorder %s32, %s35
    %p44 = scmp.eq.s32.totalorder %s15, 1
    %p45 = por %p43, %p44
    %p46 = scmp.ne.s32.totalorder %s35, %s36
    %p47 = scmp.eq.s32.totalorder %s15, 0
    %p48 = por %p46, %p47
    %p49 = scmp.ne.s32.totalorder %s35, %s36
    %p50 = scmp.eq.s32.totalorder %s16, 1
    %p51 = por %p49, %p50
    %p53 = scmp.ne.s32.totalorder %s36, %s52
    %p54 = scmp.eq.s32.totalorder %s16, 0
    %p55 = por %p53, %p54
    %s56 = ssub.s32 %s18, %s25
    %p57 = scmp.eq.s32.totalorder %s56, 0
    %s59 = sadd.s32 %s58, 1
    %s60 = scalar_select %p57, %s58, %s59
    %p63 = pneg %p57
    %p64 = scmp.eq.s32.totalorder %s10, 1
    %p65 = por %p63, %p64
    %p66 = scmp.ne.s32.totalorder %s58, %s61
    %p67 = scmp.eq.s32.totalorder %s10, 0
    %p68 = por %p66, %p67
    %p69 = scmp.ne.s32.totalorder %s58, %s61
    %p70 = scmp.eq.s32.totalorder %s15, 1
    %p71 = por %p69, %p70
    %p72 = scmp.ne.s32.totalorder %s61, %s62
    %p73 = scmp.eq.s32.totalorder %s15, 0
    %p74 = por %p72, %p73
    %p75 = scmp.ne.s32.totalorder %s61, %s62
    %p76 = scmp.eq.s32.totalorder %s16, 1
    %p77 = por %p75, %p76
    %p79 = scmp.ne.s32.totalorder %s62, %s78
    %p80 = scmp.eq.s32.totalorder %s16, 0
    %p81 = por %p79, %p80
    %s82 = ssub.s32 %s18, %s25
    %p83 = scmp.eq.s32.totalorder %s82, 0
    %s85 = sadd.s32 %s84, 1
    %s86 = scalar_select %p83, %s84, %s85
    %p89 = pneg %p83
    %p90 = scmp.eq.s32.totalorder %s10, 1
    %p91 = por %p89, %p90
    %p92 = scmp.ne.s32.totalorder %s84, %s87
    %p93 = scmp.eq.s32.totalorder %s10, 0
    %p94 = por %p92, %p93
    %p95 = scmp.ne.s32.totalorder %s84, %s87
    %p96 = scmp.eq.s32.totalorder %s15, 1
    %p97 = por %p95, %p96
    %p98 = scmp.ne.s32.totalorder %s87, %s88
    %p99 = scmp.eq.s32.totalorder %s15, 0
    %p100 = por %p98, %p99
    %p101 = scmp.ne.s32.totalorder %s87, %s88
    %p102 = scmp.eq.s32.totalorder %s16, 1
    %p103 = por %p101, %p102
    %p105 = scmp.ne.s32.totalorder %s88, %s104
    %p106 = scmp.eq.s32.totalorder %s16, 0
    %p107 = por %p105, %p106
    %s109 = sadd.s32 %s108, 1
    %p112 = scmp.eq.s32.totalorder %s10, 1
    %p113 = scmp.ne.s32.totalorder %s108, %s110
    %p114 = scmp.eq.s32.totalorder %s10, 0
    %p115 = por %p113, %p114
    %p116 = scmp.ne.s32.totalorder %s108, %s110
    %p117 = scmp.eq.s32.totalorder %s15, 1
    %p118 = por %p116, %p117
    %p119 = scmp.ne.s32.totalorder %s110, %s111
    %p120 = scmp.eq.s32.totalorder %s15, 0
    %p121 = por %p119, %p120
    %p122 = scmp.ne.s32.totalorder %s110, %s111
    %p123 = scmp.eq.s32.totalorder %s16, 1
    %p124 = por %p122, %p123
    %p126 = scmp.ne.s32.totalorder %s111, %s125
    %p127 = scmp.eq.s32.totalorder %s16, 0
    %p128 = por %p126, %p127
    %s129 = ssub.s32 %s17, %s29
    %s130 = ssub.s32 %s18, %s25
    %s131 = sor.u32 %s129, %s130
    %p132 = scmp.eq.s32.totalorder %s131, 0
    %s134 = sadd.s32 %s133, 1
    %s135 = scalar_select %p132, %s133, %s134
    %p138 = pneg %p132
    %p139 = scmp.eq.s32.totalorder %s10, 1
    %p140 = por %p138, %p139
    %p141 = scmp.ne.s32.totalorder %s133, %s136
    %p142 = scmp.eq.s32.totalorder %s10, 0
    %p143 = por %p141, %p142
    %p144 = scmp.ne.s32.totalorder %s133, %s136
    %p145 = scmp.eq.s32.totalorder %s15, 1
    %p146 = por %p144, %p145
    %p147 = scmp.ne.s32.totalorder %s136, %s137
    %p148 = scmp.eq.s32.totalorder %s15, 0
    %p149 = por %p147, %p148
    %p150 = scmp.ne.s32.totalorder %s136, %s137
    %p151 = scmp.eq.s32.totalorder %s16, 1
    %p152 = por %p150, %p151
    %p154 = scmp.ne.s32.totalorder %s137, %s153
    %p155 = scmp.eq.s32.totalorder %s16, 0
    %p156 = por %p154, %p155
    %p157 = scmp.le.s32.totalorder 1, %s10
    %p158 = scmp.lt.s32.totalorder %s10, 3
    %p159 = pnand %p157, %p158
    %p160 = pneg %p159
    // Predicated region
    $region9: #{img_classifier_forward.1} parent=5 // pred_check
      _
    $region10: #{img_classifier_forward.1} parent=5 // pred_check_branch
      %162 = sbr.rel (%p159) target = $region12
    $region11: #{img_classifier_forward.1} parent=5 // pred_region
      %s163 = ssub.s32 %s10, 1
      // Predicated region
      $region13: #{img_classifier_forward.1} parent=11 // pred_check
        %p164 = pneg %p74
      $region14: #{img_classifier_forward.1} parent=11 // pred_check_branch
        %166 = sbr.rel (%p164) target = $region16
      $region15: #{img_classifier_forward.1} parent=11 // pred_region
        %p167 = scmp.lt.s32.totalorder %s20, 0
        %s168 = scalar_select %p167, %s20, 0
        %s169 = smul.addr %s168, 2
        %s170 = scalar_lea.vmem %s1, %s169
      $region16: #{img_classifier_forward.1} parent=11 // pred_fallthru
        _
      // Predicated region
      $region17: #{img_classifier_forward.1} parent=11 // pred_check
        %p171 = pneg %p100
      $region18: #{img_classifier_forward.1} parent=11 // pred_check_branch
        %173 = sbr.rel (%p171) target = $region20
      $region19: #{img_classifier_forward.1} parent=11 // pred_region
        %p174 = scmp.lt.s32.totalorder %s20, 0
        %s175 = scalar_select %p174, %s20, 0
        %s176 = scalar_lea.vmem %s2, %s175
      $region20: #{img_classifier_forward.1} parent=11 // pred_fallthru
        _
      // Predicated region
      $region21: #{img_classifier_forward.1} parent=11 // pred_check
        %p177 = pneg %p121
      $region22: #{img_classifier_forward.1} parent=11 // pred_check_branch
        %179 = sbr.rel (%p177) target = $region24
      $region23: #{img_classifier_forward.1} parent=11 // pred_region
        _
      $region24: #{img_classifier_forward.1} parent=11 // pred_fallthru
        _
    $region12: #{img_classifier_forward.1} parent=5 // pred_fallthru
      _
    %p180 = scmp.lt.s32.totalorder %s10, 2
    // Predicated region
    $region25: #{img_classifier_forward.1} parent=5 // pred_check
      %p181 = pneg %p180
    $region26: #{img_classifier_forward.1} parent=5 // pred_check_branch
      %183 = sbr.rel (%p181) target = $region28
    $region27: #{img_classifier_forward.1} parent=5 // pred_region
      // Predicated region
      $region29: #{img_classifier_forward.1} parent=27 // pred_check
        %p184 = pneg %p42
      $region30: #{img_classifier_forward.1} parent=27 // pred_check_branch
        %186 = sbr.rel (%p184) target = $region32
      $region31: #{img_classifier_forward.1} parent=27 // pred_region
        %p187 = scmp.lt.s32.totalorder %s17, 1
        %s188 = scalar_select %p187, %s17, 1
        %s189 = smul.addr %s188, 41
        %s190 = smul.addr %s189, 4
        %s191 = scalar_lea.vmem %s0, %s190
      $region32: #{img_classifier_forward.1} parent=27 // pred_fallthru
        _
    $region28: #{img_classifier_forward.1} parent=5 // pred_fallthru
      _
    %p192 = scmp.le.s32.totalorder 1, %s10
    %p193 = scmp.lt.s32.totalorder %s10, 3
    %p194 = pnand %p192, %p193
    %p195 = pneg %p194
    // Predicated region
    $region33: #{img_classifier_forward.1} parent=5 // pred_check
      _
    $region34: #{img_classifier_forward.1} parent=5 // pred_check_branch
      %197 = sbr.rel (%p194) target = $region36
    $region35: #{img_classifier_forward.1} parent=5 // pred_region
      %s198 = ssub.s32 %s10, 1
      %p199 = scmp.lt.s32.totalorder %s19, 1
      %s200 = scalar_select %p199, %s19, 1
      %s201 = smul.addr %s200, 41
      %s202 = smul.addr %s201, 4
      %s203 = scalar_lea.vmem %s0, %s202
      %p204 = pneg %p48
      %p205 = pneg %p45
      %p206 = scmp.lt.s32.totalorder %s20, 0
      %s207 = scalar_select %p206, %s20, 0
      %s208 = smul.addr %s207, 2
      %s209 = scalar_lea.vmem %s1, %s208
      %p210 = pneg %p74
      %p211 = pneg %p71
      %p212 = scmp.lt.s32.totalorder %s20, 0
      %s213 = scalar_select %p212, %s20, 0
      %s214 = scalar_lea.vmem %s2, %s213
      %p215 = pneg %p100
      %p216 = pneg %p97
      %p217 = pneg %p121
      %p218 = pneg %p118
      %p219 = pneg %p149
      %p220 = pneg %p146
      %p221 = scmp.lt.s32.totalorder %s19, 1
      %s222 = scalar_select %p221, %s19, 1
      %p223 = scmp.lt.s32.totalorder %s20, 0
      %s224 = scalar_select %p223, %s20, 0
      %s225 = sadd.s32 %s224, %s222
      %s226 = smul.addr %s225, 8
      %s227 = scalar_lea.vmem %s4, %s226
      %p228 = scmp.lt.s32.totalorder %s19, 1
      %s229 = scalar_select %p228, %s19, 1
      %s230 = smul.addr %s229, 41
      %s231 = smul.addr %s230, 4
      %s232 = scalar_lea.vmem %s0, %s231
      %p233 = scmp.lt.s32.totalorder %s20, 0
      %s234 = scalar_select %p233, %s20, 0
      %s235 = smul.addr %s234, 2
      %s236 = scalar_lea.vmem %s1, %s235
      %p237 = scmp.lt.s32.totalorder %s20, 0
      %s238 = scalar_select %p237, %s20, 0
      %s239 = scalar_lea.vmem %s2, %s238
      %p240 = scmp.lt.s32.totalorder %s19, 1
      %s241 = scalar_select %p240, %s19, 1
      %p242 = scmp.lt.s32.totalorder %s20, 0
      %s243 = scalar_select %p242, %s20, 0
      %s244 = sadd.s32 %s243, %s241
      %s245 = smul.addr %s244, 8
      %s246 = scalar_lea.vmem %s4, %s245
      %248 = vst [vmem:[#allocation2] sm:$0xff] 0.0
      %249 = vst [vmem:[#allocation2 + $0x8] sm:$0xff] 0.0
      %250 = vst [vmem:[#allocation2 + $0x10] sm:$0xff] 0.0
      %251 = vst [vmem:[#allocation2 + $0x18] sm:$0xff] 0.0
      %252 = vst [vmem:[#allocation2 + $0x20] sm:$0xff] 0.0
      %253 = vst [vmem:[#allocation2 + $0x28] sm:$0xff] 0.0
      %254 = vst [vmem:[#allocation2 + $0x30] sm:$0xff] 0.0
      %255 = vst [vmem:[#allocation2 + $0x38] sm:$0xff] 0.0
      %256 = vst [vmem:[#allocation2 + $0x40] sm:$0xff] 0.0
      %257 = vst [vmem:[#allocation2 + $0x48] sm:$0xff] 0.0
      %258 = vst [vmem:[#allocation2 + $0x50] sm:$0xff] 0.0
      %259 = vst [vmem:[#allocation2 + $0x58] sm:$0xff] 0.0
      %260 = vst [vmem:[#allocation2 + $0x60] sm:$0xff] 0.0
      %261 = vst [vmem:[#allocation2 + $0x68] sm:$0xff] 0.0
      %262 = vst [vmem:[#allocation2 + $0x70] sm:$0xff] 0.0
      %263 = vst [vmem:[#allocation2 + $0x78] sm:$0xff] 0.0
      %264 = vst [vmem:[#allocation2 + $0x80] sm:$0xff] 0.0
      %265 = vst [vmem:[#allocation2 + $0x88] sm:$0xff] 0.0
      %v266 = vld [vmem:[%s3] sm:$0xff]
      %v267 = vld [vmem:[%s3 + $0x8] sm:$0xff]
      %v268 = vld [vmem:[%s3 + $0x10] sm:$0xff]
      %v269 = vld [vmem:[%s3 + $0x18] sm:$0xff]
      %v270 = vld [vmem:[%s3 + $0x20] sm:$0xff]
      %v271 = vld [vmem:[%s3 + $0x28] sm:$0xff]
      %v272 = vld [vmem:[%s3 + $0x30] sm:$0xff]
      %v273 = vld [vmem:[%s3 + $0x38] sm:$0xff]
      %v274 = vld [vmem:[%s3 + $0x40] sm:$0xff]
      %v275 = vld [vmem:[%s3 + $0x48] sm:$0xff]
      %v276 = vld [vmem:[%s3 + $0x50] sm:$0xff]
      %v277 = vld [vmem:[%s3 + $0x58] sm:$0xff]
      %v278 = vld [vmem:[%s3 + $0x60] sm:$0xff]
      %v279 = vld [vmem:[%s3 + $0x68] sm:$0xff]
      %v280 = vld [vmem:[%s3 + $0x70] sm:$0xff]
      %v281 = vld [vmem:[%s3 + $0x78] sm:$0xff]
      %v282 = vld [vmem:[%s3 + $0x80] sm:$0xff]
      %v283 = vld [vmem:[%s3 + $0x88] sm:$0xff]
      %v284 = vld [vmem:[%s232] sm:$0xf]
      %v285 = vld [vmem:[%s232 + $0x4] sm:$0xf]
      %v286 = vld [vmem:[%s232 + $0x8] sm:$0xf]
      %v287 = vld [vmem:[%s232 + $0xc] sm:$0xf]
      %v288 = vld [vmem:[%s232 + $0x10] sm:$0xf]
      %v289 = vld [vmem:[%s232 + $0x14] sm:$0xf]
      %v290 = vld [vmem:[%s232 + $0x18] sm:$0xf]
      %v291 = vld [vmem:[%s232 + $0x1c] sm:$0xf]
      %v292 = vld [vmem:[%s232 + $0x20] sm:$0xf]
      %v293 = vld [vmem:[%s232 + $0x24] sm:$0xf]
      %v294 = vld [vmem:[%s232 + $0x28] sm:$0xf]
      %v295 = vld [vmem:[%s232 + $0x2c] sm:$0xf]
      %v296 = vld [vmem:[%s232 + $0x30] sm:$0xf]
      %v297 = vld [vmem:[%s232 + $0x34] sm:$0xf]
      %v298 = vld [vmem:[%s232 + $0x38] sm:$0xf]
      %v299 = vld [vmem:[%s232 + $0x3c] sm:$0xf]
      %v300 = vld [vmem:[%s232 + $0x40] sm:$0xf]
      %v301 = vld [vmem:[%s232 + $0x44] sm:$0xf]
      %v302 = vld [vmem:[%s236] sm:$0x3]
      %v303 = vld [vmem:[%s232 + $0x48] sm:$0x1]
      %s304 = scalar_lea.vmem %s236, 2
      %v305 = vld [vmem:[%s304] sm:$0x3]
      %v325 = vunpack.c.l.b16 %v284
      %v326 = vunpack.c.l.b16 %v285
      %v327 = vunpack.c.l.b16 %v286
      %v328 = vunpack.c.l.b16 %v287
      %v329 = vunpack.c.l.b16 %v288
      %v330 = vunpack.c.l.b16 %v289
      %v331 = vunpack.c.l.b16 %v290
      %v332 = vunpack.c.l.b16 %v291
      %v333 = vunpack.c.l.b16 %v292
      %v334 = vunpack.c.l.b16 %v293
      %v335 = vunpack.c.l.b16 %v294
      %v336 = vunpack.c.l.b16 %v295
      %v337 = vunpack.c.l.b16 %v296
      %v338 = vunpack.c.l.b16 %v297
      %v339 = vunpack.c.l.b16 %v298
      %v340 = vunpack.c.l.b16 %v299
      %v341 = vunpack.c.l.b16 %v300
      %v342 = vunpack.c.l.b16 %v301
      %v343 = vunpack.c.l.b16 %v303
      %v344 = vpack.c.b16 %v326, %v325
      %v345 = vpack.c.b16 %v328, %v327
      %v346 = vpack.c.b16 %v330, %v329
      %v347 = vpack.c.b16 %v332, %v331
      %v348 = vpack.c.b16 %v334, %v333
      %v349 = vpack.c.b16 %v336, %v335
      %v350 = vpack.c.b16 %v338, %v337
      %v351 = vpack.c.b16 %v340, %v339
      %v352 = vpack.c.b16 %v342, %v341
      %v353 = vpack.c.b16 %v343, %v343
      %vm354 = vsmask.f32 7424
      %v356 = vshrl.u32 %v344, 16
      %v358 = vshll.u32 %v344, 16
      %v360 = vrot.slane %v358, 1
      %v361 = vor.u32 %v356, %v360
      %v363 = vshll.u32 %v345, 16
      %v365 = vrot.slane %v363, 1
      %v366 = vsel %vm354, %v361, %v365
      %v367 = vshrl.u32 %v345, 16
      %v369 = vor.u32 %v367, %v365
      %v371 = vshll.u32 %v346, 16
      %v373 = vrot.slane %v371, 1
      %v374 = vsel %vm354, %v369, %v373
      %v375 = vshrl.u32 %v346, 16
      %v377 = vor.u32 %v375, %v373
      %v379 = vshll.u32 %v347, 16
      %v381 = vrot.slane %v379, 1
      %v382 = vsel %vm354, %v377, %v381
      %v383 = vshrl.u32 %v347, 16
      %v385 = vor.u32 %v383, %v381
      %v387 = vshll.u32 %v348, 16
      %v389 = vrot.slane %v387, 1
      %v390 = vsel %vm354, %v385, %v389
      %v391 = vshrl.u32 %v348, 16
      %v393 = vor.u32 %v391, %v389
      %v395 = vshll.u32 %v349, 16
      %v397 = vrot.slane %v395, 1
      %v398 = vsel %vm354, %v393, %v397
      %v399 = vshrl.u32 %v349, 16
      %v401 = vor.u32 %v399, %v397
      %v403 = vshll.u32 %v350, 16
      %v405 = vrot.slane %v403, 1
      %v406 = vsel %vm354, %v401, %v405
      %v407 = vshrl.u32 %v350, 16
      %v409 = vor.u32 %v407, %v405
      %v411 = vshll.u32 %v351, 16
      %v413 = vrot.slane %v411, 1
      %v414 = vsel %vm354, %v409, %v413
      %v415 = vshrl.u32 %v351, 16
      %v417 = vor.u32 %v415, %v413
      %v419 = vshll.u32 %v352, 16
      %v421 = vrot.slane %v419, 1
      %v422 = vsel %vm354, %v417, %v421
      %v423 = vshrl.u32 %v352, 16
      %v425 = vor.u32 %v423, %v421
      %v427 = vshll.u32 %v353, 16
      %v429 = vrot.slane %v427, 1
      %v430 = vsel %vm354, %v425, %v429
      %vm431 = vcmask 31744
      %v433 = vsel %vm431, %v366, 0
      %v436 = vsel %vm431, %v374, 0
      %v439 = vsel %vm431, %v382, 0
      %v442 = vsel %vm431, %v390, 0
      %v445 = vsel %vm431, %v398, 0
      %v448 = vsel %vm431, %v406, 0
      %v451 = vsel %vm431, %v414, 0
      %v454 = vsel %vm431, %v422, 0
      %v457 = vsel %vm431, %v430, 0
      %vm459 = vcmask 1041408
      %v461 = vsel %vm459, %v305, 0
      %463 = vmatprep.subr.bf16.mxu0 0
      %464 = vmatpush1.bf16.msra.mxu0 %v461
      %465 = vmatprep.subr.bf16.mxu0 0
      %466 = vmatpush1.bf16.msra.mxu0 0
      %467 = vmatprep.subr.bf16.mxu0 0
      %468 = vmatpush1.bf16.msra.mxu0 0
      %469 = vmatprep.subr.bf16.mxu0 0
      %470 = vmatpush1.bf16.msra.mxu0 0
      %471 = vmatprep.subr.bf16.mxu0 0
      %472 = vmatpush1.bf16.msra.mxu0 0
      %473 = vmatprep.subr.bf16.mxu0 0
      %474 = vmatpush1.bf16.msra.mxu0 0
      %475 = vmatprep.subr.bf16.mxu0 0
      %476 = vmatpush1.bf16.msra.mxu0 0
      %477 = vmatprep.subr.bf16.mxu0 0
      %478 = vmatpush1.bf16.msra.mxu0 0
      %479 = vmatprep.subr.bf16.mxu0 0
      %480 = vmatpush1.bf16.msra.mxu0 0
      %481 = vmatprep.subr.bf16.mxu0 0
      %482 = vmatpush1.bf16.msra.mxu0 0
      %483 = vmatprep.subr.bf16.mxu0 0
      %484 = vmatpush1.bf16.msra.mxu0 0
      %485 = vmatprep.subr.bf16.mxu0 0
      %486 = vmatpush1.bf16.msra.mxu0 0
      %487 = vmatprep.subr.bf16.mxu0 0
      %488 = vmatpush1.bf16.msra.mxu0 0
      %489 = vmatprep.subr.bf16.mxu0 0
      %490 = vmatpush1.bf16.msra.mxu0 0
      %491 = vmatprep.subr.bf16.mxu0 0
      %492 = vmatpush1.bf16.msra.mxu0 0
      %493 = vmatprep.subr.bf16.mxu0 0
      %494 = vmatpush1.bf16.msra.mxu0 0
      %495 = vmatprep.mubr.bf16.mxu0 0
      %496 = vmatmul.mubr.bf16.gmra.mrb[0].mxu0 %v433
      %v497 = vpop.f32.mrb[0].mxu0
      %v498 = vadd.f32 0.0, %v497
      %v499 = vpop.f32.mrb[0].mxu0
      %v500 = vpop.f32.mrb[0].mxu0
      %v501 = vadd.f32 0.0, %v500
      %v502 = vpop.f32.mrb[0].mxu0
      %503 = vmatprep.mubr.bf16.mxu0 0
      %504 = vmatmul.mubr.bf16.gmra.mrb[0].mxu0 %v436
      %v505 = vpop.f32.mrb[0].mxu0
      %v506 = vadd.f32 0.0, %v505
      %v507 = vpop.f32.mrb[0].mxu0
      %v508 = vpop.f32.mrb[0].mxu0
      %v509 = vadd.f32 0.0, %v508
      %v510 = vpop.f32.mrb[0].mxu0
      %511 = vmatprep.mubr.bf16.mxu0 0
      %512 = vmatmul.mubr.bf16.gmra.mrb[0].mxu0 %v439
      %v513 = vpop.f32.mrb[0].mxu0
      %v514 = vadd.f32 0.0, %v513
      %v515 = vpop.f32.mrb[0].mxu0
      %v516 = vpop.f32.mrb[0].mxu0
      %v517 = vadd.f32 0.0, %v516
      %v518 = vpop.f32.mrb[0].mxu0
      %519 = vmatprep.mubr.bf16.mxu0 0
      %520 = vmatmul.mubr.bf16.gmra.mrb[0].mxu0 %v442
      %v521 = vpop.f32.mrb[0].mxu0
      %v522 = vadd.f32 0.0, %v521
      %v523 = vpop.f32.mrb[0].mxu0
      %v524 = vpop.f32.mrb[0].mxu0
      %v525 = vadd.f32 0.0, %v524
      %v526 = vpop.f32.mrb[0].mxu0
      %527 = vmatprep.mubr.bf16.mxu0 0
      %528 = vmatmul.mubr.bf16.gmra.mrb[0].mxu0 %v445
      %v529 = vpop.f32.mrb[0].mxu0
      %v530 = vadd.f32 0.0, %v529
      %v531 = vpop.f32.mrb[0].mxu0
      %v532 = vpop.f32.mrb[0].mxu0
      %v533 = vadd.f32 0.0, %v532
      %v534 = vpop.f32.mrb[0].mxu0
      %535 = vmatprep.mubr.bf16.mxu0 0
      %536 = vmatmul.mubr.bf16.gmra.mrb[0].mxu0 %v448
      %v537 = vpop.f32.mrb[0].mxu0
      %v538 = vadd.f32 0.0, %v537
      %v539 = vpop.f32.mrb[0].mxu0
      %v540 = vpop.f32.mrb[0].mxu0
      %v541 = vadd.f32 0.0, %v540
      %v542 = vpop.f32.mrb[0].mxu0
      %543 = vmatprep.mubr.bf16.mxu0 0
      %544 = vmatmul.mubr.bf16.gmra.mrb[0].mxu0 %v451
      %v545 = vpop.f32.mrb[0].mxu0
      %v546 = vadd.f32 0.0, %v545
      %v547 = vpop.f32.mrb[0].mxu0
      %v548 = vpop.f32.mrb[0].mxu0
      %v549 = vadd.f32 0.0, %v548
      %v550 = vpop.f32.mrb[0].mxu0
      %551 = vmatprep.mubr.bf16.mxu0 0
      %552 = vmatmul.mubr.bf16.gmra.mrb[0].mxu0 %v454
      %v553 = vpop.f32.mrb[0].mxu0
      %v554 = vadd.f32 0.0, %v553
      %v555 = vpop.f32.mrb[0].mxu0
      %v556 = vpop.f32.mrb[0].mxu0
      %v557 = vadd.f32 0.0, %v556
      %v558 = vpop.f32.mrb[0].mxu0
      %559 = vmatprep.mubr.bf16.mxu0 0
      %560 = vmatmul.mubr.bf16.gmra.mrb[0].mxu0 %v457
      %v561 = vpop.f32.mrb[0].mxu0
      %v562 = vadd.f32 0.0, %v561
      %v563 = vpop.f32.mrb[0].mxu0
      %v564 = vpop.f32.mrb[0].mxu0
      %v565 = vadd.f32 0.0, %v564
      %v566 = vpop.f32.mrb[0].mxu0
      %567 = vdwg.mxu0
      %v568 = vsel %vm431, %v344, 0
      %v570 = vsel %vm431, %v345, 0
      %v572 = vsel %vm431, %v346, 0
      %v574 = vsel %vm431, %v347, 0
      %v576 = vsel %vm431, %v348, 0
      %v578 = vsel %vm431, %v349, 0
      %v580 = vsel %vm431, %v350, 0
      %v582 = vsel %vm431, %v351, 0
      %v584 = vsel %vm431, %v352, 0
      %v587 = vsel %vm459, %v302, 0
      %589 = vmatprep.subr.bf16.mxu0 0
      %590 = vmatpush1.bf16.msra.mxu0 %v587
      %591 = vmatprep.subr.bf16.mxu0 0
      %592 = vmatpush1.bf16.msra.mxu0 0
      %593 = vmatprep.subr.bf16.mxu0 0
      %594 = vmatpush1.bf16.msra.mxu0 0
      %595 = vmatprep.subr.bf16.mxu0 0
      %596 = vmatpush1.bf16.msra.mxu0 0
      %597 = vmatprep.subr.bf16.mxu0 0
      %598 = vmatpush1.bf16.msra.mxu0 0
      %599 = vmatprep.subr.bf16.mxu0 0
      %600 = vmatpush1.bf16.msra.mxu0 0
      %601 = vmatprep.subr.bf16.mxu0 0
      %602 = vmatpush1.bf16.msra.mxu0 0
      %603 = vmatprep.subr.bf16.mxu0 0
      %604 = vmatpush1.bf16.msra.mxu0 0
      %605 = vmatprep.subr.bf16.mxu0 0
      %606 = vmatpush1.bf16.msra.mxu0 0
      %607 = vmatprep.subr.bf16.mxu0 0
      %608 = vmatpush1.bf16.msra.mxu0 0
      %609 = vmatprep.subr.bf16.mxu0 0
      %610 = vmatpush1.bf16.msra.mxu0 0
      %611 = vmatprep.subr.bf16.mxu0 0
      %612 = vmatpush1.bf16.msra.mxu0 0
      %613 = vmatprep.subr.bf16.mxu0 0
      %614 = vmatpush1.bf16.msra.mxu0 0
      %615 = vmatprep.subr.bf16.mxu0 0
      %616 = vmatpush1.bf16.msra.mxu0 0
      %617 = vmatprep.subr.bf16.mxu0 0
      %618 = vmatpush1.bf16.msra.mxu0 0
      %619 = vmatprep.subr.bf16.mxu0 0
      %620 = vmatpush1.bf16.msra.mxu0 0
      %621 = vmatprep.mubr.bf16.mxu0 0
      %622 = vmatmul.mubr.bf16.gmra.mrb[0].mxu0 %v568
      %v623 = vpop.f32.mrb[0].mxu0
      %v624 = vadd.f32 %v498, %v623
      %v625 = vpop.f32.mrb[0].mxu0
      %v626 = vpop.f32.mrb[0].mxu0
      %v627 = vadd.f32 %v501, %v626
      %v628 = vpop.f32.mrb[0].mxu0
      %629 = vmatprep.mubr.bf16.mxu0 0
      %630 = vmatmul.mubr.bf16.gmra.mrb[0].mxu0 %v570
      %v631 = vpop.f32.mrb[0].mxu0
      %v632 = vadd.f32 %v506, %v631
      %v633 = vpop.f32.mrb[0].mxu0
      %v634 = vpop.f32.mrb[0].mxu0
      %v635 = vadd.f32 %v509, %v634
      %v636 = vpop.f32.mrb[0].mxu0
      %637 = vmatprep.mubr.bf16.mxu0 0
      %638 = vmatmul.mubr.bf16.gmra.mrb[0].mxu0 %v572
      %v639 = vpop.f32.mrb[0].mxu0
      %v640 = vadd.f32 %v514, %v639
      %v641 = vpop.f32.mrb[0].mxu0
      %v642 = vpop.f32.mrb[0].mxu0
      %v643 = vadd.f32 %v517, %v642
      %v644 = vpop.f32.mrb[0].mxu0
      %645 = vmatprep.mubr.bf16.mxu0 0
      %646 = vmatmul.mubr.bf16.gmra.mrb[0].mxu0 %v574
      %v647 = vpop.f32.mrb[0].mxu0
      %v648 = vadd.f32 %v522, %v647
      %v649 = vpop.f32.mrb[0].mxu0
      %v650 = vpop.f32.mrb[0].mxu0
      %v651 = vadd.f32 %v525, %v650
      %v652 = vpop.f32.mrb[0].mxu0
      %653 = vmatprep.mubr.bf16.mxu0 0
      %654 = vmatmul.mubr.bf16.gmra.mrb[0].mxu0 %v576
      %v655 = vpop.f32.mrb[0].mxu0
      %v656 = vadd.f32 %v530, %v655
      %v657 = vpop.f32.mrb[0].mxu0
      %v658 = vpop.f32.mrb[0].mxu0
      %v659 = vadd.f32 %v533, %v658
      %v660 = vpop.f32.mrb[0].mxu0
      %661 = vmatprep.mubr.bf16.mxu0 0
      %662 = vmatmul.mubr.bf16.gmra.mrb[0].mxu0 %v578
      %v663 = vpop.f32.mrb[0].mxu0
      %v664 = vadd.f32 %v538, %v663
      %v665 = vpop.f32.mrb[0].mxu0
      %v666 = vpop.f32.mrb[0].mxu0
      %v667 = vadd.f32 %v541, %v666
      %v668 = vpop.f32.mrb[0].mxu0
      %669 = vmatprep.mubr.bf16.mxu0 0
      %670 = vmatmul.mubr.bf16.gmra.mrb[0].mxu0 %v580
      %v671 = vpop.f32.mrb[0].mxu0
      %v672 = vadd.f32 %v546, %v671
      %v673 = vpop.f32.mrb[0].mxu0
      %v674 = vpop.f32.mrb[0].mxu0
      %v675 = vadd.f32 %v549, %v674
      %v676 = vpop.f32.mrb[0].mxu0
      %677 = vmatprep.mubr.bf16.mxu0 0
      %678 = vmatmul.mubr.bf16.gmra.mrb[0].mxu0 %v582
      %v679 = vpop.f32.mrb[0].mxu0
      %v680 = vadd.f32 %v554, %v679
      %v681 = vpop.f32.mrb[0].mxu0
      %v682 = vpop.f32.mrb[0].mxu0
      %v683 = vadd.f32 %v557, %v682
      %v684 = vpop.f32.mrb[0].mxu0
      %685 = vmatprep.mubr.bf16.mxu0 0
      %686 = vmatmul.mubr.bf16.gmra.mrb[0].mxu0 %v584
      %v687 = vpop.f32.mrb[0].mxu0
      %v688 = vadd.f32 %v562, %v687
      %v689 = vpop.f32.mrb[0].mxu0
      %v690 = vpop.f32.mrb[0].mxu0
      %v691 = vadd.f32 %v565, %v690
      %v692 = vpop.f32.mrb[0].mxu0
      %693 = vdwg.mxu0
      %v694 = vld [vmem:[%s232] sm:$0xe]
      %s695 = scalar_lea.vmem %s236, 4
      %v696 = vld [vmem:[%s695] sm:$0x3]
      %v698 = vunpack.c.l.b16 %v694
      %v699 = vpack.c.b16 %v326, %v698
      %vm700 = vcmask 1046528
      %v701 = vrot.slane %v699, 1
      %v702 = vrot.slane %v345, 1
      %v703 = vsel %vm700, %v701, %v702
      %v704 = vrot.slane %v346, 1
      %v705 = vsel %vm700, %v702, %v704
      %v706 = vrot.slane %v347, 1
      %v707 = vsel %vm700, %v704, %v706
      %v708 = vrot.slane %v348, 1
      %v709 = vsel %vm700, %v706, %v708
      %v710 = vrot.slane %v349, 1
      %v711 = vsel %vm700, %v708, %v710
      %v712 = vrot.slane %v350, 1
      %v713 = vsel %vm700, %v710, %v712
      %v714 = vrot.slane %v351, 1
      %v715 = vsel %vm700, %v712, %v714
      %v716 = vrot.slane %v352, 1
      %v717 = vsel %vm700, %v714, %v716
      %v718 = vrot.slane %v353, 1
      %v719 = vsel %vm700, %v716, %v718
      %v721 = vsel %vm431, %v703, 0
      %v724 = vsel %vm431, %v705, 0
      %v727 = vsel %vm431, %v707, 0
      %v730 = vsel %vm431, %v709, 0
      %v733 = vsel %vm431, %v711, 0
      %v736 = vsel %vm431, %v713, 0
      %v739 = vsel %vm431, %v715, 0
      %v742 = vsel %vm431, %v717, 0
      %v745 = vsel %vm431, %v719, 0
      %v748 = vsel %vm459, %v696, 0
      %750 = vmatprep.subr.bf16.mxu0 0
      %751 = vmatpush1.bf16.msra.mxu0 %v748
      %752 = vmatprep.subr.bf16.mxu0 0
      %753 = vmatpush1.bf16.msra.mxu0 0
      %754 = vmatprep.subr.bf16.mxu0 0
      %755 = vmatpush1.bf16.msra.mxu0 0
      %756 = vmatprep.subr.bf16.mxu0 0
      %757 = vmatpush1.bf16.msra.mxu0 0
      %758 = vmatprep.subr.bf16.mxu0 0
      %759 = vmatpush1.bf16.msra.mxu0 0
      %760 = vmatprep.subr.bf16.mxu0 0
      %761 = vmatpush1.bf16.msra.mxu0 0
      %762 = vmatprep.subr.bf16.mxu0 0
      %763 = vmatpush1.bf16.msra.mxu0 0
      %764 = vmatprep.subr.bf16.mxu0 0
      %765 = vmatpush1.bf16.msra.mxu0 0
      %766 = vmatprep.subr.bf16.mxu0 0
      %767 = vmatpush1.bf16.msra.mxu0 0
      %768 = vmatprep.subr.bf16.mxu0 0
      %769 = vmatpush1.bf16.msra.mxu0 0
      %770 = vmatprep.subr.bf16.mxu0 0
      %771 = vmatpush1.bf16.msra.mxu0 0
      %772 = vmatprep.subr.bf16.mxu0 0
      %773 = vmatpush1.bf16.msra.mxu0 0
      %774 = vmatprep.subr.bf16.mxu0 0
      %775 = vmatpush1.bf16.msra.mxu0 0
      %776 = vmatprep.subr.bf16.mxu0 0
      %777 = vmatpush1.bf16.msra.mxu0 0
      %778 = vmatprep.subr.bf16.mxu0 0
      %779 = vmatpush1.bf16.msra.mxu0 0
      %780 = vmatprep.subr.bf16.mxu0 0
      %781 = vmatpush1.bf16.msra.mxu0 0
      %782 = vmatprep.mubr.bf16.mxu0 0
      %783 = vmatmul.mubr.bf16.gmra.mrb[0].mxu0 %v721
      %v784 = vpop.f32.mrb[0].mxu0
      %v785 = vadd.f32 0.0, %v784
      %v786 = vpop.f32.mrb[0].mxu0
      %v787 = vpop.f32.mrb[0].mxu0
      %v788 = vadd.f32 0.0, %v787
      %v789 = vpop.f32.mrb[0].mxu0
      %790 = vmatprep.mubr.bf16.mxu0 0
      %791 = vmatmul.mubr.bf16.gmra.mrb[0].mxu0 %v724
      %v792 = vpop.f32.mrb[0].mxu0
      %v793 = vadd.f32 0.0, %v792
      %v794 = vpop.f32.mrb[0].mxu0
      %v795 = vpop.f32.mrb[0].mxu0
      %v796 = vadd.f32 0.0, %v795
      %v797 = vpop.f32.mrb[0].mxu0
      %798 = vmatprep.mubr.bf16.mxu0 0
      %799 = vmatmul.mubr.bf16.gmra.mrb[0].mxu0 %v727
      %v800 = vpop.f32.mrb[0].mxu0
      %v801 = vadd.f32 0.0, %v800
      %v802 = vpop.f32.mrb[0].mxu0
      %v803 = vpop.f32.mrb[0].mxu0
      %v804 = vadd.f32 0.0, %v803
      %v805 = vpop.f32.mrb[0].mxu0
      %806 = vmatprep.mubr.bf16.mxu0 0
      %807 = vmatmul.mubr.bf16.gmra.mrb[0].mxu0 %v730
      %v808 = vpop.f32.mrb[0].mxu0
      %v809 = vadd.f32 0.0, %v808
      %v810 = vpop.f32.mrb[0].mxu0
      %v811 = vpop.f32.mrb[0].mxu0
      %v812 = vadd.f32 0.0, %v811
      %v813 = vpop.f32.mrb[0].mxu0
      %814 = vmatprep.mubr.bf16.mxu0 0
      %815 = vmatmul.mubr.bf16.gmra.mrb[0].mxu0 %v733
      %v816 = vpop.f32.mrb[0].mxu0
      %v817 = vadd.f32 0.0, %v816
      %v818 = vpop.f32.mrb[0].mxu0
      %v819 = vpop.f32.mrb[0].mxu0
      %v820 = vadd.f32 0.0, %v819
      %v821 = vpop.f32.mrb[0].mxu0
      %822 = vmatprep.mubr.bf16.mxu0 0
      %823 = vmatmul.mubr.bf16.gmra.mrb[0].mxu0 %v736
      %v824 = vpop.f32.mrb[0].mxu0
      %v825 = vadd.f32 0.0, %v824
      %v826 = vpop.f32.mrb[0].mxu0
      %v827 = vpop.f32.mrb[0].mxu0
      %v828 = vadd.f32 0.0, %v827
      %v829 = vpop.f32.mrb[0].mxu0
      %830 = vmatprep.mubr.bf16.mxu0 0
      %831 = vmatmul.mubr.bf16.gmra.mrb[0].mxu0 %v739
      %v832 = vpop.f32.mrb[0].mxu0
      %v833 = vadd.f32 0.0, %v832
      %v834 = vpop.f32.mrb[0].mxu0
      %v835 = vpop.f32.mrb[0].mxu0
      %v836 = vadd.f32 0.0, %v835
      %v837 = vpop.f32.mrb[0].mxu0
      %838 = vmatprep.mubr.bf16.mxu0 0
      %839 = vmatmul.mubr.bf16.gmra.mrb[0].mxu0 %v742
      %v840 = vpop.f32.mrb[0].mxu0
      %v841 = vadd.f32 0.0, %v840
      %v842 = vpop.f32.mrb[0].mxu0
      %v843 = vpop.f32.mrb[0].mxu0
      %v844 = vadd.f32 0.0, %v843
      %v845 = vpop.f32.mrb[0].mxu0
      %846 = vmatprep.mubr.bf16.mxu0 0
      %847 = vmatmul.mubr.bf16.gmra.mrb[0].mxu0 %v745
      %v848 = vpop.f32.mrb[0].mxu0
      %v849 = vadd.f32 0.0, %v848
      %v850 = vpop.f32.mrb[0].mxu0
      %v851 = vpop.f32.mrb[0].mxu0
      %v852 = vadd.f32 0.0, %v851
      %v853 = vpop.f32.mrb[0].mxu0
      %854 = vdwg.mxu0
      %v855 = vadd.f32 %v624, %v785
      %v856 = vadd.f32 %v627, %v788
      %v857 = vadd.f32 %v632, %v793
      %v858 = vadd.f32 %v635, %v796
      %v859 = vadd.f32 %v640, %v801
      %v860 = vadd.f32 %v643, %v804
      %v861 = vadd.f32 %v648, %v809
      %v862 = vadd.f32 %v651, %v812
      %v863 = vadd.f32 %v656, %v817
      %v864 = vadd.f32 %v659, %v820
      %v865 = vadd.f32 %v664, %v825
      %v866 = vadd.f32 %v667, %v828
      %v867 = vadd.f32 %v672, %v833
      %v868 = vadd.f32 %v675, %v836
      %v869 = vadd.f32 %v680, %v841
      %v870 = vadd.f32 %v683, %v844
      %v871 = vadd.f32 %v688, %v849
      %v872 = vadd.f32 %v691, %v852
      %v873 = vld [vmem:[%s232 + $0x8] sm:$0xe]
      %v874 = vld [vmem:[%s232 + $0xc] sm:$0xf]
      %v875 = vld [vmem:[%s232 + $0x10] sm:$0xf]
      %v876 = vld [vmem:[%s232 + $0x14] sm:$0xf]
      %v877 = vld [vmem:[%s232 + $0x18] sm:$0xf]
      %v878 = vld [vmem:[%s232 + $0x1c] sm:$0xf]
      %v879 = vld [vmem:[%s232 + $0x20] sm:$0xf]
      %v880 = vld [vmem:[%s232 + $0x24] sm:$0xf]
      %v881 = vld [vmem:[%s232 + $0x28] sm:$0xf]
      %v882 = vld [vmem:[%s232 + $0x2c] sm:$0xf]
      %v883 = vld [vmem:[%s232 + $0x30] sm:$0xf]
      %v884 = vld [vmem:[%s232 + $0x34] sm:$0xf]
      %v885 = vld [vmem:[%s232 + $0x38] sm:$0xf]
      %v886 = vld [vmem:[%s232 + $0x3c] sm:$0xf]
      %v887 = vld [vmem:[%s232 + $0x40] sm:$0xf]
      %v888 = vld [vmem:[%s232 + $0x44] sm:$0xf]
      %v889 = vld [vmem:[%s232 + $0x48] sm:$0xf]
      %v890 = vld [vmem:[%s232 + $0x4c] sm:$0xf]
      %v891 = vld [vmem:[%s232 + $0x50] sm:$0x1]
      %s892 = scalar_lea.vmem %s236, 6
      %v893 = vld [vmem:[%s892] sm:$0x3]
      %v913 = vunpack.c.l.b16 %v873
      %v914 = vunpack.c.l.b16 %v874
      %v915 = vunpack.c.l.b16 %v875
      %v916 = vunpack.c.l.b16 %v876
      %v917 = vunpack.c.l.b16 %v877
      %v918 = vunpack.c.l.b16 %v878
      %v919 = vunpack.c.l.b16 %v879
      %v920 = vunpack.c.l.b16 %v880
      %v921 = vunpack.c.l.b16 %v881
      %v922 = vunpack.c.l.b16 %v882
      %v923 = vunpack.c.l.b16 %v883
      %v924 = vunpack.c.l.b16 %v884
      %v925 = vunpack.c.l.b16 %v885
      %v926 = vunpack.c.l.b16 %v886
      %v927 = vunpack.c.l.b16 %v887
      %v928 = vunpack.c.l.b16 %v888
      %v929 = vunpack.c.l.b16 %v889
      %v930 = vunpack.c.l.b16 %v890
      %v931 = vunpack.c.l.b16 %v891
      %v932 = vpack.c.b16 %v914, %v913
      %v933 = vpack.c.b16 %v916, %v915
      %v934 = vpack.c.b16 %v918, %v917
      %v935 = vpack.c.b16 %v920, %v919
      %v936 = vpack.c.b16 %v922, %v921
      %v937 = vpack.c.b16 %v924, %v923
      %v938 = vpack.c.b16 %v926, %v925
      %v939 = vpack.c.b16 %v928, %v927
      %v940 = vpack.c.b16 %v930, %v929
      %v941 = vpack.c.b16 %v931, %v931
      %v942 = vrot.slane %v932, 1
      %v943 = vrot.slane %v933, 1
      %v944 = vsel %vm700, %v942, %v943
      %v945 = vrot.slane %v934, 1
      %v946 = vsel %vm700, %v943, %v945
      %v947 = vrot.slane %v935, 1
      %v948 = vsel %vm700, %v945, %v947
      %v949 = vrot.slane %v936, 1
      %v950 = vsel %vm700, %v947, %v949
      %v951 = vrot.slane %v937, 1
      %v952 = vsel %vm700, %v949, %v951
      %v953 = vrot.slane %v938, 1
      %v954 = vsel %vm700, %v951, %v953
      %v955 = vrot.slane %v939, 1
      %v956 = vsel %vm700, %v953, %v955
      %v957 = vrot.slane %v940, 1
      %v958 = vsel %vm700, %v955, %v957
      %v959 = vrot.slane %v941, 1
      %v960 = vsel %vm700, %v957, %v959
      %v962 = vsel %vm431, %v944, 0
      %v965 = vsel %vm431, %v946, 0
      %v968 = vsel %vm431, %v948, 0
      %v971 = vsel %vm431, %v950, 0
      %v974 = vsel %vm431, %v952, 0
      %v977 = vsel %vm431, %v954, 0
      %v980 = vsel %vm431, %v956, 0
      %v983 = vsel %vm431, %v958, 0
      %v986 = vsel %vm431, %v960, 0
      %v989 = vsel %vm459, %v893, 0
      %991 = vmatprep.subr.bf16.mxu0 0
      %992 = vmatpush1.bf16.msra.mxu0 %v989
      %993 = vmatprep.subr.bf16.mxu0 0
      %994 = vmatpush1.bf16.msra.mxu0 0
      %995 = vmatprep.subr.bf16.mxu0 0
      %996 = vmatpush1.bf16.msra.mxu0 0
      %997 = vmatprep.subr.bf16.mxu0 0
      %998 = vmatpush1.bf16.msra.mxu0 0
      %999 = vmatprep.subr.bf16.mxu0 0
      %1000 = vmatpush1.bf16.msra.mxu0 0
      %1001 = vmatprep.subr.bf16.mxu0 0
      %1002 = vmatpush1.bf16.msra.mxu0 0
      %1003 = vmatprep.subr.bf16.mxu0 0
      %1004 = vmatpush1.bf16.msra.mxu0 0
      %1005 = vmatprep.subr.bf16.mxu0 0
      %1006 = vmatpush1.bf16.msra.mxu0 0
      %1007 = vmatprep.subr.bf16.mxu0 0
      %1008 = vmatpush1.bf16.msra.mxu0 0
      %1009 = vmatprep.subr.bf16.mxu0 0
      %1010 = vmatpush1.bf16.msra.mxu0 0
      %1011 = vmatprep.subr.bf16.mxu0 0
      %1012 = vmatpush1.bf16.msra.mxu0 0
      %1013 = vmatprep.subr.bf16.mxu0 0
      %1014 = vmatpush1.bf16.msra.mxu0 0
      %1015 = vmatprep.subr.bf16.mxu0 0
      %1016 = vmatpush1.bf16.msra.mxu0 0
      %1017 = vmatprep.subr.bf16.mxu0 0
      %1018 = vmatpush1.bf16.msra.mxu0 0
      %1019 = vmatprep.subr.bf16.mxu0 0
      %1020 = vmatpush1.bf16.msra.mxu0 0
      %1021 = vmatprep.subr.bf16.mxu0 0
      %1022 = vmatpush1.bf16.msra.mxu0 0
      %1023 = vmatprep.mubr.bf16.mxu0 0
      %1024 = vmatmul.mubr.bf16.gmra.mrb[0].mxu0 %v962
      %v1025 = vpop.f32.mrb[0].mxu0
      %v1026 = vadd.f32 0.0, %v1025
      %v1027 = vpop.f32.mrb[0].mxu0
      %v1028 = vpop.f32.mrb[0].mxu0
      %v1029 = vadd.f32 0.0, %v1028
      %v1030 = vpop.f32.mrb[0].mxu0
      %1031 = vmatprep.mubr.bf16.mxu0 0
      %1032 = vmatmul.mubr.bf16.gmra.mrb[0].mxu0 %v965
      %v1033 = vpop.f32.mrb[0].mxu0
      %v1034 = vadd.f32 0.0, %v1033
      %v1035 = vpop.f32.mrb[0].mxu0
      %v1036 = vpop.f32.mrb[0].mxu0
      %v1037 = vadd.f32 0.0, %v1036
      %v1038 = vpop.f32.mrb[0].mxu0
      %1039 = vmatprep.mubr.bf16.mxu0 0
      %1040 = vmatmul.mubr.bf16.gmra.mrb[0].mxu0 %v968
      %v1041 = vpop.f32.mrb[0].mxu0
      %v1042 = vadd.f32 0.0, %v1041
      %v1043 = vpop.f32.mrb[0].mxu0
      %v1044 = vpop.f32.mrb[0].mxu0
      %v1045 = vadd.f32 0.0, %v1044
      %v1046 = vpop.f32.mrb[0].mxu0
      %1047 = vmatprep.mubr.bf16.mxu0 0
      %1048 = vmatmul.mubr.bf16.gmra.mrb[0].mxu0 %v971
      %v1049 = vpop.f32.mrb[0].mxu0
      %v1050 = vadd.f32 0.0, %v1049
      %v1051 = vpop.f32.mrb[0].mxu0
      %v1052 = vpop.f32.mrb[0].mxu0
      %v1053 = vadd.f32 0.0, %v1052
      %v1054 = vpop.f32.mrb[0].mxu0
      %1055 = vmatprep.mubr.bf16.mxu0 0
      %1056 = vmatmul.mubr.bf16.gmra.mrb[0].mxu0 %v974
      %v1057 = vpop.f32.mrb[0].mxu0
      %v1058 = vadd.f32 0.0, %v1057
      %v1059 = vpop.f32.mrb[0].mxu0
      %v1060 = vpop.f32.mrb[0].mxu0
      %v1061 = vadd.f32 0.0, %v1060
      %v1062 = vpop.f32.mrb[0].mxu0
      %1063 = vmatprep.mubr.bf16.mxu0 0
      %1064 = vmatmul.mubr.bf16.gmra.mrb[0].mxu0 %v977
      %v1065 = vpop.f32.mrb[0].mxu0
      %v1066 = vadd.f32 0.0, %v1065
      %v1067 = vpop.f32.mrb[0].mxu0
      %v1068 = vpop.f32.mrb[0].mxu0
      %v1069 = vadd.f32 0.0, %v1068
      %v1070 = vpop.f32.mrb[0].mxu0
      %1071 = vmatprep.mubr.bf16.mxu0 0
      %1072 = vmatmul.mubr.bf16.gmra.mrb[0].mxu0 %v980
      %v1073 = vpop.f32.mrb[0].mxu0
      %v1074 = vadd.f32 0.0, %v1073
      %v1075 = vpop.f32.mrb[0].mxu0
      %v1076 = vpop.f32.mrb[0].mxu0
      %v1077 = vadd.f32 0.0, %v1076
      %v1078 = vpop.f32.mrb[0].mxu0
      %1079 = vmatprep.mubr.bf16.mxu0 0
      %1080 = vmatmul.mubr.bf16.gmra.mrb[0].mxu0 %v983
      %v1081 = vpop.f32.mrb[0].mxu0
      %v1082 = vadd.f32 0.0, %v1081
      %v1083 = vpop.f32.mrb[0].mxu0
      %v1084 = vpop.f32.mrb[0].mxu0
      %v1085 = vadd.f32 0.0, %v1084
      %v1086 = vpop.f32.mrb[0].mxu0
      %1087 = vmatprep.mubr.bf16.mxu0 0
      %1088 = vmatmul.mubr.bf16.gmra.mrb[0].mxu0 %v986
      %v1089 = vpop.f32.mrb[0].mxu0
      %v1090 = vadd.f32 0.0, %v1089
      %v1091 = vpop.f32.mrb[0].mxu0
      %v1092 = vpop.f32.mrb[0].mxu0
      %v1093 = vadd.f32 0.0, %v1092
      %v1094 = vpop.f32.mrb[0].mxu0
      %1095 = vdwg.mxu0
      %v1096 = vadd.f32 %v855, %v1026
      %v1097 = vadd.f32 %v856, %v1029
      %v1098 = vadd.f32 %v857, %v1034
      %v1099 = vadd.f32 %v858, %v1037
      %v1100 = vadd.f32 %v859, %v1042
      %v1101 = vadd.f32 %v860, %v1045
      %v1102 = vadd.f32 %v861, %v1050
      %v1103 = vadd.f32 %v862, %v1053
      %v1104 = vadd.f32 %v863, %v1058
      %v1105 = vadd.f32 %v864, %v1061
      %v1106 = vadd.f32 %v865, %v1066
      %v1107 = vadd.f32 %v866, %v1069
      %v1108 = vadd.f32 %v867, %v1074
      %v1109 = vadd.f32 %v868, %v1077
      %v1110 = vadd.f32 %v869, %v1082
      %v1111 = vadd.f32 %v870, %v1085
      %v1112 = vadd.f32 %v871, %v1090
      %v1113 = vadd.f32 %v872, %v1093
      %v1114 = vld [vmem:[%s232 + $0x50] sm:$0x3]
      %s1115 = scalar_lea.vmem %s236, 8
      %v1116 = vld [vmem:[%s1115] sm:$0x3]
      %v1118 = vunpack.c.l.b16 %v1114
      %v1119 = vpack.c.b16 %v1118, %v1118
      %vm1120 = vsmask.f32 6400
      %v1122 = vshrl.u32 %v932, 16
      %v1124 = vrot.slane %v1122, 1
      %v1125 = vshll.u32 %v932, 16
      %v1127 = vrot.slane %v1125, 2
      %v1128 = vor.u32 %v1124, %v1127
      %v1130 = vshrl.u32 %v933, 16
      %v1132 = vrot.slane %v1130, 1
      %v1133 = vshll.u32 %v933, 16
      %v1135 = vrot.slane %v1133, 2
      %v1136 = vor.u32 %v1132, %v1135
      %v1137 = vsel %vm1120, %v1128, %v1136
      %v1139 = vshrl.u32 %v934, 16
      %v1141 = vrot.slane %v1139, 1
      %v1142 = vshll.u32 %v934, 16
      %v1144 = vrot.slane %v1142, 2
      %v1145 = vor.u32 %v1141, %v1144
      %v1146 = vsel %vm1120, %v1136, %v1145
      %v1148 = vshrl.u32 %v935, 16
      %v1150 = vrot.slane %v1148, 1
      %v1151 = vshll.u32 %v935, 16
      %v1153 = vrot.slane %v1151, 2
      %v1154 = vor.u32 %v1150, %v1153
      %v1155 = vsel %vm1120, %v1145, %v1154
      %v1157 = vshrl.u32 %v936, 16
      %v1159 = vrot.slane %v1157, 1
      %v1160 = vshll.u32 %v936, 16
      %v1162 = vrot.slane %v1160, 2
      %v1163 = vor.u32 %v1159, %v1162
      %v1164 = vsel %vm1120, %v1154, %v1163
      %v1166 = vshrl.u32 %v937, 16
      %v1168 = vrot.slane %v1166, 1
      %v1169 = vshll.u32 %v937, 16
      %v1171 = vrot.slane %v1169, 2
      %v1172 = vor.u32 %v1168, %v1171
      %v1173 = vsel %vm1120, %v1163, %v1172
      %v1175 = vshrl.u32 %v938, 16
      %v1177 = vrot.slane %v1175, 1
      %v1178 = vshll.u32 %v938, 16
      %v1180 = vrot.slane %v1178, 2
      %v1181 = vor.u32 %v1177, %v1180
      %v1182 = vsel %vm1120, %v1172, %v1181
      %v1184 = vshrl.u32 %v939, 16
      %v1186 = vrot.slane %v1184, 1
      %v1187 = vshll.u32 %v939, 16
      %v1189 = vrot.slane %v1187, 2
      %v1190 = vor.u32 %v1186, %v1189
      %v1191 = vsel %vm1120, %v1181, %v1190
      %v1193 = vshrl.u32 %v940, 16
      %v1195 = vrot.slane %v1193, 1
      %v1196 = vshll.u32 %v940, 16
      %v1198 = vrot.slane %v1196, 2
      %v1199 = vor.u32 %v1195, %v1198
      %v1200 = vsel %vm1120, %v1190, %v1199
      %v1202 = vshrl.u32 %v1119, 16
      %v1204 = vrot.slane %v1202, 1
      %v1205 = vshll.u32 %v1119, 16
      %v1207 = vrot.slane %v1205, 2
      %v1208 = vor.u32 %v1204, %v1207
      %v1209 = vsel %vm1120, %v1199, %v1208
      %v1211 = vsel %vm431, %v1137, 0
      %v1214 = vsel %vm431, %v1146, 0
      %v1217 = vsel %vm431, %v1155, 0
      %v1220 = vsel %vm431, %v1164, 0
      %v1223 = vsel %vm431, %v1173, 0
      %v1226 = vsel %vm431, %v1182, 0
      %v1229 = vsel %vm431, %v1191, 0
      %v1232 = vsel %vm431, %v1200, 0
      %v1235 = vsel %vm431, %v1209, 0
      %v1238 = vsel %vm459, %v1116, 0
      %1240 = vmatprep.subr.bf16.mxu0 0
      %1241 = vmatpush1.bf16.msra.mxu0 %v1238
      %1242 = vmatprep.subr.bf16.mxu0 0
      %1243 = vmatpush1.bf16.msra.mxu0 0
      %1244 = vmatprep.subr.bf16.mxu0 0
      %1245 = vmatpush1.bf16.msra.mxu0 0
      %1246 = vmatprep.subr.bf16.mxu0 0
      %1247 = vmatpush1.bf16.msra.mxu0 0
      %1248 = vmatprep.subr.bf16.mxu0 0
      %1249 = vmatpush1.bf16.msra.mxu0 0
      %1250 = vmatprep.subr.bf16.mxu0 0
      %1251 = vmatpush1.bf16.msra.mxu0 0
      %1252 = vmatprep.subr.bf16.mxu0 0
      %1253 = vmatpush1.bf16.msra.mxu0 0
      %1254 = vmatprep.subr.bf16.mxu0 0
      %1255 = vmatpush1.bf16.msra.mxu0 0
      %1256 = vmatprep.subr.bf16.mxu0 0
      %1257 = vmatpush1.bf16.msra.mxu0 0
      %1258 = vmatprep.subr.bf16.mxu0 0
      %1259 = vmatpush1.bf16.msra.mxu0 0
      %1260 = vmatprep.subr.bf16.mxu0 0
      %1261 = vmatpush1.bf16.msra.mxu0 0
      %1262 = vmatprep.subr.bf16.mxu0 0
      %1263 = vmatpush1.bf16.msra.mxu0 0
      %1264 = vmatprep.subr.bf16.mxu0 0
      %1265 = vmatpush1.bf16.msra.mxu0 0
      %1266 = vmatprep.subr.bf16.mxu0 0
      %1267 = vmatpush1.bf16.msra.mxu0 0
      %1268 = vmatprep.subr.bf16.mxu0 0
      %1269 = vmatpush1.bf16.msra.mxu0 0
      %1270 = vmatprep.subr.bf16.mxu0 0
      %1271 = vmatpush1.bf16.msra.mxu0 0
      %1272 = vmatprep.mubr.bf16.mxu0 0
      %1273 = vmatmul.mubr.bf16.gmra.mrb[0].mxu0 %v1211
      %v1274 = vpop.f32.mrb[0].mxu0
      %v1275 = vadd.f32 0.0, %v1274
      %v1276 = vpop.f32.mrb[0].mxu0
      %v1277 = vpop.f32.mrb[0].mxu0
      %v1278 = vadd.f32 0.0, %v1277
      %v1279 = vpop.f32.mrb[0].mxu0
      %1280 = vmatprep.mubr.bf16.mxu0 0
      %1281 = vmatmul.mubr.bf16.gmra.mrb[0].mxu0 %v1214
      %v1282 = vpop.f32.mrb[0].mxu0
      %v1283 = vadd.f32 0.0, %v1282
      %v1284 = vpop.f32.mrb[0].mxu0
      %v1285 = vpop.f32.mrb[0].mxu0
      %v1286 = vadd.f32 0.0, %v1285
      %v1287 = vpop.f32.mrb[0].mxu0
      %1288 = vmatprep.mubr.bf16.mxu0 0
      %1289 = vmatmul.mubr.bf16.gmra.mrb[0].mxu0 %v1217
      %v1290 = vpop.f32.mrb[0].mxu0
      %v1291 = vadd.f32 0.0, %v1290
      %v1292 = vpop.f32.mrb[0].mxu0
      %v1293 = vpop.f32.mrb[0].mxu0
      %v1294 = vadd.f32 0.0, %v1293
      %v1295 = vpop.f32.mrb[0].mxu0
      %1296 = vmatprep.mubr.bf16.mxu0 0
      %1297 = vmatmul.mubr.bf16.gmra.mrb[0].mxu0 %v1220
      %v1298 = vpop.f32.mrb[0].mxu0
      %v1299 = vadd.f32 0.0, %v1298
      %v1300 = vpop.f32.mrb[0].mxu0
      %v1301 = vpop.f32.mrb[0].mxu0
      %v1302 = vadd.f32 0.0, %v1301
      %v1303 = vpop.f32.mrb[0].mxu0
      %1304 = vmatprep.mubr.bf16.mxu0 0
      %1305 = vmatmul.mubr.bf16.gmra.mrb[0].mxu0 %v1223
      %v1306 = vpop.f32.mrb[0].mxu0
      %v1307 = vadd.f32 0.0, %v1306
      %v1308 = vpop.f32.mrb[0].mxu0
      %v1309 = vpop.f32.mrb[0].mxu0
      %v1310 = vadd.f32 0.0, %v1309
      %v1311 = vpop.f32.mrb[0].mxu0
      %1312 = vmatprep.mubr.bf16.mxu0 0
      %1313 = vmatmul.mubr.bf16.gmra.mrb[0].mxu0 %v1226
      %v1314 = vpop.f32.mrb[0].mxu0
      %v1315 = vadd.f32 0.0, %v1314
      %v1316 = vpop.f32.mrb[0].mxu0
      %v1317 = vpop.f32.mrb[0].mxu0
      %v1318 = vadd.f32 0.0, %v1317
      %v1319 = vpop.f32.mrb[0].mxu0
      %1320 = vmatprep.mubr.bf16.mxu0 0
      %1321 = vmatmul.mubr.bf16.gmra.mrb[0].mxu0 %v1229
      %v1322 = vpop.f32.mrb[0].mxu0
      %v1323 = vadd.f32 0.0, %v1322
      %v1324 = vpop.f32.mrb[0].mxu0
      %v1325 = vpop.f32.mrb[0].mxu0
      %v1326 = vadd.f32 0.0, %v1325
      %v1327 = vpop.f32.mrb[0].mxu0
      %1328 = vmatprep.mubr.bf16.mxu0 0
      %1329 = vmatmul.mubr.bf16.gmra.mrb[0].mxu0 %v1232
      %v1330 = vpop.f32.mrb[0].mxu0
      %v1331 = vadd.f32 0.0, %v1330
      %v1332 = vpop.f32.mrb[0].mxu0
      %v1333 = vpop.f32.mrb[0].mxu0
      %v1334 = vadd.f32 0.0, %v1333
      %v1335 = vpop.f32.mrb[0].mxu0
      %1336 = vmatprep.mubr.bf16.mxu0 0
      %1337 = vmatmul.mubr.bf16.gmra.mrb[0].mxu0 %v1235
      %v1338 = vpop.f32.mrb[0].mxu0
      %v1339 = vadd.f32 0.0, %v1338
      %v1340 = vpop.f32.mrb[0].mxu0
      %v1341 = vpop.f32.mrb[0].mxu0
      %v1342 = vadd.f32 0.0, %v1341
      %v1343 = vpop.f32.mrb[0].mxu0
      %1344 = vdwg.mxu0
      %v1345 = vadd.f32 %v1096, %v1275
      %v1346 = vadd.f32 %v1097, %v1278
      %v1347 = vadd.f32 %v1098, %v1283
      %v1348 = vadd.f32 %v1099, %v1286
      %v1349 = vadd.f32 %v1100, %v1291
      %v1350 = vadd.f32 %v1101, %v1294
      %v1351 = vadd.f32 %v1102, %v1299
      %v1352 = vadd.f32 %v1103, %v1302
      %v1353 = vadd.f32 %v1104, %v1307
      %v1354 = vadd.f32 %v1105, %v1310
      %v1355 = vadd.f32 %v1106, %v1315
      %v1356 = vadd.f32 %v1107, %v1318
      %v1357 = vadd.f32 %v1108, %v1323
      %v1358 = vadd.f32 %v1109, %v1326
      %v1359 = vadd.f32 %v1110, %v1331
      %v1360 = vadd.f32 %v1111, %v1334
      %v1361 = vadd.f32 %v1112, %v1339
      %v1362 = vadd.f32 %v1113, %v1342
      %v1363 = vld [vmem:[%s232 + $0x8] sm:$0xc]
      %s1364 = scalar_lea.vmem %s236, 10
      %v1365 = vld [vmem:[%s1364] sm:$0x3]
      %v1367 = vunpack.c.l.b16 %v1363
      %v1368 = vpack.c.b16 %v914, %v1367
      %vm1369 = vcmask 1045504
      %v1370 = vrot.slane %v1368, 2
      %v1371 = vrot.slane %v933, 2
      %v1372 = vsel %vm1369, %v1370, %v1371
      %v1373 = vrot.slane %v934, 2
      %v1374 = vsel %vm1369, %v1371, %v1373
      %v1375 = vrot.slane %v935, 2
      %v1376 = vsel %vm1369, %v1373, %v1375
      %v1377 = vrot.slane %v936, 2
      %v1378 = vsel %vm1369, %v1375, %v1377
      %v1379 = vrot.slane %v937, 2
      %v1380 = vsel %vm1369, %v1377, %v1379
      %v1381 = vrot.slane %v938, 2
      %v1382 = vsel %vm1369, %v1379, %v1381
      %v1383 = vrot.slane %v939, 2
      %v1384 = vsel %vm1369, %v1381, %v1383
      %v1385 = vrot.slane %v940, 2
      %v1386 = vsel %vm1369, %v1383, %v1385
      %v1387 = vrot.slane %v1119, 2
      %v1388 = vsel %vm1369, %v1385, %v1387
      %v1390 = vsel %vm431, %v1372, 0
      %v1393 = vsel %vm431, %v1374, 0
      %v1396 = vsel %vm431, %v1376, 0
      %v1399 = vsel %vm431, %v1378, 0
      %v1402 = vsel %vm431, %v1380, 0
      %v1405 = vsel %vm431, %v1382, 0
      %v1408 = vsel %vm431, %v1384, 0
      %v1411 = vsel %vm431, %v1386, 0
      %v1414 = vsel %vm431, %v1388, 0
      %v1417 = vsel %vm459, %v1365, 0
      %1419 = vmatprep.subr.bf16.mxu0 0
      %1420 = vmatpush1.bf16.msra.mxu0 %v1417
      %1421 = vmatprep.subr.bf16.mxu0 0
      %1422 = vmatpush1.bf16.msra.mxu0 0
      %1423 = vmatprep.subr.bf16.mxu0 0
      %1424 = vmatpush1.bf16.msra.mxu0 0
      %1425 = vmatprep.subr.bf16.mxu0 0
      %1426 = vmatpush1.bf16.msra.mxu0 0
      %1427 = vmatprep.subr.bf16.mxu0 0
      %1428 = vmatpush1.bf16.msra.mxu0 0
      %1429 = vmatprep.subr.bf16.mxu0 0
      %1430 = vmatpush1.bf16.msra.mxu0 0
      %1431 = vmatprep.subr.bf16.mxu0 0
      %1432 = vmatpush1.bf16.msra.mxu0 0
      %1433 = vmatprep.subr.bf16.mxu0 0
      %1434 = vmatpush1.bf16.msra.mxu0 0
      %1435 = vmatprep.subr.bf16.mxu0 0
      %1436 = vmatpush1.bf16.msra.mxu0 0
      %1437 = vmatprep.subr.bf16.mxu0 0
      %1438 = vmatpush1.bf16.msra.mxu0 0
      %1439 = vmatprep.subr.bf16.mxu0 0
      %1440 = vmatpush1.bf16.msra.mxu0 0
      %1441 = vmatprep.subr.bf16.mxu0 0
      %1442 = vmatpush1.bf16.msra.mxu0 0
      %1443 = vmatprep.subr.bf16.mxu0 0
      %1444 = vmatpush1.bf16.msra.mxu0 0
      %1445 = vmatprep.subr.bf16.mxu0 0
      %1446 = vmatpush1.bf16.msra.mxu0 0
      %1447 = vmatprep.subr.bf16.mxu0 0
      %1448 = vmatpush1.bf16.msra.mxu0 0
      %1449 = vmatprep.subr.bf16.mxu0 0
      %1450 = vmatpush1.bf16.msra.mxu0 0
      %1451 = vmatprep.mubr.bf16.mxu0 0
      %1452 = vmatmul.mubr.bf16.gmra.mrb[0].mxu0 %v1390
      %v1453 = vpop.f32.mrb[0].mxu0
      %v1454 = vadd.f32 0.0, %v1453
      %v1455 = vpop.f32.mrb[0].mxu0
      %v1456 = vpop.f32.mrb[0].mxu0
      %v1457 = vadd.f32 0.0, %v1456
      %v1458 = vpop.f32.mrb[0].mxu0
      %1459 = vmatprep.mubr.bf16.mxu0 0
      %1460 = vmatmul.mubr.bf16.gmra.mrb[0].mxu0 %v1393
      %v1461 = vpop.f32.mrb[0].mxu0
      %v1462 = vadd.f32 0.0, %v1461
      %v1463 = vpop.f32.mrb[0].mxu0
      %v1464 = vpop.f32.mrb[0].mxu0
      %v1465 = vadd.f32 0.0, %v1464
      %v1466 = vpop.f32.mrb[0].mxu0
      %1467 = vmatprep.mubr.bf16.mxu0 0
      %1468 = vmatmul.mubr.bf16.gmra.mrb[0].mxu0 %v1396
      %v1469 = vpop.f32.mrb[0].mxu0
      %v1470 = vadd.f32 0.0, %v1469
      %v1471 = vpop.f32.mrb[0].mxu0
      %v1472 = vpop.f32.mrb[0].mxu0
      %v1473 = vadd.f32 0.0, %v1472
      %v1474 = vpop.f32.mrb[0].mxu0
      %1475 = vmatprep.mubr.bf16.mxu0 0
      %1476 = vmatmul.mubr.bf16.gmra.mrb[0].mxu0 %v1399
      %v1477 = vpop.f32.mrb[0].mxu0
      %v1478 = vadd.f32 0.0, %v1477
      %v1479 = vpop.f32.mrb[0].mxu0
      %v1480 = vpop.f32.mrb[0].mxu0
      %v1481 = vadd.f32 0.0, %v1480
      %v1482 = vpop.f32.mrb[0].mxu0
      %1483 = vmatprep.mubr.bf16.mxu0 0
      %1484 = vmatmul.mubr.bf16.gmra.mrb[0].mxu0 %v1402
      %v1485 = vpop.f32.mrb[0].mxu0
      %v1486 = vadd.f32 0.0, %v1485
      %v1487 = vpop.f32.mrb[0].mxu0
      %v1488 = vpop.f32.mrb[0].mxu0
      %v1489 = vadd.f32 0.0, %v1488
      %v1490 = vpop.f32.mrb[0].mxu0
      %1491 = vmatprep.mubr.bf16.mxu0 0
      %1492 = vmatmul.mubr.bf16.gmra.mrb[0].mxu0 %v1405
      %v1493 = vpop.f32.mrb[0].mxu0
      %v1494 = vadd.f32 0.0, %v1493
      %v1495 = vpop.f32.mrb[0].mxu0
      %v1496 = vpop.f32.mrb[0].mxu0
      %v1497 = vadd.f32 0.0, %v1496
      %v1498 = vpop.f32.mrb[0].mxu0
      %1499 = vmatprep.mubr.bf16.mxu0 0
      %1500 = vmatmul.mubr.bf16.gmra.mrb[0].mxu0 %v1408
      %v1501 = vpop.f32.mrb[0].mxu0
      %v1502 = vadd.f32 0.0, %v1501
      %v1503 = vpop.f32.mrb[0].mxu0
      %v1504 = vpop.f32.mrb[0].mxu0
      %v1505 = vadd.f32 0.0, %v1504
      %v1506 = vpop.f32.mrb[0].mxu0
      %1507 = vmatprep.mubr.bf16.mxu0 0
      %1508 = vmatmul.mubr.bf16.gmra.mrb[0].mxu0 %v1411
      %v1509 = vpop.f32.mrb[0].mxu0
      %v1510 = vadd.f32 0.0, %v1509
      %v1511 = vpop.f32.mrb[0].mxu0
      %v1512 = vpop.f32.mrb[0].mxu0
      %v1513 = vadd.f32 0.0, %v1512
      %v1514 = vpop.f32.mrb[0].mxu0
      %1515 = vmatprep.mubr.bf16.mxu0 0
      %1516 = vmatmul.mubr.bf16.gmra.mrb[0].mxu0 %v1414
      %v1517 = vpop.f32.mrb[0].mxu0
      %v1518 = vadd.f32 0.0, %v1517
      %v1519 = vpop.f32.mrb[0].mxu0
      %v1520 = vpop.f32.mrb[0].mxu0
      %v1521 = vadd.f32 0.0, %v1520
      %v1522 = vpop.f32.mrb[0].mxu0
      %1523 = vdwg.mxu0
      %v1524 = vadd.f32 %v1345, %v1454
      %v1525 = vadd.f32 %v1346, %v1457
      %v1526 = vadd.f32 %v1347, %v1462
      %v1527 = vadd.f32 %v1348, %v1465
      %v1528 = vadd.f32 %v1349, %v1470
      %v1529 = vadd.f32 %v1350, %v1473
      %v1530 = vadd.f32 %v1351, %v1478
      %v1531 = vadd.f32 %v1352, %v1481
      %v1532 = vadd.f32 %v1353, %v1486
      %v1533 = vadd.f32 %v1354, %v1489
      %v1534 = vadd.f32 %v1355, %v1494
      %v1535 = vadd.f32 %v1356, %v1497
      %v1536 = vadd.f32 %v1357, %v1502
      %v1537 = vadd.f32 %v1358, %v1505
      %v1538 = vadd.f32 %v1359, %v1510
      %v1539 = vadd.f32 %v1360, %v1513
      %v1540 = vadd.f32 %v1361, %v1518
      %v1541 = vadd.f32 %v1362, %v1521
      %v1542 = vld [vmem:[%s232 + $0x10] sm:$0xc]
      %v1543 = vld [vmem:[%s232 + $0x14] sm:$0xf]
      %v1544 = vld [vmem:[%s232 + $0x18] sm:$0xf]
      %v1545 = vld [vmem:[%s232 + $0x1c] sm:$0xf]
      %v1546 = vld [vmem:[%s232 + $0x20] sm:$0xf]
      %v1547 = vld [vmem:[%s232 + $0x24] sm:$0xf]
      %v1548 = vld [vmem:[%s232 + $0x28] sm:$0xf]
      %v1549 = vld [vmem:[%s232 + $0x2c] sm:$0xf]
      %v1550 = vld [vmem:[%s232 + $0x30] sm:$0xf]
      %v1551 = vld [vmem:[%s232 + $0x34] sm:$0xf]
      %v1552 = vld [vmem:[%s232 + $0x38] sm:$0xf]
      %v1553 = vld [vmem:[%s232 + $0x3c] sm:$0xf]
      %v1554 = vld [vmem:[%s232 + $0x40] sm:$0xf]
      %v1555 = vld [vmem:[%s232 + $0x44] sm:$0xf]
      %v1556 = vld [vmem:[%s232 + $0x48] sm:$0xf]
      %v1557 = vld [vmem:[%s232 + $0x4c] sm:$0xf]
      %v1558 = vld [vmem:[%s232 + $0x50] sm:$0xf]
      %v1559 = vld [vmem:[%s232 + $0x54] sm:$0xf]
      %v1560 = vld [vmem:[%s232 + $0x58] sm:$0x3]
      %s1561 = scalar_lea.vmem %s236, 12
      %v1562 = vld [vmem:[%s1561] sm:$0x3]
      %v1582 = vunpack.c.l.b16 %v1542
      %v1583 = vunpack.c.l.b16 %v1543
      %v1584 = vunpack.c.l.b16 %v1544
      %v1585 = vunpack.c.l.b16 %v1545
      %v1586 = vunpack.c.l.b16 %v1546
      %v1587 = vunpack.c.l.b16 %v1547
      %v1588 = vunpack.c.l.b16 %v1548
      %v1589 = vunpack.c.l.b16 %v1549
      %v1590 = vunpack.c.l.b16 %v1550
      %v1591 = vunpack.c.l.b16 %v1551
      %v1592 = vunpack.c.l.b16 %v1552
      %v1593 = vunpack.c.l.b16 %v1553
      %v1594 = vunpack.c.l.b16 %v1554
      %v1595 = vunpack.c.l.b16 %v1555
      %v1596 = vunpack.c.l.b16 %v1556
      %v1597 = vunpack.c.l.b16 %v1557
      %v1598 = vunpack.c.l.b16 %v1558
      %v1599 = vunpack.c.l.b16 %v1559
      %v1600 = vunpack.c.l.b16 %v1560
      %v1601 = vpack.c.b16 %v1583, %v1582
      %v1602 = vpack.c.b16 %v1585, %v1584
      %v1603 = vpack.c.b16 %v1587, %v1586
      %v1604 = vpack.c.b16 %v1589, %v1588
      %v1605 = vpack.c.b16 %v1591, %v1590
      %v1606 = vpack.c.b16 %v1593, %v1592
      %v1607 = vpack.c.b16 %v1595, %v1594
      %v1608 = vpack.c.b16 %v1597, %v1596
      %v1609 = vpack.c.b16 %v1599, %v1598
      %v1610 = vpack.c.b16 %v1600, %v1600
      %v1611 = vrot.slane %v1601, 2
      %v1612 = vrot.slane %v1602, 2
      %v1613 = vsel %vm1369, %v1611, %v1612
      %v1614 = vrot.slane %v1603, 2
      %v1615 = vsel %vm1369, %v1612, %v1614
      %v1616 = vrot.slane %v1604, 2
      %v1617 = vsel %vm1369, %v1614, %v1616
      %v1618 = vrot.slane %v1605, 2
      %v1619 = vsel %vm1369, %v1616, %v1618
      %v1620 = vrot.slane %v1606, 2
      %v1621 = vsel %vm1369, %v1618, %v1620
      %v1622 = vrot.slane %v1607, 2
      %v1623 = vsel %vm1369, %v1620, %v1622
      %v1624 = vrot.slane %v1608, 2
      %v1625 = vsel %vm1369, %v1622, %v1624
      %v1626 = vrot.slane %v1609, 2
      %v1627 = vsel %vm1369, %v1624, %v1626
      %v1628 = vrot.slane %v1610, 2
      %v1629 = vsel %vm1369, %v1626, %v1628
      %v1631 = vsel %vm431, %v1613, 0
      %v1634 = vsel %vm431, %v1615, 0
      %v1637 = vsel %vm431, %v1617, 0
      %v1640 = vsel %vm431, %v1619, 0
      %v1643 = vsel %vm431, %v1621, 0
      %v1646 = vsel %vm431, %v1623, 0
      %v1649 = vsel %vm431, %v1625, 0
      %v1652 = vsel %vm431, %v1627, 0
      %v1655 = vsel %vm431, %v1629, 0
      %v1658 = vsel %vm459, %v1562, 0
      %1660 = vmatprep.subr.bf16.mxu0 0
      %1661 = vmatpush1.bf16.msra.mxu0 %v1658
      %1662 = vmatprep.subr.bf16.mxu0 0
      %1663 = vmatpush1.bf16.msra.mxu0 0
      %1664 = vmatprep.subr.bf16.mxu0 0
      %1665 = vmatpush1.bf16.msra.mxu0 0
      %1666 = vmatprep.subr.bf16.mxu0 0
      %1667 = vmatpush1.bf16.msra.mxu0 0
      %1668 = vmatprep.subr.bf16.mxu0 0
      %1669 = vmatpush1.bf16.msra.mxu0 0
      %1670 = vmatprep.subr.bf16.mxu0 0
      %1671 = vmatpush1.bf16.msra.mxu0 0
      %1672 = vmatprep.subr.bf16.mxu0 0
      %1673 = vmatpush1.bf16.msra.mxu0 0
      %1674 = vmatprep.subr.bf16.mxu0 0
      %1675 = vmatpush1.bf16.msra.mxu0 0
      %1676 = vmatprep.subr.bf16.mxu0 0
      %1677 = vmatpush1.bf16.msra.mxu0 0
      %1678 = vmatprep.subr.bf16.mxu0 0
      %1679 = vmatpush1.bf16.msra.mxu0 0
      %1680 = vmatprep.subr.bf16.mxu0 0
      %1681 = vmatpush1.bf16.msra.mxu0 0
      %1682 = vmatprep.subr.bf16.mxu0 0
      %1683 = vmatpush1.bf16.msra.mxu0 0
      %1684 = vmatprep.subr.bf16.mxu0 0
      %1685 = vmatpush1.bf16.msra.mxu0 0
      %1686 = vmatprep.subr.bf16.mxu0 0
      %1687 = vmatpush1.bf16.msra.mxu0 0
      %1688 = vmatprep.subr.bf16.mxu0 0
      %1689 = vmatpush1.bf16.msra.mxu0 0
      %1690 = vmatprep.subr.bf16.mxu0 0
      %1691 = vmatpush1.bf16.msra.mxu0 0
      %1692 = vmatprep.mubr.bf16.mxu0 0
      %1693 = vmatmul.mubr.bf16.gmra.mrb[0].mxu0 %v1631
      %v1694 = vpop.f32.mrb[0].mxu0
      %v1695 = vadd.f32 0.0, %v1694
      %v1696 = vpop.f32.mrb[0].mxu0
      %v1697 = vpop.f32.mrb[0].mxu0
      %v1698 = vadd.f32 0.0, %v1697
      %v1699 = vpop.f32.mrb[0].mxu0
      %1700 = vmatprep.mubr.bf16.mxu0 0
      %1701 = vmatmul.mubr.bf16.gmra.mrb[0].mxu0 %v1634
      %v1702 = vpop.f32.mrb[0].mxu0
      %v1703 = vadd.f32 0.0, %v1702
      %v1704 = vpop.f32.mrb[0].mxu0
      %v1705 = vpop.f32.mrb[0].mxu0
      %v1706 = vadd.f32 0.0, %v1705
      %v1707 = vpop.f32.mrb[0].mxu0
      %1708 = vmatprep.mubr.bf16.mxu0 0
      %1709 = vmatmul.mubr.bf16.gmra.mrb[0].mxu0 %v1637
      %v1710 = vpop.f32.mrb[0].mxu0
      %v1711 = vadd.f32 0.0, %v1710
      %v1712 = vpop.f32.mrb[0].mxu0
      %v1713 = vpop.f32.mrb[0].mxu0
      %v1714 = vadd.f32 0.0, %v1713
      %v1715 = vpop.f32.mrb[0].mxu0
      %1716 = vmatprep.mubr.bf16.mxu0 0
      %1717 = vmatmul.mubr.bf16.gmra.mrb[0].mxu0 %v1640
      %v1718 = vpop.f32.mrb[0].mxu0
      %v1719 = vadd.f32 0.0, %v1718
      %v1720 = vpop.f32.mrb[0].mxu0
      %v1721 = vpop.f32.mrb[0].mxu0
      %v1722 = vadd.f32 0.0, %v1721
      %v1723 = vpop.f32.mrb[0].mxu0
      %1724 = vmatprep.mubr.bf16.mxu0 0
      %1725 = vmatmul.mubr.bf16.gmra.mrb[0].mxu0 %v1643
      %v1726 = vpop.f32.mrb[0].mxu0
      %v1727 = vadd.f32 0.0, %v1726
      %v1728 = vpop.f32.mrb[0].mxu0
      %v1729 = vpop.f32.mrb[0].mxu0
      %v1730 = vadd.f32 0.0, %v1729
      %v1731 = vpop.f32.mrb[0].mxu0
      %1732 = vmatprep.mubr.bf16.mxu0 0
      %1733 = vmatmul.mubr.bf16.gmra.mrb[0].mxu0 %v1646
      %v1734 = vpop.f32.mrb[0].mxu0
      %v1735 = vadd.f32 0.0, %v1734
      %v1736 = vpop.f32.mrb[0].mxu0
      %v1737 = vpop.f32.mrb[0].mxu0
      %v1738 = vadd.f32 0.0, %v1737
      %v1739 = vpop.f32.mrb[0].mxu0
      %1740 = vmatprep.mubr.bf16.mxu0 0
      %1741 = vmatmul.mubr.bf16.gmra.mrb[0].mxu0 %v1649
      %v1742 = vpop.f32.mrb[0].mxu0
      %v1743 = vadd.f32 0.0, %v1742
      %v1744 = vpop.f32.mrb[0].mxu0
      %v1745 = vpop.f32.mrb[0].mxu0
      %v1746 = vadd.f32 0.0, %v1745
      %v1747 = vpop.f32.mrb[0].mxu0
      %1748 = vmatprep.mubr.bf16.mxu0 0
      %1749 = vmatmul.mubr.bf16.gmra.mrb[0].mxu0 %v1652
      %v1750 = vpop.f32.mrb[0].mxu0
      %v1751 = vadd.f32 0.0, %v1750
      %v1752 = vpop.f32.mrb[0].mxu0
      %v1753 = vpop.f32.mrb[0].mxu0
      %v1754 = vadd.f32 0.0, %v1753
      %v1755 = vpop.f32.mrb[0].mxu0
      %1756 = vmatprep.mubr.bf16.mxu0 0
      %1757 = vmatmul.mubr.bf16.gmra.mrb[0].mxu0 %v1655
      %v1758 = vpop.f32.mrb[0].mxu0
      %v1759 = vadd.f32 0.0, %v1758
      %v1760 = vpop.f32.mrb[0].mxu0
      %v1761 = vpop.f32.mrb[0].mxu0
      %v1762 = vadd.f32 0.0, %v1761
      %v1763 = vpop.f32.mrb[0].mxu0
      %1764 = vdwg.mxu0
      %v1765 = vadd.f32 %v1524, %v1695
      %v1766 = vadd.f32 %v1525, %v1698
      %v1767 = vadd.f32 %v1526, %v1703
      %v1768 = vadd.f32 %v1527, %v1706
      %v1769 = vadd.f32 %v1528, %v1711
      %v1770 = vadd.f32 %v1529, %v1714
      %v1771 = vadd.f32 %v1530, %v1719
      %v1772 = vadd.f32 %v1531, %v1722
      %v1773 = vadd.f32 %v1532, %v1727
      %v1774 = vadd.f32 %v1533, %v1730
      %v1775 = vadd.f32 %v1534, %v1735
      %v1776 = vadd.f32 %v1535, %v1738
      %v1777 = vadd.f32 %v1536, %v1743
      %v1778 = vadd.f32 %v1537, %v1746
      %v1779 = vadd.f32 %v1538, %v1751
      %v1780 = vadd.f32 %v1539, %v1754
      %v1781 = vadd.f32 %v1540, %v1759
      %v1782 = vadd.f32 %v1541, %v1762
      %v1783 = vld [vmem:[%s232 + $0x58] sm:$0x7]
      %s1784 = scalar_lea.vmem %s236, 14
      %v1785 = vld [vmem:[%s1784] sm:$0x3]
      %v1787 = vunpack.c.l.b16 %v1783
      %v1788 = vpack.c.b16 %v1787, %v1787
      %vm1789 = vsmask.f32 5376
      %v1791 = vshrl.u32 %v1601, 16
      %v1793 = vrot.slane %v1791, 2
      %v1794 = vshll.u32 %v1601, 16
      %v1796 = vrot.slane %v1794, 3
      %v1797 = vor.u32 %v1793, %v1796
      %v1799 = vshrl.u32 %v1602, 16
      %v1801 = vrot.slane %v1799, 2
      %v1802 = vshll.u32 %v1602, 16
      %v1804 = vrot.slane %v1802, 3
      %v1805 = vor.u32 %v1801, %v1804
      %v1806 = vsel %vm1789, %v1797, %v1805
      %v1808 = vshrl.u32 %v1603, 16
      %v1810 = vrot.slane %v1808, 2
      %v1811 = vshll.u32 %v1603, 16
      %v1813 = vrot.slane %v1811, 3
      %v1814 = vor.u32 %v1810, %v1813
      %v1815 = vsel %vm1789, %v1805, %v1814
      %v1817 = vshrl.u32 %v1604, 16
      %v1819 = vrot.slane %v1817, 2
      %v1820 = vshll.u32 %v1604, 16
      %v1822 = vrot.slane %v1820, 3
      %v1823 = vor.u32 %v1819, %v1822
      %v1824 = vsel %vm1789, %v1814, %v1823
      %v1826 = vshrl.u32 %v1605, 16
      %v1828 = vrot.slane %v1826, 2
      %v1829 = vshll.u32 %v1605, 16
      %v1831 = vrot.slane %v1829, 3
      %v1832 = vor.u32 %v1828, %v1831
      %v1833 = vsel %vm1789, %v1823, %v1832
      %v1835 = vshrl.u32 %v1606, 16
      %v1837 = vrot.slane %v1835, 2
      %v1838 = vshll.u32 %v1606, 16
      %v1840 = vrot.slane %v1838, 3
      %v1841 = vor.u32 %v1837, %v1840
      %v1842 = vsel %vm1789, %v1832, %v1841
      %v1844 = vshrl.u32 %v1607, 16
      %v1846 = vrot.slane %v1844, 2
      %v1847 = vshll.u32 %v1607, 16
      %v1849 = vrot.slane %v1847, 3
      %v1850 = vor.u32 %v1846, %v1849
      %v1851 = vsel %vm1789, %v1841, %v1850
      %v1853 = vshrl.u32 %v1608, 16
      %v1855 = vrot.slane %v1853, 2
      %v1856 = vshll.u32 %v1608, 16
      %v1858 = vrot.slane %v1856, 3
      %v1859 = vor.u32 %v1855, %v1858
      %v1860 = vsel %vm1789, %v1850, %v1859
      %v1862 = vshrl.u32 %v1609, 16
      %v1864 = vrot.slane %v1862, 2
      %v1865 = vshll.u32 %v1609, 16
      %v1867 = vrot.slane %v1865, 3
      %v1868 = vor.u32 %v1864, %v1867
      %v1869 = vsel %vm1789, %v1859, %v1868
      %v1871 = vshrl.u32 %v1788, 16
      %v1873 = vrot.slane %v1871, 2
      %v1874 = vshll.u32 %v1788, 16
      %v1876 = vrot.slane %v1874, 3
      %v1877 = vor.u32 %v1873, %v1876
      %v1878 = vsel %vm1789, %v1868, %v1877
      %v1880 = vsel %vm431, %v1806, 0
      %v1883 = vsel %vm431, %v1815, 0
      %v1886 = vsel %vm431, %v1824, 0
      %v1889 = vsel %vm431, %v1833, 0
      %v1892 = vsel %vm431, %v1842, 0
      %v1895 = vsel %vm431, %v1851, 0
      %v1898 = vsel %vm431, %v1860, 0
      %v1901 = vsel %vm431, %v1869, 0
      %v1904 = vsel %vm431, %v1878, 0
      %v1907 = vsel %vm459, %v1785, 0
      %1909 = vmatprep.subr.bf16.mxu0 0
      %1910 = vmatpush1.bf16.msra.mxu0 %v1907
      %1911 = vmatprep.subr.bf16.mxu0 0
      %1912 = vmatpush1.bf16.msra.mxu0 0
      %1913 = vmatprep.subr.bf16.mxu0 0
      %1914 = vmatpush1.bf16.msra.mxu0 0
      %1915 = vmatprep.subr.bf16.mxu0 0
      %1916 = vmatpush1.bf16.msra.mxu0 0
      %1917 = vmatprep.subr.bf16.mxu0 0
      %1918 = vmatpush1.bf16.msra.mxu0 0
      %1919 = vmatprep.subr.bf16.mxu0 0
      %1920 = vmatpush1.bf16.msra.mxu0 0
      %1921 = vmatprep.subr.bf16.mxu0 0
      %1922 = vmatpush1.bf16.msra.mxu0 0
      %1923 = vmatprep.subr.bf16.mxu0 0
      %1924 = vmatpush1.bf16.msra.mxu0 0
      %1925 = vmatprep.subr.bf16.mxu0 0
      %1926 = vmatpush1.bf16.msra.mxu0 0
      %1927 = vmatprep.subr.bf16.mxu0 0
      %1928 = vmatpush1.bf16.msra.mxu0 0
      %1929 = vmatprep.subr.bf16.mxu0 0
      %1930 = vmatpush1.bf16.msra.mxu0 0
      %1931 = vmatprep.subr.bf16.mxu0 0
      %1932 = vmatpush1.bf16.msra.mxu0 0
      %1933 = vmatprep.subr.bf16.mxu0 0
      %1934 = vmatpush1.bf16.msra.mxu0 0
      %1935 = vmatprep.subr.bf16.mxu0 0
      %1936 = vmatpush1.bf16.msra.mxu0 0
      %1937 = vmatprep.subr.bf16.mxu0 0
      %1938 = vmatpush1.bf16.msra.mxu0 0
      %1939 = vmatprep.subr.bf16.mxu0 0
      %1940 = vmatpush1.bf16.msra.mxu0 0
      %1941 = vmatprep.mubr.bf16.mxu0 0
      %1942 = vmatmul.mubr.bf16.gmra.mrb[0].mxu0 %v1880
      %v1943 = vpop.f32.mrb[0].mxu0
      %v1944 = vadd.f32 0.0, %v1943
      %v1945 = vpop.f32.mrb[0].mxu0
      %v1946 = vpop.f32.mrb[0].mxu0
      %v1947 = vadd.f32 0.0, %v1946
      %v1948 = vpop.f32.mrb[0].mxu0
      %1949 = vmatprep.mubr.bf16.mxu0 0
      %1950 = vmatmul.mubr.bf16.gmra.mrb[0].mxu0 %v1883
      %v1951 = vpop.f32.mrb[0].mxu0
      %v1952 = vadd.f32 0.0, %v1951
      %v1953 = vpop.f32.mrb[0].mxu0
      %v1954 = vpop.f32.mrb[0].mxu0
      %v1955 = vadd.f32 0.0, %v1954
      %v1956 = vpop.f32.mrb[0].mxu0
      %1957 = vmatprep.mubr.bf16.mxu0 0
      %1958 = vmatmul.mubr.bf16.gmra.mrb[0].mxu0 %v1886
      %v1959 = vpop.f32.mrb[0].mxu0
      %v1960 = vadd.f32 0.0, %v1959
      %v1961 = vpop.f32.mrb[0].mxu0
      %v1962 = vpop.f32.mrb[0].mxu0
      %v1963 = vadd.f32 0.0, %v1962
      %v1964 = vpop.f32.mrb[0].mxu0
      %1965 = vmatprep.mubr.bf16.mxu0 0
      %1966 = vmatmul.mubr.bf16.gmra.mrb[0].mxu0 %v1889
      %v1967 = vpop.f32.mrb[0].mxu0
      %v1968 = vadd.f32 0.0, %v1967
      %v1969 = vpop.f32.mrb[0].mxu0
      %v1970 = vpop.f32.mrb[0].mxu0
      %v1971 = vadd.f32 0.0, %v1970
      %v1972 = vpop.f32.mrb[0].mxu0
      %1973 = vmatprep.mubr.bf16.mxu0 0
      %1974 = vmatmul.mubr.bf16.gmra.mrb[0].mxu0 %v1892
      %v1975 = vpop.f32.mrb[0].mxu0
      %v1976 = vadd.f32 0.0, %v1975
      %v1977 = vpop.f32.mrb[0].mxu0
      %v1978 = vpop.f32.mrb[0].mxu0
      %v1979 = vadd.f32 0.0, %v1978
      %v1980 = vpop.f32.mrb[0].mxu0
      %1981 = vmatprep.mubr.bf16.mxu0 0
      %1982 = vmatmul.mubr.bf16.gmra.mrb[0].mxu0 %v1895
      %v1983 = vpop.f32.mrb[0].mxu0
      %v1984 = vadd.f32 0.0, %v1983
      %v1985 = vpop.f32.mrb[0].mxu0
      %v1986 = vpop.f32.mrb[0].mxu0
      %v1987 = vadd.f32 0.0, %v1986
      %v1988 = vpop.f32.mrb[0].mxu0
      %1989 = vmatprep.mubr.bf16.mxu0 0
      %1990 = vmatmul.mubr.bf16.gmra.mrb[0].mxu0 %v1898
      %v1991 = vpop.f32.mrb[0].mxu0
      %v1992 = vadd.f32 0.0, %v1991
      %v1993 = vpop.f32.mrb[0].mxu0
      %v1994 = vpop.f32.mrb[0].mxu0
      %v1995 = vadd.f32 0.0, %v1994
      %v1996 = vpop.f32.mrb[0].mxu0
      %1997 = vmatprep.mubr.bf16.mxu0 0
      %1998 = vmatmul.mubr.bf16.gmra.mrb[0].mxu0 %v1901
      %v1999 = vpop.f32.mrb[0].mxu0
      %v2000 = vadd.f32 0.0, %v1999
      %v2001 = vpop.f32.mrb[0].mxu0
      %v2002 = vpop.f32.mrb[0].mxu0
      %v2003 = vadd.f32 0.0, %v2002
      %v2004 = vpop.f32.mrb[0].mxu0
      %2005 = vmatprep.mubr.bf16.mxu0 0
      %2006 = vmatmul.mubr.bf16.gmra.mrb[0].mxu0 %v1904
      %v2007 = vpop.f32.mrb[0].mxu0
      %v2008 = vadd.f32 0.0, %v2007
      %v2009 = vpop.f32.mrb[0].mxu0
      %v2010 = vpop.f32.mrb[0].mxu0
      %v2011 = vadd.f32 0.0, %v2010
      %v2012 = vpop.f32.mrb[0].mxu0
      %2013 = vdwg.mxu0
      %v2014 = vadd.f32 %v1765, %v1944
      %v2015 = vadd.f32 %v1766, %v1947
      %v2016 = vadd.f32 %v1767, %v1952
      %v2017 = vadd.f32 %v1768, %v1955
      %v2018 = vadd.f32 %v1769, %v1960
      %v2019 = vadd.f32 %v1770, %v1963
      %v2020 = vadd.f32 %v1771, %v1968
      %v2021 = vadd.f32 %v1772, %v1971
      %v2022 = vadd.f32 %v1773, %v1976
      %v2023 = vadd.f32 %v1774, %v1979
      %v2024 = vadd.f32 %v1775, %v1984
      %v2025 = vadd.f32 %v1776, %v1987
      %v2026 = vadd.f32 %v1777, %v1992
      %v2027 = vadd.f32 %v1778, %v1995
      %v2028 = vadd.f32 %v1779, %v2000
      %v2029 = vadd.f32 %v1780, %v2003
      %v2030 = vadd.f32 %v1781, %v2008
      %v2031 = vadd.f32 %v1782, %v2011
      %v2032 = vld [vmem:[%s232 + $0x10] sm:$0x8]
      %s2033 = scalar_lea.vmem %s236, 16
      %v2034 = vld [vmem:[%s2033] sm:$0x3]
      %v2036 = vunpack.c.l.b16 %v2032
      %v2037 = vpack.c.b16 %v1583, %v2036
      %vm2038 = vcmask 1044480
      %v2039 = vrot.slane %v2037, 3
      %v2040 = vrot.slane %v1602, 3
      %v2041 = vsel %vm2038, %v2039, %v2040
      %v2042 = vrot.slane %v1603, 3
      %v2043 = vsel %vm2038, %v2040, %v2042
      %v2044 = vrot.slane %v1604, 3
      %v2045 = vsel %vm2038, %v2042, %v2044
      %v2046 = vrot.slane %v1605, 3
      %v2047 = vsel %vm2038, %v2044, %v2046
      %v2048 = vrot.slane %v1606, 3
      %v2049 = vsel %vm2038, %v2046, %v2048
      %v2050 = vrot.slane %v1607, 3
      %v2051 = vsel %vm2038, %v2048, %v2050
      %v2052 = vrot.slane %v1608, 3
      %v2053 = vsel %vm2038, %v2050, %v2052
      %v2054 = vrot.slane %v1609, 3
      %v2055 = vsel %vm2038, %v2052, %v2054
      %v2056 = vrot.slane %v1788, 3
      %v2057 = vsel %vm2038, %v2054, %v2056
      %v2059 = vsel %vm431, %v2041, 0
      %v2062 = vsel %vm431, %v2043, 0
      %v2065 = vsel %vm431, %v2045, 0
      %v2068 = vsel %vm431, %v2047, 0
      %v2071 = vsel %vm431, %v2049, 0
      %v2074 = vsel %vm431, %v2051, 0
      %v2077 = vsel %vm431, %v2053, 0
      %v2080 = vsel %vm431, %v2055, 0
      %v2083 = vsel %vm431, %v2057, 0
      %v2086 = vsel %vm459, %v2034, 0
      %2088 = vmatprep.subr.bf16.mxu0 0
      %2089 = vmatpush1.bf16.msra.mxu0 %v2086
      %2090 = vmatprep.subr.bf16.mxu0 0
      %2091 = vmatpush1.bf16.msra.mxu0 0
      %2092 = vmatprep.subr.bf16.mxu0 0
      %2093 = vmatpush1.bf16.msra.mxu0 0
      %2094 = vmatprep.subr.bf16.mxu0 0
      %2095 = vmatpush1.bf16.msra.mxu0 0
      %2096 = vmatprep.subr.bf16.mxu0 0
      %2097 = vmatpush1.bf16.msra.mxu0 0
      %2098 = vmatprep.subr.bf16.mxu0 0
      %2099 = vmatpush1.bf16.msra.mxu0 0
      %2100 = vmatprep.subr.bf16.mxu0 0
      %2101 = vmatpush1.bf16.msra.mxu0 0
      %2102 = vmatprep.subr.bf16.mxu0 0
      %2103 = vmatpush1.bf16.msra.mxu0 0
      %2104 = vmatprep.subr.bf16.mxu0 0
      %2105 = vmatpush1.bf16.msra.mxu0 0
      %2106 = vmatprep.subr.bf16.mxu0 0
      %2107 = vmatpush1.bf16.msra.mxu0 0
      %2108 = vmatprep.subr.bf16.mxu0 0
      %2109 = vmatpush1.bf16.msra.mxu0 0
      %2110 = vmatprep.subr.bf16.mxu0 0
      %2111 = vmatpush1.bf16.msra.mxu0 0
      %2112 = vmatprep.subr.bf16.mxu0 0
      %2113 = vmatpush1.bf16.msra.mxu0 0
      %2114 = vmatprep.subr.bf16.mxu0 0
      %2115 = vmatpush1.bf16.msra.mxu0 0
      %2116 = vmatprep.subr.bf16.mxu0 0
      %2117 = vmatpush1.bf16.msra.mxu0 0
      %2118 = vmatprep.subr.bf16.mxu0 0
      %2119 = vmatpush1.bf16.msra.mxu0 0
      %2120 = vmatprep.mubr.bf16.mxu0 0
      %2121 = vmatmul.mubr.bf16.gmra.mrb[0].mxu0 %v2059
      %v2122 = vpop.f32.mrb[0].mxu0
      %v2123 = vadd.f32 0.0, %v2122
      %v2124 = vpop.f32.mrb[0].mxu0
      %v2125 = vpop.f32.mrb[0].mxu0
      %v2126 = vadd.f32 0.0, %v2125
      %v2127 = vpop.f32.mrb[0].mxu0
      %2128 = vmatprep.mubr.bf16.mxu0 0
      %2129 = vmatmul.mubr.bf16.gmra.mrb[0].mxu0 %v2062
      %v2130 = vpop.f32.mrb[0].mxu0
      %v2131 = vadd.f32 0.0, %v2130
      %v2132 = vpop.f32.mrb[0].mxu0
      %v2133 = vpop.f32.mrb[0].mxu0
      %v2134 = vadd.f32 0.0, %v2133
      %v2135 = vpop.f32.mrb[0].mxu0
      %2136 = vmatprep.mubr.bf16.mxu0 0
      %2137 = vmatmul.mubr.bf16.gmra.mrb[0].mxu0 %v2065
      %v2138 = vpop.f32.mrb[0].mxu0
      %v2139 = vadd.f32 0.0, %v2138
      %v2140 = vpop.f32.mrb[0].mxu0
      %v2141 = vpop.f32.mrb[0].mxu0
      %v2142 = vadd.f32 0.0, %v2141
      %v2143 = vpop.f32.mrb[0].mxu0
      %2144 = vmatprep.mubr.bf16.mxu0 0
      %2145 = vmatmul.mubr.bf16.gmra.mrb[0].mxu0 %v2068
      %v2146 = vpop.f32.mrb[0].mxu0
      %v2147 = vadd.f32 0.0, %v2146
      %v2148 = vpop.f32.mrb[0].mxu0
      %v2149 = vpop.f32.mrb[0].mxu0
      %v2150 = vadd.f32 0.0, %v2149
      %v2151 = vpop.f32.mrb[0].mxu0
      %2152 = vmatprep.mubr.bf16.mxu0 0
      %2153 = vmatmul.mubr.bf16.gmra.mrb[0].mxu0 %v2071
      %v2154 = vpop.f32.mrb[0].mxu0
      %v2155 = vadd.f32 0.0, %v2154
      %v2156 = vpop.f32.mrb[0].mxu0
      %v2157 = vpop.f32.mrb[0].mxu0
      %v2158 = vadd.f32 0.0, %v2157
      %v2159 = vpop.f32.mrb[0].mxu0
      %2160 = vmatprep.mubr.bf16.mxu0 0
      %2161 = vmatmul.mubr.bf16.gmra.mrb[0].mxu0 %v2074
      %v2162 = vpop.f32.mrb[0].mxu0
      %v2163 = vadd.f32 0.0, %v2162
      %v2164 = vpop.f32.mrb[0].mxu0
      %v2165 = vpop.f32.mrb[0].mxu0
      %v2166 = vadd.f32 0.0, %v2165
      %v2167 = vpop.f32.mrb[0].mxu0
      %2168 = vmatprep.mubr.bf16.mxu0 0
      %2169 = vmatmul.mubr.bf16.gmra.mrb[0].mxu0 %v2077
      %v2170 = vpop.f32.mrb[0].mxu0
      %v2171 = vadd.f32 0.0, %v2170
      %v2172 = vpop.f32.mrb[0].mxu0
      %v2173 = vpop.f32.mrb[0].mxu0
      %v2174 = vadd.f32 0.0, %v2173
      %v2175 = vpop.f32.mrb[0].mxu0
      %2176 = vmatprep.mubr.bf16.mxu0 0
      %2177 = vmatmul.mubr.bf16.gmra.mrb[0].mxu0 %v2080
      %v2178 = vpop.f32.mrb[0].mxu0
      %v2179 = vadd.f32 0.0, %v2178
      %v2180 = vpop.f32.mrb[0].mxu0
      %v2181 = vpop.f32.mrb[0].mxu0
      %v2182 = vadd.f32 0.0, %v2181
      %v2183 = vpop.f32.mrb[0].mxu0
      %2184 = vmatprep.mubr.bf16.mxu0 0
      %2185 = vmatmul.mubr.bf16.gmra.mrb[0].mxu0 %v2083
      %v2186 = vpop.f32.mrb[0].mxu0
      %v2187 = vadd.f32 0.0, %v2186
      %v2188 = vpop.f32.mrb[0].mxu0
      %v2189 = vpop.f32.mrb[0].mxu0
      %v2190 = vadd.f32 0.0, %v2189
      %v2191 = vpop.f32.mrb[0].mxu0
      %2192 = vdwg.mxu0
      %v2193 = vadd.f32 %v2014, %v2123
      %v2194 = vadd.f32 %v2015, %v2126
      %v2195 = vadd.f32 %v2016, %v2131
      %v2196 = vadd.f32 %v2017, %v2134
      %v2197 = vadd.f32 %v2018, %v2139
      %v2198 = vadd.f32 %v2019, %v2142
      %v2199 = vadd.f32 %v2020, %v2147
      %v2200 = vadd.f32 %v2021, %v2150
      %v2201 = vadd.f32 %v2022, %v2155
      %v2202 = vadd.f32 %v2023, %v2158
      %v2203 = vadd.f32 %v2024, %v2163
      %v2204 = vadd.f32 %v2025, %v2166
      %v2205 = vadd.f32 %v2026, %v2171
      %v2206 = vadd.f32 %v2027, %v2174
      %v2207 = vadd.f32 %v2028, %v2179
      %v2208 = vadd.f32 %v2029, %v2182
      %v2209 = vadd.f32 %v2030, %v2187
      %v2210 = vadd.f32 %v2031, %v2190
      %v2211 = vld [vmem:[%s239] sm:$0x1]
      %v2213 = vlaneseq
      %v2214 = vshrl.u32 %v2213, 7
      %v2215 = vsub.s32 0, %v2214
      %v2216 = vrot.slane %v2211, %v2215
      %v2218 = vadd.f32 %v2193, %v2216
      %v2219 = vadd.f32 %v2194, %v2216
      %v2220 = vadd.f32 %v2195, %v2216
      %v2221 = vadd.f32 %v2196, %v2216
      %v2222 = vadd.f32 %v2197, %v2216
      %v2223 = vadd.f32 %v2198, %v2216
      %v2224 = vadd.f32 %v2199, %v2216
      %v2225 = vadd.f32 %v2200, %v2216
      %v2226 = vadd.f32 %v2201, %v2216
      %v2227 = vadd.f32 %v2202, %v2216
      %v2228 = vadd.f32 %v2203, %v2216
      %v2229 = vadd.f32 %v2204, %v2216
      %v2230 = vadd.f32 %v2205, %v2216
      %v2231 = vadd.f32 %v2206, %v2216
      %v2232 = vadd.f32 %v2207, %v2216
      %v2233 = vadd.f32 %v2208, %v2216
      %v2234 = vadd.f32 %v2209, %v2216
      %v2235 = vadd.f32 %v2210, %v2216
      %v2236 = vmax.f32 %v2218, 0.0
      %v2237 = vmax.f32 %v2219, 0.0
      %v2238 = vmax.f32 %v2220, 0.0
      %v2239 = vmax.f32 %v2221, 0.0
      %v2240 = vmax.f32 %v2222, 0.0
      %v2241 = vmax.f32 %v2223, 0.0
      %v2242 = vmax.f32 %v2224, 0.0
      %v2243 = vmax.f32 %v2225, 0.0
      %v2244 = vmax.f32 %v2226, 0.0
      %v2245 = vmax.f32 %v2227, 0.0
      %v2246 = vmax.f32 %v2228, 0.0
      %v2247 = vmax.f32 %v2229, 0.0
      %v2248 = vmax.f32 %v2230, 0.0
      %v2249 = vmax.f32 %v2231, 0.0
      %v2250 = vmax.f32 %v2232, 0.0
      %v2251 = vmax.f32 %v2233, 0.0
      %v2252 = vmax.f32 %v2234, 0.0
      %v2253 = vmax.f32 %v2235, 0.0
      %2255 = vset.pattern.permute.xlu0 0
      %2256 = vperm.xlu0 %2255, %v266
      %v2257 = vpop.permute.xlu0 %2256
      %2260 = vset.pattern.permute.xlu0 0
      %2261 = vperm.xlu0 %2260, %v267
      %v2262 = vpop.permute.xlu0 %2261
      %2265 = vset.pattern.permute.xlu0 0
      %2266 = vperm.xlu0 %2265, %v268
      %v2267 = vpop.permute.xlu0 %2266
      %2270 = vset.pattern.permute.xlu0 0
      %2271 = vperm.xlu0 %2270, %v269
      %v2272 = vpop.permute.xlu0 %2271
      %2275 = vset.pattern.permute.xlu0 0
      %2276 = vperm.xlu0 %2275, %v270
      %v2277 = vpop.permute.xlu0 %2276
      %2280 = vset.pattern.permute.xlu0 0
      %2281 = vperm.xlu0 %2280, %v271
      %v2282 = vpop.permute.xlu0 %2281
      %2285 = vset.pattern.permute.xlu0 0
      %2286 = vperm.xlu0 %2285, %v272
      %v2287 = vpop.permute.xlu0 %2286
      %2290 = vset.pattern.permute.xlu0 0
      %2291 = vperm.xlu0 %2290, %v273
      %v2292 = vpop.permute.xlu0 %2291
      %2295 = vset.pattern.permute.xlu0 0
      %2296 = vperm.xlu0 %2295, %v274
      %v2297 = vpop.permute.xlu0 %2296
      %2300 = vset.pattern.permute.xlu0 0
      %2301 = vperm.xlu0 %2300, %v275
      %v2302 = vpop.permute.xlu0 %2301
      %2305 = vset.pattern.permute.xlu0 0
      %2306 = vperm.xlu0 %2305, %v276
      %v2307 = vpop.permute.xlu0 %2306
      %2310 = vset.pattern.permute.xlu0 0
      %2311 = vperm.xlu0 %2310, %v277
      %v2312 = vpop.permute.xlu0 %2311
      %2315 = vset.pattern.permute.xlu0 0
      %2316 = vperm.xlu0 %2315, %v278
      %v2317 = vpop.permute.xlu0 %2316
      %2320 = vset.pattern.permute.xlu0 0
      %2321 = vperm.xlu0 %2320, %v279
      %v2322 = vpop.permute.xlu0 %2321
      %2325 = vset.pattern.permute.xlu0 0
      %2326 = vperm.xlu0 %2325, %v280
      %v2327 = vpop.permute.xlu0 %2326
      %2330 = vset.pattern.permute.xlu0 0
      %2331 = vperm.xlu0 %2330, %v281
      %v2332 = vpop.permute.xlu0 %2331
      %2335 = vset.pattern.permute.xlu0 0
      %2336 = vperm.xlu0 %2335, %v282
      %v2337 = vpop.permute.xlu0 %2336
      %2340 = vset.pattern.permute.xlu0 0
      %2341 = vperm.xlu0 %2340, %v283
      %v2342 = vpop.permute.xlu0 %2341
      %v2344 = vmul.f32 %v2236, %v2257
      %v2345 = vmul.f32 %v2237, %v2262
      %v2346 = vmul.f32 %v2238, %v2267
      %v2347 = vmul.f32 %v2239, %v2272
      %v2348 = vmul.f32 %v2240, %v2277
      %v2349 = vmul.f32 %v2241, %v2282
      %v2350 = vmul.f32 %v2242, %v2287
      %v2351 = vmul.f32 %v2243, %v2292
      %v2352 = vmul.f32 %v2244, %v2297
      %v2353 = vmul.f32 %v2245, %v2302
      %v2354 = vmul.f32 %v2246, %v2307
      %v2355 = vmul.f32 %v2247, %v2312
      %v2356 = vmul.f32 %v2248, %v2317
      %v2357 = vmul.f32 %v2249, %v2322
      %v2358 = vmul.f32 %v2250, %v2327
      %v2359 = vmul.f32 %v2251, %v2332
      %v2360 = vmul.f32 %v2252, %v2337
      %v2361 = vmul.f32 %v2253, %v2342
      %v2362 = vld [vmem:[#allocation2] sm:$0xff]
      %v2363 = vld [vmem:[#allocation2 + $0x8] sm:$0xff]
      %v2364 = vld [vmem:[#allocation2 + $0x10] sm:$0xff]
      %v2365 = vld [vmem:[#allocation2 + $0x18] sm:$0xff]
      %v2366 = vld [vmem:[#allocation2 + $0x20] sm:$0xff]
      %v2367 = vld [vmem:[#allocation2 + $0x28] sm:$0xff]
      %v2368 = vld [vmem:[#allocation2 + $0x30] sm:$0xff]
      %v2369 = vld [vmem:[#allocation2 + $0x38] sm:$0xff]
      %v2370 = vld [vmem:[#allocation2 + $0x40] sm:$0xff]
      %v2371 = vld [vmem:[#allocation2 + $0x48] sm:$0xff]
      %v2372 = vld [vmem:[#allocation2 + $0x50] sm:$0xff]
      %v2373 = vld [vmem:[#allocation2 + $0x58] sm:$0xff]
      %v2374 = vld [vmem:[#allocation2 + $0x60] sm:$0xff]
      %v2375 = vld [vmem:[#allocation2 + $0x68] sm:$0xff]
      %v2376 = vld [vmem:[#allocation2 + $0x70] sm:$0xff]
      %v2377 = vld [vmem:[#allocation2 + $0x78] sm:$0xff]
      %v2378 = vld [vmem:[#allocation2 + $0x80] sm:$0xff]
      %v2379 = vld [vmem:[#allocation2 + $0x88] sm:$0xff]
      %v2380 = vadd.f32 %v2362, %v2344
      %v2381 = vadd.f32 %v2363, %v2345
      %v2382 = vadd.f32 %v2364, %v2346
      %v2383 = vadd.f32 %v2365, %v2347
      %v2384 = vadd.f32 %v2366, %v2348
      %v2385 = vadd.f32 %v2367, %v2349
      %v2386 = vadd.f32 %v2368, %v2350
      %v2387 = vadd.f32 %v2369, %v2351
      %v2388 = vadd.f32 %v2370, %v2352
      %v2389 = vadd.f32 %v2371, %v2353
      %v2390 = vadd.f32 %v2372, %v2354
      %v2391 = vadd.f32 %v2373, %v2355
      %v2392 = vadd.f32 %v2374, %v2356
      %v2393 = vadd.f32 %v2375, %v2357
      %v2394 = vadd.f32 %v2376, %v2358
      %v2395 = vadd.f32 %v2377, %v2359
      %v2396 = vadd.f32 %v2378, %v2360
      %v2397 = vadd.f32 %v2379, %v2361
      %2398 = vst [vmem:[#allocation2] sm:$0xff] %v2380
      %2399 = vst [vmem:[#allocation2 + $0x8] sm:$0xff] %v2381
      %2400 = vst [vmem:[#allocation2 + $0x10] sm:$0xff] %v2382
      %2401 = vst [vmem:[#allocation2 + $0x18] sm:$0xff] %v2383
      %2402 = vst [vmem:[#allocation2 + $0x20] sm:$0xff] %v2384
      %2403 = vst [vmem:[#allocation2 + $0x28] sm:$0xff] %v2385
      %2404 = vst [vmem:[#allocation2 + $0x30] sm:$0xff] %v2386
      %2405 = vst [vmem:[#allocation2 + $0x38] sm:$0xff] %v2387
      %2406 = vst [vmem:[#allocation2 + $0x40] sm:$0xff] %v2388
      %2407 = vst [vmem:[#allocation2 + $0x48] sm:$0xff] %v2389
      %2408 = vst [vmem:[#allocation2 + $0x50] sm:$0xff] %v2390
      %2409 = vst [vmem:[#allocation2 + $0x58] sm:$0xff] %v2391
      %2410 = vst [vmem:[#allocation2 + $0x60] sm:$0xff] %v2392
      %2411 = vst [vmem:[#allocation2 + $0x68] sm:$0xff] %v2393
      %2412 = vst [vmem:[#allocation2 + $0x70] sm:$0xff] %v2394
      %2413 = vst [vmem:[#allocation2 + $0x78] sm:$0xff] %v2395
      %2414 = vst [vmem:[#allocation2 + $0x80] sm:$0xff] %v2396
      %2415 = vst [vmem:[#allocation2 + $0x88] sm:$0xff] %v2397
      %v2416 = vld [vmem:[%s232 + $0x48] sm:$0xf]
      %v2417 = vld [vmem:[%s232 + $0x4c] sm:$0xf]
      %v2418 = vld [vmem:[%s232 + $0x50] sm:$0xf]
      %v2419 = vld [vmem:[%s232 + $0x54] sm:$0xf]
      %v2420 = vld [vmem:[%s232 + $0x58] sm:$0xf]
      %v2421 = vld [vmem:[%s232 + $0x5c] sm:$0xf]
      %v2422 = vld [vmem:[%s232 + $0x60] sm:$0xf]
      %v2423 = vld [vmem:[%s232 + $0x64] sm:$0xf]
      %v2424 = vld [vmem:[%s232 + $0x68] sm:$0xf]
      %v2425 = vld [vmem:[%s232 + $0x6c] sm:$0xf]
      %v2426 = vld [vmem:[%s232 + $0x70] sm:$0xf]
      %v2427 = vld [vmem:[%s232 + $0x74] sm:$0xf]
      %v2428 = vld [vmem:[%s232 + $0x78] sm:$0xf]
      %v2429 = vld [vmem:[%s232 + $0x7c] sm:$0xf]
      %v2430 = vld [vmem:[%s232 + $0x80] sm:$0xf]
      %v2431 = vld [vmem:[%s232 + $0x84] sm:$0xf]
      %v2432 = vld [vmem:[%s232 + $0x88] sm:$0xf]
      %v2433 = vld [vmem:[%s232 + $0x8c] sm:$0xf]
      %v2434 = vld [vmem:[%s236] sm:$0x3]
      %v2435 = vld [vmem:[%s232 + $0x90] sm:$0x1]
      %v2436 = vld [vmem:[%s304] sm:$0x3]
      %v2456 = vunpack.c.l.b16 %v2416
      %v2457 = vunpack.c.l.b16 %v2417
      %v2458 = vunpack.c.l.b16 %v2418
      %v2459 = vunpack.c.l.b16 %v2419
      %v2460 = vunpack.c.l.b16 %v2420
      %v2461 = vunpack.c.l.b16 %v2421
      %v2462 = vunpack.c.l.b16 %v2422
      %v2463 = vunpack.c.l.b16 %v2423
      %v2464 = vunpack.c.l.b16 %v2424
      %v2465 = vunpack.c.l.b16 %v2425
      %v2466 = vunpack.c.l.b16 %v2426
      %v2467 = vunpack.c.l.b16 %v2427
      %v2468 = vunpack.c.l.b16 %v2428
      %v2469 = vunpack.c.l.b16 %v2429
      %v2470 = vunpack.c.l.b16 %v2430
      %v2471 = vunpack.c.l.b16 %v2431
      %v2472 = vunpack.c.l.b16 %v2432
      %v2473 = vunpack.c.l.b16 %v2433
      %v2474 = vunpack.c.l.b16 %v2435
      %v2475 = vpack.c.b16 %v2457, %v2456
      %v2476 = vpack.c.b16 %v2459, %v2458
      %v2477 = vpack.c.b16 %v2461, %v2460
      %v2478 = vpack.c.b16 %v2463, %v2462
      %v2479 = vpack.c.b16 %v2465, %v2464
      %v2480 = vpack.c.b16 %v2467, %v2466
      %v2481 = vpack.c.b16 %v2469, %v2468
      %v2482 = vpack.c.b16 %v2471, %v2470
      %v2483 = vpack.c.b16 %v2473, %v2472
      %v2484 = vpack.c.b16 %v2474, %v2474
      %v2486 = vshrl.u32 %v2475, 16
      %v2488 = vshll.u32 %v2475, 16
      %v2490 = vrot.slane %v2488, 1
      %v2491 = vor.u32 %v2486, %v2490
      %v2493 = vshll.u32 %v2476, 16
      %v2495 = vrot.slane %v2493, 1
      %v2496 = vsel %vm354, %v2491, %v2495
      %v2497 = vshrl.u32 %v2476, 16
      %v2499 = vor.u32 %v2497, %v2495
      %v2501 = vshll.u32 %v2477, 16
      %v2503 = vrot.slane %v2501, 1
      %v2504 = vsel %vm354, %v2499, %v2503
      %v2505 = vshrl.u32 %v2477, 16
      %v2507 = vor.u32 %v2505, %v2503
      %v2509 = vshll.u32 %v2478, 16
      %v2511 = vrot.slane %v2509, 1
      %v2512 = vsel %vm354, %v2507, %v2511
      %v2513 = vshrl.u32 %v2478, 16
      %v2515 = vor.u32 %v2513, %v2511
      %v2517 = vshll.u32 %v2479, 16
      %v2519 = vrot.slane %v2517, 1
      %v2520 = vsel %vm354, %v2515, %v2519
      %v2521 = vshrl.u32 %v2479, 16
      %v2523 = vor.u32 %v2521, %v2519
      %v2525 = vshll.u32 %v2480, 16
      %v2527 = vrot.slane %v2525, 1
      %v2528 = vsel %vm354, %v2523, %v2527
      %v2529 = vshrl.u32 %v2480, 16
      %v2531 = vor.u32 %v2529, %v2527
      %v2533 = vshll.u32 %v2481, 16
      %v2535 = vrot.slane %v2533, 1
      %v2536 = vsel %vm354, %v2531, %v2535
      %v2537 = vshrl.u32 %v2481, 16
      %v2539 = vor.u32 %v2537, %v2535
      %v2541 = vshll.u32 %v2482, 16
      %v2543 = vrot.slane %v2541, 1
      %v2544 = vsel %vm354, %v2539, %v2543
      %v2545 = vshrl.u32 %v2482, 16
      %v2547 = vor.u32 %v2545, %v2543
      %v2549 = vshll.u32 %v2483, 16
      %v2551 = vrot.slane %v2549, 1
      %v2552 = vsel %vm354, %v2547, %v2551
      %v2553 = vshrl.u32 %v2483, 16
      %v2555 = vor.u32 %v2553, %v2551
      %v2557 = vshll.u32 %v2484, 16
      %v2559 = vrot.slane %v2557, 1
      %v2560 = vsel %vm354, %v2555, %v2559
      %v2562 = vsel %vm431, %v2496, 0
      %v2565 = vsel %vm431, %v2504, 0
      %v2568 = vsel %vm431, %v2512, 0
      %v2571 = vsel %vm431, %v2520, 0
      %v2574 = vsel %vm431, %v2528, 0
      %v2577 = vsel %vm431, %v2536, 0
      %v2580 = vsel %vm431, %v2544, 0
      %v2583 = vsel %vm431, %v2552, 0
      %v2586 = vsel %vm431, %v2560, 0
      %v2589 = vsel %vm459, %v2436, 0
      %2591 = vmatprep.subr.bf16.mxu0 0
      %2592 = vmatpush1.bf16.msra.mxu0 %v2589
      %2593 = vmatprep.subr.bf16.mxu0 0
      %2594 = vmatpush1.bf16.msra.mxu0 0
      %2595 = vmatprep.subr.bf16.mxu0 0
      %2596 = vmatpush1.bf16.msra.mxu0 0
      %2597 = vmatprep.subr.bf16.mxu0 0
      %2598 = vmatpush1.bf16.msra.mxu0 0
      %2599 = vmatprep.subr.bf16.mxu0 0
      %2600 = vmatpush1.bf16.msra.mxu0 0
      %2601 = vmatprep.subr.bf16.mxu0 0
      %2602 = vmatpush1.bf16.msra.mxu0 0
      %2603 = vmatprep.subr.bf16.mxu0 0
      %2604 = vmatpush1.bf16.msra.mxu0 0
      %2605 = vmatprep.subr.bf16.mxu0 0
      %2606 = vmatpush1.bf16.msra.mxu0 0
      %2607 = vmatprep.subr.bf16.mxu0 0
      %2608 = vmatpush1.bf16.msra.mxu0 0
      %2609 = vmatprep.subr.bf16.mxu0 0
      %2610 = vmatpush1.bf16.msra.mxu0 0
      %2611 = vmatprep.subr.bf16.mxu0 0
      %2612 = vmatpush1.bf16.msra.mxu0 0
      %2613 = vmatprep.subr.bf16.mxu0 0
      %2614 = vmatpush1.bf16.msra.mxu0 0
      %2615 = vmatprep.subr.bf16.mxu0 0
      %2616 = vmatpush1.bf16.msra.mxu0 0
      %2617 = vmatprep.subr.bf16.mxu0 0
      %2618 = vmatpush1.bf16.msra.mxu0 0
      %2619 = vmatprep.subr.bf16.mxu0 0
      %2620 = vmatpush1.bf16.msra.mxu0 0
      %2621 = vmatprep.subr.bf16.mxu0 0
      %2622 = vmatpush1.bf16.msra.mxu0 0
      %2623 = vmatprep.mubr.bf16.mxu0 0
      %2624 = vmatmul.mubr.bf16.gmra.mrb[0].mxu0 %v2562
      %v2625 = vpop.f32.mrb[0].mxu0
      %v2626 = vadd.f32 0.0, %v2625
      %v2627 = vpop.f32.mrb[0].mxu0
      %v2628 = vpop.f32.mrb[0].mxu0
      %v2629 = vadd.f32 0.0, %v2628
      %v2630 = vpop.f32.mrb[0].mxu0
      %2631 = vmatprep.mubr.bf16.mxu0 0
      %2632 = vmatmul.mubr.bf16.gmra.mrb[0].mxu0 %v2565
      %v2633 = vpop.f32.mrb[0].mxu0
      %v2634 = vadd.f32 0.0, %v2633
      %v2635 = vpop.f32.mrb[0].mxu0
      %v2636 = vpop.f32.mrb[0].mxu0
      %v2637 = vadd.f32 0.0, %v2636
      %v2638 = vpop.f32.mrb[0].mxu0
      %2639 = vmatprep.mubr.bf16.mxu0 0
      %2640 = vmatmul.mubr.bf16.gmra.mrb[0].mxu0 %v2568
      %v2641 = vpop.f32.mrb[0].mxu0
      %v2642 = vadd.f32 0.0, %v2641
      %v2643 = vpop.f32.mrb[0].mxu0
      %v2644 = vpop.f32.mrb[0].mxu0
      %v2645 = vadd.f32 0.0, %v2644
      %v2646 = vpop.f32.mrb[0].mxu0
      %2647 = vmatprep.mubr.bf16.mxu0 0
      %2648 = vmatmul.mubr.bf16.gmra.mrb[0].mxu0 %v2571
      %v2649 = vpop.f32.mrb[0].mxu0
      %v2650 = vadd.f32 0.0, %v2649
      %v2651 = vpop.f32.mrb[0].mxu0
      %v2652 = vpop.f32.mrb[0].mxu0
      %v2653 = vadd.f32 0.0, %v2652
      %v2654 = vpop.f32.mrb[0].mxu0
      %2655 = vmatprep.mubr.bf16.mxu0 0
      %2656 = vmatmul.mubr.bf16.gmra.mrb[0].mxu0 %v2574
      %v2657 = vpop.f32.mrb[0].mxu0
      %v2658 = vadd.f32 0.0, %v2657
      %v2659 = vpop.f32.mrb[0].mxu0
      %v2660 = vpop.f32.mrb[0].mxu0
      %v2661 = vadd.f32 0.0, %v2660
      %v2662 = vpop.f32.mrb[0].mxu0
      %2663 = vmatprep.mubr.bf16.mxu0 0
      %2664 = vmatmul.mubr.bf16.gmra.mrb[0].mxu0 %v2577
      %v2665 = vpop.f32.mrb[0].mxu0
      %v2666 = vadd.f32 0.0, %v2665
      %v2667 = vpop.f32.mrb[0].mxu0
      %v2668 = vpop.f32.mrb[0].mxu0
      %v2669 = vadd.f32 0.0, %v2668
      %v2670 = vpop.f32.mrb[0].mxu0
      %2671 = vmatprep.mubr.bf16.mxu0 0
      %2672 = vmatmul.mubr.bf16.gmra.mrb[0].mxu0 %v2580
      %v2673 = vpop.f32.mrb[0].mxu0
      %v2674 = vadd.f32 0.0, %v2673
      %v2675 = vpop.f32.mrb[0].mxu0
      %v2676 = vpop.f32.mrb[0].mxu0
      %v2677 = vadd.f32 0.0, %v2676
      %v2678 = vpop.f32.mrb[0].mxu0
      %2679 = vmatprep.mubr.bf16.mxu0 0
      %2680 = vmatmul.mubr.bf16.gmra.mrb[0].mxu0 %v2583
      %v2681 = vpop.f32.mrb[0].mxu0
      %v2682 = vadd.f32 0.0, %v2681
      %v2683 = vpop.f32.mrb[0].mxu0
      %v2684 = vpop.f32.mrb[0].mxu0
      %v2685 = vadd.f32 0.0, %v2684
      %v2686 = vpop.f32.mrb[0].mxu0
      %2687 = vmatprep.mubr.bf16.mxu0 0
      %2688 = vmatmul.mubr.bf16.gmra.mrb[0].mxu0 %v2586
      %v2689 = vpop.f32.mrb[0].mxu0
      %v2690 = vadd.f32 0.0, %v2689
      %v2691 = vpop.f32.mrb[0].mxu0
      %v2692 = vpop.f32.mrb[0].mxu0
      %v2693 = vadd.f32 0.0, %v2692
      %v2694 = vpop.f32.mrb[0].mxu0
      %2695 = vdwg.mxu0
      %v2696 = vsel %vm431, %v2475, 0
      %v2698 = vsel %vm431, %v2476, 0
      %v2700 = vsel %vm431, %v2477, 0
      %v2702 = vsel %vm431, %v2478, 0
      %v2704 = vsel %vm431, %v2479, 0
      %v2706 = vsel %vm431, %v2480, 0
      %v2708 = vsel %vm431, %v2481, 0
      %v2710 = vsel %vm431, %v2482, 0
      %v2712 = vsel %vm431, %v2483, 0
      %v2715 = vsel %vm459, %v2434, 0
      %2717 = vmatprep.subr.bf16.mxu0 0
      %2718 = vmatpush1.bf16.msra.mxu0 %v2715
      %2719 = vmatprep.subr.bf16.mxu0 0
      %2720 = vmatpush1.bf16.msra.mxu0 0
      %2721 = vmatprep.subr.bf16.mxu0 0
      %2722 = vmatpush1.bf16.msra.mxu0 0
      %2723 = vmatprep.subr.bf16.mxu0 0
      %2724 = vmatpush1.bf16.msra.mxu0 0
      %2725 = vmatprep.subr.bf16.mxu0 0
      %2726 = vmatpush1.bf16.msra.mxu0 0
      %2727 = vmatprep.subr.bf16.mxu0 0
      %2728 = vmatpush1.bf16.msra.mxu0 0
      %2729 = vmatprep.subr.bf16.mxu0 0
      %2730 = vmatpush1.bf16.msra.mxu0 0
      %2731 = vmatprep.subr.bf16.mxu0 0
      %2732 = vmatpush1.bf16.msra.mxu0 0
      %2733 = vmatprep.subr.bf16.mxu0 0
      %2734 = vmatpush1.bf16.msra.mxu0 0
      %2735 = vmatprep.subr.bf16.mxu0 0
      %2736 = vmatpush1.bf16.msra.mxu0 0
      %2737 = vmatprep.subr.bf16.mxu0 0
      %2738 = vmatpush1.bf16.msra.mxu0 0
      %2739 = vmatprep.subr.bf16.mxu0 0
      %2740 = vmatpush1.bf16.msra.mxu0 0
      %2741 = vmatprep.subr.bf16.mxu0 0
      %2742 = vmatpush1.bf16.msra.mxu0 0
      %2743 = vmatprep.subr.bf16.mxu0 0
      %2744 = vmatpush1.bf16.msra.mxu0 0
      %2745 = vmatprep.subr.bf16.mxu0 0
      %2746 = vmatpush1.bf16.msra.mxu0 0
      %2747 = vmatprep.subr.bf16.mxu0 0
      %2748 = vmatpush1.bf16.msra.mxu0 0
      %2749 = vmatprep.mubr.bf16.mxu0 0
      %2750 = vmatmul.mubr.bf16.gmra.mrb[0].mxu0 %v2696
      %v2751 = vpop.f32.mrb[0].mxu0
      %v2752 = vadd.f32 %v2626, %v2751
      %v2753 = vpop.f32.mrb[0].mxu0
      %v2754 = vpop.f32.mrb[0].mxu0
      %v2755 = vadd.f32 %v2629, %v2754
      %v2756 = vpop.f32.mrb[0].mxu0
      %2757 = vmatprep.mubr.bf16.mxu0 0
      %2758 = vmatmul.mubr.bf16.gmra.mrb[0].mxu0 %v2698
      %v2759 = vpop.f32.mrb[0].mxu0
      %v2760 = vadd.f32 %v2634, %v2759
      %v2761 = vpop.f32.mrb[0].mxu0
      %v2762 = vpop.f32.mrb[0].mxu0
      %v2763 = vadd.f32 %v2637, %v2762
      %v2764 = vpop.f32.mrb[0].mxu0
      %2765 = vmatprep.mubr.bf16.mxu0 0
      %2766 = vmatmul.mubr.bf16.gmra.mrb[0].mxu0 %v2700
      %v2767 = vpop.f32.mrb[0].mxu0
      %v2768 = vadd.f32 %v2642, %v2767
      %v2769 = vpop.f32.mrb[0].mxu0
      %v2770 = vpop.f32.mrb[0].mxu0
      %v2771 = vadd.f32 %v2645, %v2770
      %v2772 = vpop.f32.mrb[0].mxu0
      %2773 = vmatprep.mubr.bf16.mxu0 0
      %2774 = vmatmul.mubr.bf16.gmra.mrb[0].mxu0 %v2702
      %v2775 = vpop.f32.mrb[0].mxu0
      %v2776 = vadd.f32 %v2650, %v2775
      %v2777 = vpop.f32.mrb[0].mxu0
      %v2778 = vpop.f32.mrb[0].mxu0
      %v2779 = vadd.f32 %v2653, %v2778
      %v2780 = vpop.f32.mrb[0].mxu0
      %2781 = vmatprep.mubr.bf16.mxu0 0
      %2782 = vmatmul.mubr.bf16.gmra.mrb[0].mxu0 %v2704
      %v2783 = vpop.f32.mrb[0].mxu0
      %v2784 = vadd.f32 %v2658, %v2783
      %v2785 = vpop.f32.mrb[0].mxu0
      %v2786 = vpop.f32.mrb[0].mxu0
      %v2787 = vadd.f32 %v2661, %v2786
      %v2788 = vpop.f32.mrb[0].mxu0
      %2789 = vmatprep.mubr.bf16.mxu0 0
      %2790 = vmatmul.mubr.bf16.gmra.mrb[0].mxu0 %v2706
      %v2791 = vpop.f32.mrb[0].mxu0
      %v2792 = vadd.f32 %v2666, %v2791
      %v2793 = vpop.f32.mrb[0].mxu0
      %v2794 = vpop.f32.mrb[0].mxu0
      %v2795 = vadd.f32 %v2669, %v2794
      %v2796 = vpop.f32.mrb[0].mxu0
      %2797 = vmatprep.mubr.bf16.mxu0 0
      %2798 = vmatmul.mubr.bf16.gmra.mrb[0].mxu0 %v2708
      %v2799 = vpop.f32.mrb[0].mxu0
      %v2800 = vadd.f32 %v2674, %v2799
      %v2801 = vpop.f32.mrb[0].mxu0
      %v2802 = vpop.f32.mrb[0].mxu0
      %v2803 = vadd.f32 %v2677, %v2802
      %v2804 = vpop.f32.mrb[0].mxu0
      %2805 = vmatprep.mubr.bf16.mxu0 0
      %2806 = vmatmul.mubr.bf16.gmra.mrb[0].mxu0 %v2710
      %v2807 = vpop.f32.mrb[0].mxu0
      %v2808 = vadd.f32 %v2682, %v2807
      %v2809 = vpop.f32.mrb[0].mxu0
      %v2810 = vpop.f32.mrb[0].mxu0
      %v2811 = vadd.f32 %v2685, %v2810
      %v2812 = vpop.f32.mrb[0].mxu0
      %2813 = vmatprep.mubr.bf16.mxu0 0
      %2814 = vmatmul.mubr.bf16.gmra.mrb[0].mxu0 %v2712
      %v2815 = vpop.f32.mrb[0].mxu0
      %v2816 = vadd.f32 %v2690, %v2815
      %v2817 = vpop.f32.mrb[0].mxu0
      %v2818 = vpop.f32.mrb[0].mxu0
      %v2819 = vadd.f32 %v2693, %v2818
      %v2820 = vpop.f32.mrb[0].mxu0
      %2821 = vdwg.mxu0
      %v2822 = vld [vmem:[%s232 + $0x48] sm:$0xe]
      %v2823 = vld [vmem:[%s695] sm:$0x3]
      %v2825 = vunpack.c.l.b16 %v2822
      %v2826 = vpack.c.b16 %v2457, %v2825
      %v2827 = vrot.slane %v2826, 1
      %v2828 = vrot.slane %v2476, 1
      %v2829 = vsel %vm700, %v2827, %v2828
      %v2830 = vrot.slane %v2477, 1
      %v2831 = vsel %vm700, %v2828, %v2830
      %v2832 = vrot.slane %v2478, 1
      %v2833 = vsel %vm700, %v2830, %v2832
      %v2834 = vrot.slane %v2479, 1
      %v2835 = vsel %vm700, %v2832, %v2834
      %v2836 = vrot.slane %v2480, 1
      %v2837 = vsel %vm700, %v2834, %v2836
      %v2838 = vrot.slane %v2481, 1
      %v2839 = vsel %vm700, %v2836, %v2838
      %v2840 = vrot.slane %v2482, 1
      %v2841 = vsel %vm700, %v2838, %v2840
      %v2842 = vrot.slane %v2483, 1
      %v2843 = vsel %vm700, %v2840, %v2842
      %v2844 = vrot.slane %v2484, 1
      %v2845 = vsel %vm700, %v2842, %v2844
      %v2847 = vsel %vm431, %v2829, 0
      %v2850 = vsel %vm431, %v2831, 0
      %v2853 = vsel %vm431, %v2833, 0
      %v2856 = vsel %vm431, %v2835, 0
      %v2859 = vsel %vm431, %v2837, 0
      %v2862 = vsel %vm431, %v2839, 0
      %v2865 = vsel %vm431, %v2841, 0
      %v2868 = vsel %vm431, %v2843, 0
      %v2871 = vsel %vm431, %v2845, 0
      %v2874 = vsel %vm459, %v2823, 0
      %2876 = vmatprep.subr.bf16.mxu0 0
      %2877 = vmatpush1.bf16.msra.mxu0 %v2874
      %2878 = vmatprep.subr.bf16.mxu0 0
      %2879 = vmatpush1.bf16.msra.mxu0 0
      %2880 = vmatprep.subr.bf16.mxu0 0
      %2881 = vmatpush1.bf16.msra.mxu0 0
      %2882 = vmatprep.subr.bf16.mxu0 0
      %2883 = vmatpush1.bf16.msra.mxu0 0
      %2884 = vmatprep.subr.bf16.mxu0 0
      %2885 = vmatpush1.bf16.msra.mxu0 0
      %2886 = vmatprep.subr.bf16.mxu0 0
      %2887 = vmatpush1.bf16.msra.mxu0 0
      %2888 = vmatprep.subr.bf16.mxu0 0
      %2889 = vmatpush1.bf16.msra.mxu0 0
      %2890 = vmatprep.subr.bf16.mxu0 0
      %2891 = vmatpush1.bf16.msra.mxu0 0
      %2892 = vmatprep.subr.bf16.mxu0 0
      %2893 = vmatpush1.bf16.msra.mxu0 0
      %2894 = vmatprep.subr.bf16.mxu0 0
      %2895 = vmatpush1.bf16.msra.mxu0 0
      %2896 = vmatprep.subr.bf16.mxu0 0
      %2897 = vmatpush1.bf16.msra.mxu0 0
      %2898 = vmatprep.subr.bf16.mxu0 0
      %2899 = vmatpush1.bf16.msra.mxu0 0
      %2900 = vmatprep.subr.bf16.mxu0 0
      %2901 = vmatpush1.bf16.msra.mxu0 0
      %2902 = vmatprep.subr.bf16.mxu0 0
      %2903 = vmatpush1.bf16.msra.mxu0 0
      %2904 = vmatprep.subr.bf16.mxu0 0
      %2905 = vmatpush1.bf16.msra.mxu0 0
      %2906 = vmatprep.subr.bf16.mxu0 0
      %2907 = vmatpush1.bf16.msra.mxu0 0
      %2908 = vmatprep.mubr.bf16.mxu0 0
      %2909 = vmatmul.mubr.bf16.gmra.mrb[0].mxu0 %v2847
      %v2910 = vpop.f32.mrb[0].mxu0
      %v2911 = vadd.f32 0.0, %v2910
      %v2912 = vpop.f32.mrb[0].mxu0
      %v2913 = vpop.f32.mrb[0].mxu0
      %v2914 = vadd.f32 0.0, %v2913
      %v2915 = vpop.f32.mrb[0].mxu0
      %2916 = vmatprep.mubr.bf16.mxu0 0
      %2917 = vmatmul.mubr.bf16.gmra.mrb[0].mxu0 %v2850
      %v2918 = vpop.f32.mrb[0].mxu0
      %v2919 = vadd.f32 0.0, %v2918
      %v2920 = vpop.f32.mrb[0].mxu0
      %v2921 = vpop.f32.mrb[0].mxu0
      %v2922 = vadd.f32 0.0, %v2921
      %v2923 = vpop.f32.mrb[0].mxu0
      %2924 = vmatprep.mubr.bf16.mxu0 0
      %2925 = vmatmul.mubr.bf16.gmra.mrb[0].mxu0 %v2853
      %v2926 = vpop.f32.mrb[0].mxu0
      %v2927 = vadd.f32 0.0, %v2926
      %v2928 = vpop.f32.mrb[0].mxu0
      %v2929 = vpop.f32.mrb[0].mxu0
      %v2930 = vadd.f32 0.0, %v2929
      %v2931 = vpop.f32.mrb[0].mxu0
      %2932 = vmatprep.mubr.bf16.mxu0 0
      %2933 = vmatmul.mubr.bf16.gmra.mrb[0].mxu0 %v2856
      %v2934 = vpop.f32.mrb[0].mxu0
      %v2935 = vadd.f32 0.0, %v2934
      %v2936 = vpop.f32.mrb[0].mxu0
      %v2937 = vpop.f32.mrb[0].mxu0
      %v2938 = vadd.f32 0.0, %v2937
      %v2939 = vpop.f32.mrb[0].mxu0
      %2940 = vmatprep.mubr.bf16.mxu0 0
      %2941 = vmatmul.mubr.bf16.gmra.mrb[0].mxu0 %v2859
      %v2942 = vpop.f32.mrb[0].mxu0
      %v2943 = vadd.f32 0.0, %v2942
      %v2944 = vpop.f32.mrb[0].mxu0
      %v2945 = vpop.f32.mrb[0].mxu0
      %v2946 = vadd.f32 0.0, %v2945
      %v2947 = vpop.f32.mrb[0].mxu0
      %2948 = vmatprep.mubr.bf16.mxu0 0
      %2949 = vmatmul.mubr.bf16.gmra.mrb[0].mxu0 %v2862
      %v2950 = vpop.f32.mrb[0].mxu0
      %v2951 = vadd.f32 0.0, %v2950
      %v2952 = vpop.f32.mrb[0].mxu0
      %v2953 = vpop.f32.mrb[0].mxu0
      %v2954 = vadd.f32 0.0, %v2953
      %v2955 = vpop.f32.mrb[0].mxu0
      %2956 = vmatprep.mubr.bf16.mxu0 0
      %2957 = vmatmul.mubr.bf16.gmra.mrb[0].mxu0 %v2865
      %v2958 = vpop.f32.mrb[0].mxu0
      %v2959 = vadd.f32 0.0, %v2958
      %v2960 = vpop.f32.mrb[0].mxu0
      %v2961 = vpop.f32.mrb[0].mxu0
      %v2962 = vadd.f32 0.0, %v2961
      %v2963 = vpop.f32.mrb[0].mxu0
      %2964 = vmatprep.mubr.bf16.mxu0 0
      %2965 = vmatmul.mubr.bf16.gmra.mrb[0].mxu0 %v2868
      %v2966 = vpop.f32.mrb[0].mxu0
      %v2967 = vadd.f32 0.0, %v2966
      %v2968 = vpop.f32.mrb[0].mxu0
      %v2969 = vpop.f32.mrb[0].mxu0
      %v2970 = vadd.f32 0.0, %v2969
      %v2971 = vpop.f32.mrb[0].mxu0
      %2972 = vmatprep.mubr.bf16.mxu0 0
      %2973 = vmatmul.mubr.bf16.gmra.mrb[0].mxu0 %v2871
      %v2974 = vpop.f32.mrb[0].mxu0
      %v2975 = vadd.f32 0.0, %v2974
      %v2976 = vpop.f32.mrb[0].mxu0
      %v2977 = vpop.f32.mrb[0].mxu0
      %v2978 = vadd.f32 0.0, %v2977
      %v2979 = vpop.f32.mrb[0].mxu0
      %2980 = vdwg.mxu0
      %v2981 = vadd.f32 %v2752, %v2911
      %v2982 = vadd.f32 %v2755, %v2914
      %v2983 = vadd.f32 %v2760, %v2919
      %v2984 = vadd.f32 %v2763, %v2922
      %v2985 = vadd.f32 %v2768, %v2927
      %v2986 = vadd.f32 %v2771, %v2930
      %v2987 = vadd.f32 %v2776, %v2935
      %v2988 = vadd.f32 %v2779, %v2938
      %v2989 = vadd.f32 %v2784, %v2943
      %v2990 = vadd.f32 %v2787, %v2946
      %v2991 = vadd.f32 %v2792, %v2951
      %v2992 = vadd.f32 %v2795, %v2954
      %v2993 = vadd.f32 %v2800, %v2959
      %v2994 = vadd.f32 %v2803, %v2962
      %v2995 = vadd.f32 %v2808, %v2967
      %v2996 = vadd.f32 %v2811, %v2970
      %v2997 = vadd.f32 %v2816, %v2975
      %v2998 = vadd.f32 %v2819, %v2978
      %v2999 = vld [vmem:[%s232 + $0x50] sm:$0xe]
      %v3000 = vld [vmem:[%s232 + $0x54] sm:$0xf]
      %v3001 = vld [vmem:[%s232 + $0x58] sm:$0xf]
      %v3002 = vld [vmem:[%s232 + $0x5c] sm:$0xf]
      %v3003 = vld [vmem:[%s232 + $0x60] sm:$0xf]
      %v3004 = vld [vmem:[%s232 + $0x64] sm:$0xf]
      %v3005 = vld [vmem:[%s232 + $0x68] sm:$0xf]
      %v3006 = vld [vmem:[%s232 + $0x6c] sm:$0xf]
      %v3007 = vld [vmem:[%s232 + $0x70] sm:$0xf]
      %v3008 = vld [vmem:[%s232 + $0x74] sm:$0xf]
      %v3009 = vld [vmem:[%s232 + $0x78] sm:$0xf]
      %v3010 = vld [vmem:[%s232 + $0x7c] sm:$0xf]
      %v3011 = vld [vmem:[%s232 + $0x80] sm:$0xf]
      %v3012 = vld [vmem:[%s232 + $0x84] sm:$0xf]
      %v3013 = vld [vmem:[%s232 + $0x88] sm:$0xf]
      %v3014 = vld [vmem:[%s232 + $0x8c] sm:$0xf]
      %v3015 = vld [vmem:[%s232 + $0x90] sm:$0xf]
      %v3016 = vld [vmem:[%s232 + $0x94] sm:$0xf]
      %v3017 = vld [vmem:[%s232 + $0x98] sm:$0x1]
      %v3018 = vld [vmem:[%s892] sm:$0x3]
      %v3038 = vunpack.c.l.b16 %v2999
      %v3039 = vunpack.c.l.b16 %v3000
      %v3040 = vunpack.c.l.b16 %v3001
      %v3041 = vunpack.c.l.b16 %v3002
      %v3042 = vunpack.c.l.b16 %v3003
      %v3043 = vunpack.c.l.b16 %v3004
      %v3044 = vunpack.c.l.b16 %v3005
      %v3045 = vunpack.c.l.b16 %v3006
      %v3046 = vunpack.c.l.b16 %v3007
      %v3047 = vunpack.c.l.b16 %v3008
      %v3048 = vunpack.c.l.b16 %v3009
      %v3049 = vunpack.c.l.b16 %v3010
      %v3050 = vunpack.c.l.b16 %v3011
      %v3051 = vunpack.c.l.b16 %v3012
      %v3052 = vunpack.c.l.b16 %v3013
      %v3053 = vunpack.c.l.b16 %v3014
      %v3054 = vunpack.c.l.b16 %v3015
      %v3055 = vunpack.c.l.b16 %v3016
      %v3056 = vunpack.c.l.b16 %v3017
      %v3057 = vpack.c.b16 %v3039, %v3038
      %v3058 = vpack.c.b16 %v3041, %v3040
      %v3059 = vpack.c.b16 %v3043, %v3042
      %v3060 = vpack.c.b16 %v3045, %v3044
      %v3061 = vpack.c.b16 %v3047, %v3046
      %v3062 = vpack.c.b16 %v3049, %v3048
      %v3063 = vpack.c.b16 %v3051, %v3050
      %v3064 = vpack.c.b16 %v3053, %v3052
      %v3065 = vpack.c.b16 %v3055, %v3054
      %v3066 = vpack.c.b16 %v3056, %v3056
      %v3067 = vrot.slane %v3057, 1
      %v3068 = vrot.slane %v3058, 1
      %v3069 = vsel %vm700, %v3067, %v3068
      %v3070 = vrot.slane %v3059, 1
      %v3071 = vsel %vm700, %v3068, %v3070
      %v3072 = vrot.slane %v3060, 1
      %v3073 = vsel %vm700, %v3070, %v3072
      %v3074 = vrot.slane %v3061, 1
      %v3075 = vsel %vm700, %v3072, %v3074
      %v3076 = vrot.slane %v3062, 1
      %v3077 = vsel %vm700, %v3074, %v3076
      %v3078 = vrot.slane %v3063, 1
      %v3079 = vsel %vm700, %v3076, %v3078
      %v3080 = vrot.slane %v3064, 1
      %v3081 = vsel %vm700, %v3078, %v3080
      %v3082 = vrot.slane %v3065, 1
      %v3083 = vsel %vm700, %v3080, %v3082
      %v3084 = vrot.slane %v3066, 1
      %v3085 = vsel %vm700, %v3082, %v3084
      %v3087 = vsel %vm431, %v3069, 0
      %v3090 = vsel %vm431, %v3071, 0
      %v3093 = vsel %vm431, %v3073, 0
      %v3096 = vsel %vm431, %v3075, 0
      %v3099 = vsel %vm431, %v3077, 0
      %v3102 = vsel %vm431, %v3079, 0
      %v3105 = vsel %vm431, %v3081, 0
      %v3108 = vsel %vm431, %v3083, 0
      %v3111 = vsel %vm431, %v3085, 0
      %v3114 = vsel %vm459, %v3018, 0
      %3116 = vmatprep.subr.bf16.mxu0 0
      %3117 = vmatpush1.bf16.msra.mxu0 %v3114
      %3118 = vmatprep.subr.bf16.mxu0 0
      %3119 = vmatpush1.bf16.msra.mxu0 0
      %3120 = vmatprep.subr.bf16.mxu0 0
      %3121 = vmatpush1.bf16.msra.mxu0 0
      %3122 = vmatprep.subr.bf16.mxu0 0
      %3123 = vmatpush1.bf16.msra.mxu0 0
      %3124 = vmatprep.subr.bf16.mxu0 0
      %3125 = vmatpush1.bf16.msra.mxu0 0
      %3126 = vmatprep.subr.bf16.mxu0 0
      %3127 = vmatpush1.bf16.msra.mxu0 0
      %3128 = vmatprep.subr.bf16.mxu0 0
      %3129 = vmatpush1.bf16.msra.mxu0 0
      %3130 = vmatprep.subr.bf16.mxu0 0
      %3131 = vmatpush1.bf16.msra.mxu0 0
      %3132 = vmatprep.subr.bf16.mxu0 0
      %3133 = vmatpush1.bf16.msra.mxu0 0
      %3134 = vmatprep.subr.bf16.mxu0 0
      %3135 = vmatpush1.bf16.msra.mxu0 0
      %3136 = vmatprep.subr.bf16.mxu0 0
      %3137 = vmatpush1.bf16.msra.mxu0 0
      %3138 = vmatprep.subr.bf16.mxu0 0
      %3139 = vmatpush1.bf16.msra.mxu0 0
      %3140 = vmatprep.subr.bf16.mxu0 0
      %3141 = vmatpush1.bf16.msra.mxu0 0
      %3142 = vmatprep.subr.bf16.mxu0 0
      %3143 = vmatpush1.bf16.msra.mxu0 0
      %3144 = vmatprep.subr.bf16.mxu0 0
      %3145 = vmatpush1.bf16.msra.mxu0 0
      %3146 = vmatprep.subr.bf16.mxu0 0
      %3147 = vmatpush1.bf16.msra.mxu0 0
      %3148 = vmatprep.mubr.bf16.mxu0 0
      %3149 = vmatmul.mubr.bf16.gmra.mrb[0].mxu0 %v3087
      %v3150 = vpop.f32.mrb[0].mxu0
      %v3151 = vadd.f32 0.0, %v3150
      %v3152 = vpop.f32.mrb[0].mxu0
      %v3153 = vpop.f32.mrb[0].mxu0
      %v3154 = vadd.f32 0.0, %v3153
      %v3155 = vpop.f32.mrb[0].mxu0
      %3156 = vmatprep.mubr.bf16.mxu0 0
      %3157 = vmatmul.mubr.bf16.gmra.mrb[0].mxu0 %v3090
      %v3158 = vpop.f32.mrb[0].mxu0
      %v3159 = vadd.f32 0.0, %v3158
      %v3160 = vpop.f32.mrb[0].mxu0
      %v3161 = vpop.f32.mrb[0].mxu0
      %v3162 = vadd.f32 0.0, %v3161
      %v3163 = vpop.f32.mrb[0].mxu0
      %3164 = vmatprep.mubr.bf16.mxu0 0
      %3165 = vmatmul.mubr.bf16.gmra.mrb[0].mxu0 %v3093
      %v3166 = vpop.f32.mrb[0].mxu0
      %v3167 = vadd.f32 0.0, %v3166
      %v3168 = vpop.f32.mrb[0].mxu0
      %v3169 = vpop.f32.mrb[0].mxu0
      %v3170 = vadd.f32 0.0, %v3169
      %v3171 = vpop.f32.mrb[0].mxu0
      %3172 = vmatprep.mubr.bf16.mxu0 0
      %3173 = vmatmul.mubr.bf16.gmra.mrb[0].mxu0 %v3096
      %v3174 = vpop.f32.mrb[0].mxu0
      %v3175 = vadd.f32 0.0, %v3174
      %v3176 = vpop.f32.mrb[0].mxu0
      %v3177 = vpop.f32.mrb[0].mxu0
      %v3178 = vadd.f32 0.0, %v3177
      %v3179 = vpop.f32.mrb[0].mxu0
      %3180 = vmatprep.mubr.bf16.mxu0 0
      %3181 = vmatmul.mubr.bf16.gmra.mrb[0].mxu0 %v3099
      %v3182 = vpop.f32.mrb[0].mxu0
      %v3183 = vadd.f32 0.0, %v3182
      %v3184 = vpop.f32.mrb[0].mxu0
      %v3185 = vpop.f32.mrb[0].mxu0
      %v3186 = vadd.f32 0.0, %v3185
      %v3187 = vpop.f32.mrb[0].mxu0
      %3188 = vmatprep.mubr.bf16.mxu0 0
      %3189 = vmatmul.mubr.bf16.gmra.mrb[0].mxu0 %v3102
      %v3190 = vpop.f32.mrb[0].mxu0
      %v3191 = vadd.f32 0.0, %v3190
      %v3192 = vpop.f32.mrb[0].mxu0
      %v3193 = vpop.f32.mrb[0].mxu0
      %v3194 = vadd.f32 0.0, %v3193
      %v3195 = vpop.f32.mrb[0].mxu0
      %3196 = vmatprep.mubr.bf16.mxu0 0
      %3197 = vmatmul.mubr.bf16.gmra.mrb[0].mxu0 %v3105
      %v3198 = vpop.f32.mrb[0].mxu0
      %v3199 = vadd.f32 0.0, %v3198
      %v3200 = vpop.f32.mrb[0].mxu0
      %v3201 = vpop.f32.mrb[0].mxu0
      %v3202 = vadd.f32 0.0, %v3201
      %v3203 = vpop.f32.mrb[0].mxu0
      %3204 = vmatprep.mubr.bf16.mxu0 0
      %3205 = vmatmul.mubr.bf16.gmra.mrb[0].mxu0 %v3108
      %v3206 = vpop.f32.mrb[0].mxu0
      %v3207 = vadd.f32 0.0, %v3206
      %v3208 = vpop.f32.mrb[0].mxu0
      %v3209 = vpop.f32.mrb[0].mxu0
      %v3210 = vadd.f32 0.0, %v3209
      %v3211 = vpop.f32.mrb[0].mxu0
      %3212 = vmatprep.mubr.bf16.mxu0 0
      %3213 = vmatmul.mubr.bf16.gmra.mrb[0].mxu0 %v3111
      %v3214 = vpop.f32.mrb[0].mxu0
      %v3215 = vadd.f32 0.0, %v3214
      %v3216 = vpop.f32.mrb[0].mxu0
      %v3217 = vpop.f32.mrb[0].mxu0
      %v3218 = vadd.f32 0.0, %v3217
      %v3219 = vpop.f32.mrb[0].mxu0
      %3220 = vdwg.mxu0
      %v3221 = vadd.f32 %v2981, %v3151
      %v3222 = vadd.f32 %v2982, %v3154
      %v3223 = vadd.f32 %v2983, %v3159
      %v3224 = vadd.f32 %v2984, %v3162
      %v3225 = vadd.f32 %v2985, %v3167
      %v3226 = vadd.f32 %v2986, %v3170
      %v3227 = vadd.f32 %v2987, %v3175
      %v3228 = vadd.f32 %v2988, %v3178
      %v3229 = vadd.f32 %v2989, %v3183
      %v3230 = vadd.f32 %v2990, %v3186
      %v3231 = vadd.f32 %v2991, %v3191
      %v3232 = vadd.f32 %v2992, %v3194
      %v3233 = vadd.f32 %v2993, %v3199
      %v3234 = vadd.f32 %v2994, %v3202
      %v3235 = vadd.f32 %v2995, %v3207
      %v3236 = vadd.f32 %v2996, %v3210
      %v3237 = vadd.f32 %v2997, %v3215
      %v3238 = vadd.f32 %v2998, %v3218
      %v3239 = vld [vmem:[%s232 + $0x98] sm:$0x3]
      %v3240 = vld [vmem:[%s1115] sm:$0x3]
      %v3242 = vunpack.c.l.b16 %v3239
      %v3243 = vpack.c.b16 %v3242, %v3242
      %v3245 = vshrl.u32 %v3057, 16
      %v3247 = vrot.slane %v3245, 1
      %v3248 = vshll.u32 %v3057, 16
      %v3250 = vrot.slane %v3248, 2
      %v3251 = vor.u32 %v3247, %v3250
      %v3253 = vshrl.u32 %v3058, 16
      %v3255 = vrot.slane %v3253, 1
      %v3256 = vshll.u32 %v3058, 16
      %v3258 = vrot.slane %v3256, 2
      %v3259 = vor.u32 %v3255, %v3258
      %v3260 = vsel %vm1120, %v3251, %v3259
      %v3262 = vshrl.u32 %v3059, 16
      %v3264 = vrot.slane %v3262, 1
      %v3265 = vshll.u32 %v3059, 16
      %v3267 = vrot.slane %v3265, 2
      %v3268 = vor.u32 %v3264, %v3267
      %v3269 = vsel %vm1120, %v3259, %v3268
      %v3271 = vshrl.u32 %v3060, 16
      %v3273 = vrot.slane %v3271, 1
      %v3274 = vshll.u32 %v3060, 16
      %v3276 = vrot.slane %v3274, 2
      %v3277 = vor.u32 %v3273, %v3276
      %v3278 = vsel %vm1120, %v3268, %v3277
      %v3280 = vshrl.u32 %v3061, 16
      %v3282 = vrot.slane %v3280, 1
      %v3283 = vshll.u32 %v3061, 16
      %v3285 = vrot.slane %v3283, 2
      %v3286 = vor.u32 %v3282, %v3285
      %v3287 = vsel %vm1120, %v3277, %v3286
      %v3289 = vshrl.u32 %v3062, 16
      %v3291 = vrot.slane %v3289, 1
      %v3292 = vshll.u32 %v3062, 16
      %v3294 = vrot.slane %v3292, 2
      %v3295 = vor.u32 %v3291, %v3294
      %v3296 = vsel %vm1120, %v3286, %v3295
      %v3298 = vshrl.u32 %v3063, 16
      %v3300 = vrot.slane %v3298, 1
      %v3301 = vshll.u32 %v3063, 16
      %v3303 = vrot.slane %v3301, 2
      %v3304 = vor.u32 %v3300, %v3303
      %v3305 = vsel %vm1120, %v3295, %v3304
      %v3307 = vshrl.u32 %v3064, 16
      %v3309 = vrot.slane %v3307, 1
      %v3310 = vshll.u32 %v3064, 16
      %v3312 = vrot.slane %v3310, 2
      %v3313 = vor.u32 %v3309, %v3312
      %v3314 = vsel %vm1120, %v3304, %v3313
      %v3316 = vshrl.u32 %v3065, 16
      %v3318 = vrot.slane %v3316, 1
      %v3319 = vshll.u32 %v3065, 16
      %v3321 = vrot.slane %v3319, 2
      %v3322 = vor.u32 %v3318, %v3321
      %v3323 = vsel %vm1120, %v3313, %v3322
      %v3325 = vshrl.u32 %v3243, 16
      %v3327 = vrot.slane %v3325, 1
      %v3328 = vshll.u32 %v3243, 16
      %v3330 = vrot.slane %v3328, 2
      %v3331 = vor.u32 %v3327, %v3330
      %v3332 = vsel %vm1120, %v3322, %v3331
      %v3334 = vsel %vm431, %v3260, 0
      %v3337 = vsel %vm431, %v3269, 0
      %v3340 = vsel %vm431, %v3278, 0
      %v3343 = vsel %vm431, %v3287, 0
      %v3346 = vsel %vm431, %v3296, 0
      %v3349 = vsel %vm431, %v3305, 0
      %v3352 = vsel %vm431, %v3314, 0
      %v3355 = vsel %vm431, %v3323, 0
      %v3358 = vsel %vm431, %v3332, 0
      %v3361 = vsel %vm459, %v3240, 0
      %3363 = vmatprep.subr.bf16.mxu0 0
      %3364 = vmatpush1.bf16.msra.mxu0 %v3361
      %3365 = vmatprep.subr.bf16.mxu0 0
      %3366 = vmatpush1.bf16.msra.mxu0 0
      %3367 = vmatprep.subr.bf16.mxu0 0
      %3368 = vmatpush1.bf16.msra.mxu0 0
      %3369 = vmatprep.subr.bf16.mxu0 0
      %3370 = vmatpush1.bf16.msra.mxu0 0
      %3371 = vmatprep.subr.bf16.mxu0 0
      %3372 = vmatpush1.bf16.msra.mxu0 0
      %3373 = vmatprep.subr.bf16.mxu0 0
      %3374 = vmatpush1.bf16.msra.mxu0 0
      %3375 = vmatprep.subr.bf16.mxu0 0
      %3376 = vmatpush1.bf16.msra.mxu0 0
      %3377 = vmatprep.subr.bf16.mxu0 0
      %3378 = vmatpush1.bf16.msra.mxu0 0
      %3379 = vmatprep.subr.bf16.mxu0 0
      %3380 = vmatpush1.bf16.msra.mxu0 0
      %3381 = vmatprep.subr.bf16.mxu0 0
      %3382 = vmatpush1.bf16.msra.mxu0 0
      %3383 = vmatprep.subr.bf16.mxu0 0
      %3384 = vmatpush1.bf16.msra.mxu0 0
      %3385 = vmatprep.subr.bf16.mxu0 0
      %3386 = vmatpush1.bf16.msra.mxu0 0
      %3387 = vmatprep.subr.bf16.mxu0 0
      %3388 = vmatpush1.bf16.msra.mxu0 0
      %3389 = vmatprep.subr.bf16.mxu0 0
      %3390 = vmatpush1.bf16.msra.mxu0 0
      %3391 = vmatprep.subr.bf16.mxu0 0
      %3392 = vmatpush1.bf16.msra.mxu0 0
      %3393 = vmatprep.subr.bf16.mxu0 0
      %3394 = vmatpush1.bf16.msra.mxu0 0
      %3395 = vmatprep.mubr.bf16.mxu0 0
      %3396 = vmatmul.mubr.bf16.gmra.mrb[0].mxu0 %v3334
      %v3397 = vpop.f32.mrb[0].mxu0
      %v3398 = vadd.f32 0.0, %v3397
      %v3399 = vpop.f32.mrb[0].mxu0
      %v3400 = vpop.f32.mrb[0].mxu0
      %v3401 = vadd.f32 0.0, %v3400
      %v3402 = vpop.f32.mrb[0].mxu0
      %3403 = vmatprep.mubr.bf16.mxu0 0
      %3404 = vmatmul.mubr.bf16.gmra.mrb[0].mxu0 %v3337
      %v3405 = vpop.f32.mrb[0].mxu0
      %v3406 = vadd.f32 0.0, %v3405
      %v3407 = vpop.f32.mrb[0].mxu0
      %v3408 = vpop.f32.mrb[0].mxu0
      %v3409 = vadd.f32 0.0, %v3408
      %v3410 = vpop.f32.mrb[0].mxu0
      %3411 = vmatprep.mubr.bf16.mxu0 0
      %3412 = vmatmul.mubr.bf16.gmra.mrb[0].mxu0 %v3340
      %v3413 = vpop.f32.mrb[0].mxu0
      %v3414 = vadd.f32 0.0, %v3413
      %v3415 = vpop.f32.mrb[0].mxu0
      %v3416 = vpop.f32.mrb[0].mxu0
      %v3417 = vadd.f32 0.0, %v3416
      %v3418 = vpop.f32.mrb[0].mxu0
      %3419 = vmatprep.mubr.bf16.mxu0 0
      %3420 = vmatmul.mubr.bf16.gmra.mrb[0].mxu0 %v3343
      %v3421 = vpop.f32.mrb[0].mxu0
      %v3422 = vadd.f32 0.0, %v3421
      %v3423 = vpop.f32.mrb[0].mxu0
      %v3424 = vpop.f32.mrb[0].mxu0
      %v3425 = vadd.f32 0.0, %v3424
      %v3426 = vpop.f32.mrb[0].mxu0
      %3427 = vmatprep.mubr.bf16.mxu0 0
      %3428 = vmatmul.mubr.bf16.gmra.mrb[0].mxu0 %v3346
      %v3429 = vpop.f32.mrb[0].mxu0
      %v3430 = vadd.f32 0.0, %v3429
      %v3431 = vpop.f32.mrb[0].mxu0
      %v3432 = vpop.f32.mrb[0].mxu0
      %v3433 = vadd.f32 0.0, %v3432
      %v3434 = vpop.f32.mrb[0].mxu0
      %3435 = vmatprep.mubr.bf16.mxu0 0
      %3436 = vmatmul.mubr.bf16.gmra.mrb[0].mxu0 %v3349
      %v3437 = vpop.f32.mrb[0].mxu0
      %v3438 = vadd.f32 0.0, %v3437
      %v3439 = vpop.f32.mrb[0].mxu0
      %v3440 = vpop.f32.mrb[0].mxu0
      %v3441 = vadd.f32 0.0, %v3440
      %v3442 = vpop.f32.mrb[0].mxu0
      %3443 = vmatprep.mubr.bf16.mxu0 0
      %3444 = vmatmul.mubr.bf16.gmra.mrb[0].mxu0 %v3352
      %v3445 = vpop.f32.mrb[0].mxu0
      %v3446 = vadd.f32 0.0, %v3445
      %v3447 = vpop.f32.mrb[0].mxu0
      %v3448 = vpop.f32.mrb[0].mxu0
      %v3449 = vadd.f32 0.0, %v3448
      %v3450 = vpop.f32.mrb[0].mxu0
      %3451 = vmatprep.mubr.bf16.mxu0 0
      %3452 = vmatmul.mubr.bf16.gmra.mrb[0].mxu0 %v3355
      %v3453 = vpop.f32.mrb[0].mxu0
      %v3454 = vadd.f32 0.0, %v3453
      %v3455 = vpop.f32.mrb[0].mxu0
      %v3456 = vpop.f32.mrb[0].mxu0
      %v3457 = vadd.f32 0.0, %v3456
      %v3458 = vpop.f32.mrb[0].mxu0
      %3459 = vmatprep.mubr.bf16.mxu0 0
      %3460 = vmatmul.mubr.bf16.gmra.mrb[0].mxu0 %v3358
      %v3461 = vpop.f32.mrb[0].mxu0
      %v3462 = vadd.f32 0.0, %v3461
      %v3463 = vpop.f32.mrb[0].mxu0
      %v3464 = vpop.f32.mrb[0].mxu0
      %v3465 = vadd.f32 0.0, %v3464
      %v3466 = vpop.f32.mrb[0].mxu0
      %3467 = vdwg.mxu0
      %v3468 = vadd.f32 %v3221, %v3398
      %v3469 = vadd.f32 %v3222, %v3401
      %v3470 = vadd.f32 %v3223, %v3406
      %v3471 = vadd.f32 %v3224, %v3409
      %v3472 = vadd.f32 %v3225, %v3414
      %v3473 = vadd.f32 %v3226, %v3417
      %v3474 = vadd.f32 %v3227, %v3422
      %v3475 = vadd.f32 %v3228, %v3425
      %v3476 = vadd.f32 %v3229, %v3430
      %v3477 = vadd.f32 %v3230, %v3433
      %v3478 = vadd.f32 %v3231, %v3438
      %v3479 = vadd.f32 %v3232, %v3441
      %v3480 = vadd.f32 %v3233, %v3446
      %v3481 = vadd.f32 %v3234, %v3449
      %v3482 = vadd.f32 %v3235, %v3454
      %v3483 = vadd.f32 %v3236, %v3457
      %v3484 = vadd.f32 %v3237, %v3462
      %v3485 = vadd.f32 %v3238, %v3465
      %v3486 = vld [vmem:[%s232 + $0x50] sm:$0xc]
      %v3487 = vld [vmem:[%s1364] sm:$0x3]
      %v3489 = vunpack.c.l.b16 %v3486
      %v3490 = vpack.c.b16 %v3039, %v3489
      %v3491 = vrot.slane %v3490, 2
      %v3492 = vrot.slane %v3058, 2
      %v3493 = vsel %vm1369, %v3491, %v3492
      %v3494 = vrot.slane %v3059, 2
      %v3495 = vsel %vm1369, %v3492, %v3494
      %v3496 = vrot.slane %v3060, 2
      %v3497 = vsel %vm1369, %v3494, %v3496
      %v3498 = vrot.slane %v3061, 2
      %v3499 = vsel %vm1369, %v3496, %v3498
      %v3500 = vrot.slane %v3062, 2
      %v3501 = vsel %vm1369, %v3498, %v3500
      %v3502 = vrot.slane %v3063, 2
      %v3503 = vsel %vm1369, %v3500, %v3502
      %v3504 = vrot.slane %v3064, 2
      %v3505 = vsel %vm1369, %v3502, %v3504
      %v3506 = vrot.slane %v3065, 2
      %v3507 = vsel %vm1369, %v3504, %v3506
      %v3508 = vrot.slane %v3243, 2
      %v3509 = vsel %vm1369, %v3506, %v3508
      %v3511 = vsel %vm431, %v3493, 0
      %v3514 = vsel %vm431, %v3495, 0
      %v3517 = vsel %vm431, %v3497, 0
      %v3520 = vsel %vm431, %v3499, 0
      %v3523 = vsel %vm431, %v3501, 0
      %v3526 = vsel %vm431, %v3503, 0
      %v3529 = vsel %vm431, %v3505, 0
      %v3532 = vsel %vm431, %v3507, 0
      %v3535 = vsel %vm431, %v3509, 0
      %v3538 = vsel %vm459, %v3487, 0
      %3540 = vmatprep.subr.bf16.mxu0 0
      %3541 = vmatpush1.bf16.msra.mxu0 %v3538
      %3542 = vmatprep.subr.bf16.mxu0 0
      %3543 = vmatpush1.bf16.msra.mxu0 0
      %3544 = vmatprep.subr.bf16.mxu0 0
      %3545 = vmatpush1.bf16.msra.mxu0 0
      %3546 = vmatprep.subr.bf16.mxu0 0
      %3547 = vmatpush1.bf16.msra.mxu0 0
      %3548 = vmatprep.subr.bf16.mxu0 0
      %3549 = vmatpush1.bf16.msra.mxu0 0
      %3550 = vmatprep.subr.bf16.mxu0 0
      %3551 = vmatpush1.bf16.msra.mxu0 0
      %3552 = vmatprep.subr.bf16.mxu0 0
      %3553 = vmatpush1.bf16.msra.mxu0 0
      %3554 = vmatprep.subr.bf16.mxu0 0
      %3555 = vmatpush1.bf16.msra.mxu0 0
      %3556 = vmatprep.subr.bf16.mxu0 0
      %3557 = vmatpush1.bf16.msra.mxu0 0
      %3558 = vmatprep.subr.bf16.mxu0 0
      %3559 = vmatpush1.bf16.msra.mxu0 0
      %3560 = vmatprep.subr.bf16.mxu0 0
      %3561 = vmatpush1.bf16.msra.mxu0 0
      %3562 = vmatprep.subr.bf16.mxu0 0
      %3563 = vmatpush1.bf16.msra.mxu0 0
      %3564 = vmatprep.subr.bf16.mxu0 0
      %3565 = vmatpush1.bf16.msra.mxu0 0
      %3566 = vmatprep.subr.bf16.mxu0 0
      %3567 = vmatpush1.bf16.msra.mxu0 0
      %3568 = vmatprep.subr.bf16.mxu0 0
      %3569 = vmatpush1.bf16.msra.mxu0 0
      %3570 = vmatprep.subr.bf16.mxu0 0
      %3571 = vmatpush1.bf16.msra.mxu0 0
      %3572 = vmatprep.mubr.bf16.mxu0 0
      %3573 = vmatmul.mubr.bf16.gmra.mrb[0].mxu0 %v3511
      %v3574 = vpop.f32.mrb[0].mxu0
      %v3575 = vadd.f32 0.0, %v3574
      %v3576 = vpop.f32.mrb[0].mxu0
      %v3577 = vpop.f32.mrb[0].mxu0
      %v3578 = vadd.f32 0.0, %v3577
      %v3579 = vpop.f32.mrb[0].mxu0
      %3580 = vmatprep.mubr.bf16.mxu0 0
      %3581 = vmatmul.mubr.bf16.gmra.mrb[0].mxu0 %v3514
      %v3582 = vpop.f32.mrb[0].mxu0
      %v3583 = vadd.f32 0.0, %v3582
      %v3584 = vpop.f32.mrb[0].mxu0
      %v3585 = vpop.f32.mrb[0].mxu0
      %v3586 = vadd.f32 0.0, %v3585
      %v3587 = vpop.f32.mrb[0].mxu0
      %3588 = vmatprep.mubr.bf16.mxu0 0
      %3589 = vmatmul.mubr.bf16.gmra.mrb[0].mxu0 %v3517
      %v3590 = vpop.f32.mrb[0].mxu0
      %v3591 = vadd.f32 0.0, %v3590
      %v3592 = vpop.f32.mrb[0].mxu0
      %v3593 = vpop.f32.mrb[0].mxu0
      %v3594 = vadd.f32 0.0, %v3593
      %v3595 = vpop.f32.mrb[0].mxu0
      %3596 = vmatprep.mubr.bf16.mxu0 0
      %3597 = vmatmul.mubr.bf16.gmra.mrb[0].mxu0 %v3520
      %v3598 = vpop.f32.mrb[0].mxu0
      %v3599 = vadd.f32 0.0, %v3598
      %v3600 = vpop.f32.mrb[0].mxu0
      %v3601 = vpop.f32.mrb[0].mxu0
      %v3602 = vadd.f32 0.0, %v3601
      %v3603 = vpop.f32.mrb[0].mxu0
      %3604 = vmatprep.mubr.bf16.mxu0 0
      %3605 = vmatmul.mubr.bf16.gmra.mrb[0].mxu0 %v3523
      %v3606 = vpop.f32.mrb[0].mxu0
      %v3607 = vadd.f32 0.0, %v3606
      %v3608 = vpop.f32.mrb[0].mxu0
      %v3609 = vpop.f32.mrb[0].mxu0
      %v3610 = vadd.f32 0.0, %v3609
      %v3611 = vpop.f32.mrb[0].mxu0
      %3612 = vmatprep.mubr.bf16.mxu0 0
      %3613 = vmatmul.mubr.bf16.gmra.mrb[0].mxu0 %v3526
      %v3614 = vpop.f32.mrb[0].mxu0
      %v3615 = vadd.f32 0.0, %v3614
      %v3616 = vpop.f32.mrb[0].mxu0
      %v3617 = vpop.f32.mrb[0].mxu0
      %v3618 = vadd.f32 0.0, %v3617
      %v3619 = vpop.f32.mrb[0].mxu0
      %3620 = vmatprep.mubr.bf16.mxu0 0
      %3621 = vmatmul.mubr.bf16.gmra.mrb[0].mxu0 %v3529
      %v3622 = vpop.f32.mrb[0].mxu0
      %v3623 = vadd.f32 0.0, %v3622
      %v3624 = vpop.f32.mrb[0].mxu0
      %v3625 = vpop.f32.mrb[0].mxu0
      %v3626 = vadd.f32 0.0, %v3625
      %v3627 = vpop.f32.mrb[0].mxu0
      %3628 = vmatprep.mubr.bf16.mxu0 0
      %3629 = vmatmul.mubr.bf16.gmra.mrb[0].mxu0 %v3532
      %v3630 = vpop.f32.mrb[0].mxu0
      %v3631 = vadd.f32 0.0, %v3630
      %v3632 = vpop.f32.mrb[0].mxu0
      %v3633 = vpop.f32.mrb[0].mxu0
      %v3634 = vadd.f32 0.0, %v3633
      %v3635 = vpop.f32.mrb[0].mxu0
      %3636 = vmatprep.mubr.bf16.mxu0 0
      %3637 = vmatmul.mubr.bf16.gmra.mrb[0].mxu0 %v3535
      %v3638 = vpop.f32.mrb[0].mxu0
      %v3639 = vadd.f32 0.0, %v3638
      %v3640 = vpop.f32.mrb[0].mxu0
      %v3641 = vpop.f32.mrb[0].mxu0
      %v3642 = vadd.f32 0.0, %v3641
      %v3643 = vpop.f32.mrb[0].mxu0
      %3644 = vdwg.mxu0
      %v3645 = vadd.f32 %v3468, %v3575
      %v3646 = vadd.f32 %v3469, %v3578
      %v3647 = vadd.f32 %v3470, %v3583
      %v3648 = vadd.f32 %v3471, %v3586
      %v3649 = vadd.f32 %v3472, %v3591
      %v3650 = vadd.f32 %v3473, %v3594
      %v3651 = vadd.f32 %v3474, %v3599
      %v3652 = vadd.f32 %v3475, %v3602
      %v3653 = vadd.f32 %v3476, %v3607
      %v3654 = vadd.f32 %v3477, %v3610
      %v3655 = vadd.f32 %v3478, %v3615
      %v3656 = vadd.f32 %v3479, %v3618
      %v3657 = vadd.f32 %v3480, %v3623
      %v3658 = vadd.f32 %v3481, %v3626
      %v3659 = vadd.f32 %v3482, %v3631
      %v3660 = vadd.f32 %v3483, %v3634
      %v3661 = vadd.f32 %v3484, %v3639
      %v3662 = vadd.f32 %v3485, %v3642
      %v3663 = vld [vmem:[%s232 + $0x58] sm:$0xc]
      %v3664 = vld [vmem:[%s232 + $0x5c] sm:$0xf]
      %v3665 = vld [vmem:[%s232 + $0x60] sm:$0xf]
      %v3666 = vld [vmem:[%s232 + $0x64] sm:$0xf]
      %v3667 = vld [vmem:[%s232 + $0x68] sm:$0xf]
      %v3668 = vld [vmem:[%s232 + $0x6c] sm:$0xf]
      %v3669 = vld [vmem:[%s232 + $0x70] sm:$0xf]
      %v3670 = vld [vmem:[%s232 + $0x74] sm:$0xf]
      %v3671 = vld [vmem:[%s232 + $0x78] sm:$0xf]
      %v3672 = vld [vmem:[%s232 + $0x7c] sm:$0xf]
      %v3673 = vld [vmem:[%s232 + $0x80] sm:$0xf]
      %v3674 = vld [vmem:[%s232 + $0x84] sm:$0xf]
      %v3675 = vld [vmem:[%s232 + $0x88] sm:$0xf]
      %v3676 = vld [vmem:[%s232 + $0x8c] sm:$0xf]
      %v3677 = vld [vmem:[%s232 + $0x90] sm:$0xf]
      %v3678 = vld [vmem:[%s232 + $0x94] sm:$0xf]
      %v3679 = vld [vmem:[%s232 + $0x98] sm:$0xf]
      %v3680 = vld [vmem:[%s232 + $0x9c] sm:$0xf]
      %v3681 = vld [vmem:[%s232 + $0xa0] sm:$0x3]
      %v3682 = vld [vmem:[%s1561] sm:$0x3]
      %v3702 = vunpack.c.l.b16 %v3663
      %v3703 = vunpack.c.l.b16 %v3664
      %v3704 = vunpack.c.l.b16 %v3665
      %v3705 = vunpack.c.l.b16 %v3666
      %v3706 = vunpack.c.l.b16 %v3667
      %v3707 = vunpack.c.l.b16 %v3668
      %v3708 = vunpack.c.l.b16 %v3669
      %v3709 = vunpack.c.l.b16 %v3670
      %v3710 = vunpack.c.l.b16 %v3671
      %v3711 = vunpack.c.l.b16 %v3672
      %v3712 = vunpack.c.l.b16 %v3673
      %v3713 = vunpack.c.l.b16 %v3674
      %v3714 = vunpack.c.l.b16 %v3675
      %v3715 = vunpack.c.l.b16 %v3676
      %v3716 = vunpack.c.l.b16 %v3677
      %v3717 = vunpack.c.l.b16 %v3678
      %v3718 = vunpack.c.l.b16 %v3679
      %v3719 = vunpack.c.l.b16 %v3680
      %v3720 = vunpack.c.l.b16 %v3681
      %v3721 = vpack.c.b16 %v3703, %v3702
      %v3722 = vpack.c.b16 %v3705, %v3704
      %v3723 = vpack.c.b16 %v3707, %v3706
      %v3724 = vpack.c.b16 %v3709, %v3708
      %v3725 = vpack.c.b16 %v3711, %v3710
      %v3726 = vpack.c.b16 %v3713, %v3712
      %v3727 = vpack.c.b16 %v3715, %v3714
      %v3728 = vpack.c.b16 %v3717, %v3716
      %v3729 = vpack.c.b16 %v3719, %v3718
      %v3730 = vpack.c.b16 %v3720, %v3720
      %v3731 = vrot.slane %v3721, 2
      %v3732 = vrot.slane %v3722, 2
      %v3733 = vsel %vm1369, %v3731, %v3732
      %v3734 = vrot.slane %v3723, 2
      %v3735 = vsel %vm1369, %v3732, %v3734
      %v3736 = vrot.slane %v3724, 2
      %v3737 = vsel %vm1369, %v3734, %v3736
      %v3738 = vrot.slane %v3725, 2
      %v3739 = vsel %vm1369, %v3736, %v3738
      %v3740 = vrot.slane %v3726, 2
      %v3741 = vsel %vm1369, %v3738, %v3740
      %v3742 = vrot.slane %v3727, 2
      %v3743 = vsel %vm1369, %v3740, %v3742
      %v3744 = vrot.slane %v3728, 2
      %v3745 = vsel %vm1369, %v3742, %v3744
      %v3746 = vrot.slane %v3729, 2
      %v3747 = vsel %vm1369, %v3744, %v3746
      %v3748 = vrot.slane %v3730, 2
      %v3749 = vsel %vm1369, %v3746, %v3748
      %v3751 = vsel %vm431, %v3733, 0
      %v3754 = vsel %vm431, %v3735, 0
      %v3757 = vsel %vm431, %v3737, 0
      %v3760 = vsel %vm431, %v3739, 0
      %v3763 = vsel %vm431, %v3741, 0
      %v3766 = vsel %vm431, %v3743, 0
      %v3769 = vsel %vm431, %v3745, 0
      %v3772 = vsel %vm431, %v3747, 0
      %v3775 = vsel %vm431, %v3749, 0
      %v3778 = vsel %vm459, %v3682, 0
      %3780 = vmatprep.subr.bf16.mxu0 0
      %3781 = vmatpush1.bf16.msra.mxu0 %v3778
      %3782 = vmatprep.subr.bf16.mxu0 0
      %3783 = vmatpush1.bf16.msra.mxu0 0
      %3784 = vmatprep.subr.bf16.mxu0 0
      %3785 = vmatpush1.bf16.msra.mxu0 0
      %3786 = vmatprep.subr.bf16.mxu0 0
      %3787 = vmatpush1.bf16.msra.mxu0 0
      %3788 = vmatprep.subr.bf16.mxu0 0
      %3789 = vmatpush1.bf16.msra.mxu0 0
      %3790 = vmatprep.subr.bf16.mxu0 0
      %3791 = vmatpush1.bf16.msra.mxu0 0
      %3792 = vmatprep.subr.bf16.mxu0 0
      %3793 = vmatpush1.bf16.msra.mxu0 0
      %3794 = vmatprep.subr.bf16.mxu0 0
      %3795 = vmatpush1.bf16.msra.mxu0 0
      %3796 = vmatprep.subr.bf16.mxu0 0
      %3797 = vmatpush1.bf16.msra.mxu0 0
      %3798 = vmatprep.subr.bf16.mxu0 0
      %3799 = vmatpush1.bf16.msra.mxu0 0
      %3800 = vmatprep.subr.bf16.mxu0 0
      %3801 = vmatpush1.bf16.msra.mxu0 0
      %3802 = vmatprep.subr.bf16.mxu0 0
      %3803 = vmatpush1.bf16.msra.mxu0 0
      %3804 = vmatprep.subr.bf16.mxu0 0
      %3805 = vmatpush1.bf16.msra.mxu0 0
      %3806 = vmatprep.subr.bf16.mxu0 0
      %3807 = vmatpush1.bf16.msra.mxu0 0
      %3808 = vmatprep.subr.bf16.mxu0 0
      %3809 = vmatpush1.bf16.msra.mxu0 0
      %3810 = vmatprep.subr.bf16.mxu0 0
      %3811 = vmatpush1.bf16.msra.mxu0 0
      %3812 = vmatprep.mubr.bf16.mxu0 0
      %3813 = vmatmul.mubr.bf16.gmra.mrb[0].mxu0 %v3751
      %v3814 = vpop.f32.mrb[0].mxu0
      %v3815 = vadd.f32 0.0, %v3814
      %v3816 = vpop.f32.mrb[0].mxu0
      %v3817 = vpop.f32.mrb[0].mxu0
      %v3818 = vadd.f32 0.0, %v3817
      %v3819 = vpop.f32.mrb[0].mxu0
      %3820 = vmatprep.mubr.bf16.mxu0 0
      %3821 = vmatmul.mubr.bf16.gmra.mrb[0].mxu0 %v3754
      %v3822 = vpop.f32.mrb[0].mxu0
      %v3823 = vadd.f32 0.0, %v3822
      %v3824 = vpop.f32.mrb[0].mxu0
      %v3825 = vpop.f32.mrb[0].mxu0
      %v3826 = vadd.f32 0.0, %v3825
      %v3827 = vpop.f32.mrb[0].mxu0
      %3828 = vmatprep.mubr.bf16.mxu0 0
      %3829 = vmatmul.mubr.bf16.gmra.mrb[0].mxu0 %v3757
      %v3830 = vpop.f32.mrb[0].mxu0
      %v3831 = vadd.f32 0.0, %v3830
      %v3832 = vpop.f32.mrb[0].mxu0
      %v3833 = vpop.f32.mrb[0].mxu0
      %v3834 = vadd.f32 0.0, %v3833
      %v3835 = vpop.f32.mrb[0].mxu0
      %3836 = vmatprep.mubr.bf16.mxu0 0
      %3837 = vmatmul.mubr.bf16.gmra.mrb[0].mxu0 %v3760
      %v3838 = vpop.f32.mrb[0].mxu0
      %v3839 = vadd.f32 0.0, %v3838
      %v3840 = vpop.f32.mrb[0].mxu0
      %v3841 = vpop.f32.mrb[0].mxu0
      %v3842 = vadd.f32 0.0, %v3841
      %v3843 = vpop.f32.mrb[0].mxu0
      %3844 = vmatprep.mubr.bf16.mxu0 0
      %3845 = vmatmul.mubr.bf16.gmra.mrb[0].mxu0 %v3763
      %v3846 = vpop.f32.mrb[0].mxu0
      %v3847 = vadd.f32 0.0, %v3846
      %v3848 = vpop.f32.mrb[0].mxu0
      %v3849 = vpop.f32.mrb[0].mxu0
      %v3850 = vadd.f32 0.0, %v3849
      %v3851 = vpop.f32.mrb[0].mxu0
      %3852 = vmatprep.mubr.bf16.mxu0 0
      %3853 = vmatmul.mubr.bf16.gmra.mrb[0].mxu0 %v3766
      %v3854 = vpop.f32.mrb[0].mxu0
      %v3855 = vadd.f32 0.0, %v3854
      %v3856 = vpop.f32.mrb[0].mxu0
      %v3857 = vpop.f32.mrb[0].mxu0
      %v3858 = vadd.f32 0.0, %v3857
      %v3859 = vpop.f32.mrb[0].mxu0
      %3860 = vmatprep.mubr.bf16.mxu0 0
      %3861 = vmatmul.mubr.bf16.gmra.mrb[0].mxu0 %v3769
      %v3862 = vpop.f32.mrb[0].mxu0
      %v3863 = vadd.f32 0.0, %v3862
      %v3864 = vpop.f32.mrb[0].mxu0
      %v3865 = vpop.f32.mrb[0].mxu0
      %v3866 = vadd.f32 0.0, %v3865
      %v3867 = vpop.f32.mrb[0].mxu0
      %3868 = vmatprep.mubr.bf16.mxu0 0
      %3869 = vmatmul.mubr.bf16.gmra.mrb[0].mxu0 %v3772
      %v3870 = vpop.f32.mrb[0].mxu0
      %v3871 = vadd.f32 0.0, %v3870
      %v3872 = vpop.f32.mrb[0].mxu0
      %v3873 = vpop.f32.mrb[0].mxu0
      %v3874 = vadd.f32 0.0, %v3873
      %v3875 = vpop.f32.mrb[0].mxu0
      %3876 = vmatprep.mubr.bf16.mxu0 0
      %3877 = vmatmul.mubr.bf16.gmra.mrb[0].mxu0 %v3775
      %v3878 = vpop.f32.mrb[0].mxu0
      %v3879 = vadd.f32 0.0, %v3878
      %v3880 = vpop.f32.mrb[0].mxu0
      %v3881 = vpop.f32.mrb[0].mxu0
      %v3882 = vadd.f32 0.0, %v3881
      %v3883 = vpop.f32.mrb[0].mxu0
      %3884 = vdwg.mxu0
      %v3885 = vadd.f32 %v3645, %v3815
      %v3886 = vadd.f32 %v3646, %v3818
      %v3887 = vadd.f32 %v3647, %v3823
      %v3888 = vadd.f32 %v3648, %v3826
      %v3889 = vadd.f32 %v3649, %v3831
      %v3890 = vadd.f32 %v3650, %v3834
      %v3891 = vadd.f32 %v3651, %v3839
      %v3892 = vadd.f32 %v3652, %v3842
      %v3893 = vadd.f32 %v3653, %v3847
      %v3894 = vadd.f32 %v3654, %v3850
      %v3895 = vadd.f32 %v3655, %v3855
      %v3896 = vadd.f32 %v3656, %v3858
      %v3897 = vadd.f32 %v3657, %v3863
      %v3898 = vadd.f32 %v3658, %v3866
      %v3899 = vadd.f32 %v3659, %v3871
      %v3900 = vadd.f32 %v3660, %v3874
      %v3901 = vadd.f32 %v3661, %v3879
      %v3902 = vadd.f32 %v3662, %v3882
      %v3903 = vld [vmem:[%s232 + $0xa0] sm:$0x7]
      %v3904 = vld [vmem:[%s1784] sm:$0x3]
      %v3906 = vunpack.c.l.b16 %v3903
      %v3907 = vpack.c.b16 %v3906, %v3906
      %v3909 = vshrl.u32 %v3721, 16
      %v3911 = vrot.slane %v3909, 2
      %v3912 = vshll.u32 %v3721, 16
      %v3914 = vrot.slane %v3912, 3
      %v3915 = vor.u32 %v3911, %v3914
      %v3917 = vshrl.u32 %v3722, 16
      %v3919 = vrot.slane %v3917, 2
      %v3920 = vshll.u32 %v3722, 16
      %v3922 = vrot.slane %v3920, 3
      %v3923 = vor.u32 %v3919, %v3922
      %v3924 = vsel %vm1789, %v3915, %v3923
      %v3926 = vshrl.u32 %v3723, 16
      %v3928 = vrot.slane %v3926, 2
      %v3929 = vshll.u32 %v3723, 16
      %v3931 = vrot.slane %v3929, 3
      %v3932 = vor.u32 %v3928, %v3931
      %v3933 = vsel %vm1789, %v3923, %v3932
      %v3935 = vshrl.u32 %v3724, 16
      %v3937 = vrot.slane %v3935, 2
      %v3938 = vshll.u32 %v3724, 16
      %v3940 = vrot.slane %v3938, 3
      %v3941 = vor.u32 %v3937, %v3940
      %v3942 = vsel %vm1789, %v3932, %v3941
      %v3944 = vshrl.u32 %v3725, 16
      %v3946 = vrot.slane %v3944, 2
      %v3947 = vshll.u32 %v3725, 16
      %v3949 = vrot.slane %v3947, 3
      %v3950 = vor.u32 %v3946, %v3949
      %v3951 = vsel %vm1789, %v3941, %v3950
      %v3953 = vshrl.u32 %v3726, 16
      %v3955 = vrot.slane %v3953, 2
      %v3956 = vshll.u32 %v3726, 16
      %v3958 = vrot.slane %v3956, 3
      %v3959 = vor.u32 %v3955, %v3958
      %v3960 = vsel %vm1789, %v3950, %v3959
      %v3962 = vshrl.u32 %v3727, 16
      %v3964 = vrot.slane %v3962, 2
      %v3965 = vshll.u32 %v3727, 16
      %v3967 = vrot.slane %v3965, 3
      %v3968 = vor.u32 %v3964, %v3967
      %v3969 = vsel %vm1789, %v3959, %v3968
      %v3971 = vshrl.u32 %v3728, 16
      %v3973 = vrot.slane %v3971, 2
      %v3974 = vshll.u32 %v3728, 16
      %v3976 = vrot.slane %v3974, 3
      %v3977 = vor.u32 %v3973, %v3976
      %v3978 = vsel %vm1789, %v3968, %v3977
      %v3980 = vshrl.u32 %v3729, 16
      %v3982 = vrot.slane %v3980, 2
      %v3983 = vshll.u32 %v3729, 16
      %v3985 = vrot.slane %v3983, 3
      %v3986 = vor.u32 %v3982, %v3985
      %v3987 = vsel %vm1789, %v3977, %v3986
      %v3989 = vshrl.u32 %v3907, 16
      %v3991 = vrot.slane %v3989, 2
      %v3992 = vshll.u32 %v3907, 16
      %v3994 = vrot.slane %v3992, 3
      %v3995 = vor.u32 %v3991, %v3994
      %v3996 = vsel %vm1789, %v3986, %v3995
      %v3998 = vsel %vm431, %v3924, 0
      %v4001 = vsel %vm431, %v3933, 0
      %v4004 = vsel %vm431, %v3942, 0
      %v4007 = vsel %vm431, %v3951, 0
      %v4010 = vsel %vm431, %v3960, 0
      %v4013 = vsel %vm431, %v3969, 0
      %v4016 = vsel %vm431, %v3978, 0
      %v4019 = vsel %vm431, %v3987, 0
      %v4022 = vsel %vm431, %v3996, 0
      %v4025 = vsel %vm459, %v3904, 0
      %4027 = vmatprep.subr.bf16.mxu0 0
      %4028 = vmatpush1.bf16.msra.mxu0 %v4025
      %4029 = vmatprep.subr.bf16.mxu0 0
      %4030 = vmatpush1.bf16.msra.mxu0 0
      %4031 = vmatprep.subr.bf16.mxu0 0
      %4032 = vmatpush1.bf16.msra.mxu0 0
      %4033 = vmatprep.subr.bf16.mxu0 0
      %4034 = vmatpush1.bf16.msra.mxu0 0
      %4035 = vmatprep.subr.bf16.mxu0 0
      %4036 = vmatpush1.bf16.msra.mxu0 0
      %4037 = vmatprep.subr.bf16.mxu0 0
      %4038 = vmatpush1.bf16.msra.mxu0 0
      %4039 = vmatprep.subr.bf16.mxu0 0
      %4040 = vmatpush1.bf16.msra.mxu0 0
      %4041 = vmatprep.subr.bf16.mxu0 0
      %4042 = vmatpush1.bf16.msra.mxu0 0
      %4043 = vmatprep.subr.bf16.mxu0 0
      %4044 = vmatpush1.bf16.msra.mxu0 0
      %4045 = vmatprep.subr.bf16.mxu0 0
      %4046 = vmatpush1.bf16.msra.mxu0 0
      %4047 = vmatprep.subr.bf16.mxu0 0
      %4048 = vmatpush1.bf16.msra.mxu0 0
      %4049 = vmatprep.subr.bf16.mxu0 0
      %4050 = vmatpush1.bf16.msra.mxu0 0
      %4051 = vmatprep.subr.bf16.mxu0 0
      %4052 = vmatpush1.bf16.msra.mxu0 0
      %4053 = vmatprep.subr.bf16.mxu0 0
      %4054 = vmatpush1.bf16.msra.mxu0 0
      %4055 = vmatprep.subr.bf16.mxu0 0
      %4056 = vmatpush1.bf16.msra.mxu0 0
      %4057 = vmatprep.subr.bf16.mxu0 0
      %4058 = vmatpush1.bf16.msra.mxu0 0
      %4059 = vmatprep.mubr.bf16.mxu0 0
      %4060 = vmatmul.mubr.bf16.gmra.mrb[0].mxu0 %v3998
      %v4061 = vpop.f32.mrb[0].mxu0
      %v4062 = vadd.f32 0.0, %v4061
      %v4063 = vpop.f32.mrb[0].mxu0
      %v4064 = vpop.f32.mrb[0].mxu0
      %v4065 = vadd.f32 0.0, %v4064
      %v4066 = vpop.f32.mrb[0].mxu0
      %4067 = vmatprep.mubr.bf16.mxu0 0
      %4068 = vmatmul.mubr.bf16.gmra.mrb[0].mxu0 %v4001
      %v4069 = vpop.f32.mrb[0].mxu0
      %v4070 = vadd.f32 0.0, %v4069
      %v4071 = vpop.f32.mrb[0].mxu0
      %v4072 = vpop.f32.mrb[0].mxu0
      %v4073 = vadd.f32 0.0, %v4072
      %v4074 = vpop.f32.mrb[0].mxu0
      %4075 = vmatprep.mubr.bf16.mxu0 0
      %4076 = vmatmul.mubr.bf16.gmra.mrb[0].mxu0 %v4004
      %v4077 = vpop.f32.mrb[0].mxu0
      %v4078 = vadd.f32 0.0, %v4077
      %v4079 = vpop.f32.mrb[0].mxu0
      %v4080 = vpop.f32.mrb[0].mxu0
      %v4081 = vadd.f32 0.0, %v4080
      %v4082 = vpop.f32.mrb[0].mxu0
      %4083 = vmatprep.mubr.bf16.mxu0 0
      %4084 = vmatmul.mubr.bf16.gmra.mrb[0].mxu0 %v4007
      %v4085 = vpop.f32.mrb[0].mxu0
      %v4086 = vadd.f32 0.0, %v4085
      %v4087 = vpop.f32.mrb[0].mxu0
      %v4088 = vpop.f32.mrb[0].mxu0
      %v4089 = vadd.f32 0.0, %v4088
      %v4090 = vpop.f32.mrb[0].mxu0
      %4091 = vmatprep.mubr.bf16.mxu0 0
      %4092 = vmatmul.mubr.bf16.gmra.mrb[0].mxu0 %v4010
      %v4093 = vpop.f32.mrb[0].mxu0
      %v4094 = vadd.f32 0.0, %v4093
      %v4095 = vpop.f32.mrb[0].mxu0
      %v4096 = vpop.f32.mrb[0].mxu0
      %v4097 = vadd.f32 0.0, %v4096
      %v4098 = vpop.f32.mrb[0].mxu0
      %4099 = vmatprep.mubr.bf16.mxu0 0
      %4100 = vmatmul.mubr.bf16.gmra.mrb[0].mxu0 %v4013
      %v4101 = vpop.f32.mrb[0].mxu0
      %v4102 = vadd.f32 0.0, %v4101
      %v4103 = vpop.f32.mrb[0].mxu0
      %v4104 = vpop.f32.mrb[0].mxu0
      %v4105 = vadd.f32 0.0, %v4104
      %v4106 = vpop.f32.mrb[0].mxu0
      %4107 = vmatprep.mubr.bf16.mxu0 0
      %4108 = vmatmul.mubr.bf16.gmra.mrb[0].mxu0 %v4016
      %v4109 = vpop.f32.mrb[0].mxu0
      %v4110 = vadd.f32 0.0, %v4109
      %v4111 = vpop.f32.mrb[0].mxu0
      %v4112 = vpop.f32.mrb[0].mxu0
      %v4113 = vadd.f32 0.0, %v4112
      %v4114 = vpop.f32.mrb[0].mxu0
      %4115 = vmatprep.mubr.bf16.mxu0 0
      %4116 = vmatmul.mubr.bf16.gmra.mrb[0].mxu0 %v4019
      %v4117 = vpop.f32.mrb[0].mxu0
      %v4118 = vadd.f32 0.0, %v4117
      %v4119 = vpop.f32.mrb[0].mxu0
      %v4120 = vpop.f32.mrb[0].mxu0
      %v4121 = vadd.f32 0.0, %v4120
      %v4122 = vpop.f32.mrb[0].mxu0
      %4123 = vmatprep.mubr.bf16.mxu0 0
      %4124 = vmatmul.mubr.bf16.gmra.mrb[0].mxu0 %v4022
      %v4125 = vpop.f32.mrb[0].mxu0
      %v4126 = vadd.f32 0.0, %v4125
      %v4127 = vpop.f32.mrb[0].mxu0
      %v4128 = vpop.f32.mrb[0].mxu0
      %v4129 = vadd.f32 0.0, %v4128
      %v4130 = vpop.f32.mrb[0].mxu0
      %4131 = vdwg.mxu0
      %v4132 = vadd.f32 %v3885, %v4062
      %v4133 = vadd.f32 %v3886, %v4065
      %v4134 = vadd.f32 %v3887, %v4070
      %v4135 = vadd.f32 %v3888, %v4073
      %v4136 = vadd.f32 %v3889, %v4078
      %v4137 = vadd.f32 %v3890, %v4081
      %v4138 = vadd.f32 %v3891, %v4086
      %v4139 = vadd.f32 %v3892, %v4089
      %v4140 = vadd.f32 %v3893, %v4094
      %v4141 = vadd.f32 %v3894, %v4097
      %v4142 = vadd.f32 %v3895, %v4102
      %v4143 = vadd.f32 %v3896, %v4105
      %v4144 = vadd.f32 %v3897, %v4110
      %v4145 = vadd.f32 %v3898, %v4113
      %v4146 = vadd.f32 %v3899, %v4118
      %v4147 = vadd.f32 %v3900, %v4121
      %v4148 = vadd.f32 %v3901, %v4126
      %v4149 = vadd.f32 %v3902, %v4129
      %v4150 = vld [vmem:[%s232 + $0x58] sm:$0x8]
      %v4151 = vld [vmem:[%s2033] sm:$0x3]
      %v4153 = vunpack.c.l.b16 %v4150
      %v4154 = vpack.c.b16 %v3703, %v4153
      %v4155 = vrot.slane %v4154, 3
      %v4156 = vrot.slane %v3722, 3
      %v4157 = vsel %vm2038, %v4155, %v4156
      %v4158 = vrot.slane %v3723, 3
      %v4159 = vsel %vm2038, %v4156, %v4158
      %v4160 = vrot.slane %v3724, 3
      %v4161 = vsel %vm2038, %v4158, %v4160
      %v4162 = vrot.slane %v3725, 3
      %v4163 = vsel %vm2038, %v4160, %v4162
      %v4164 = vrot.slane %v3726, 3
      %v4165 = vsel %vm2038, %v4162, %v4164
      %v4166 = vrot.slane %v3727, 3
      %v4167 = vsel %vm2038, %v4164, %v4166
      %v4168 = vrot.slane %v3728, 3
      %v4169 = vsel %vm2038, %v4166, %v4168
      %v4170 = vrot.slane %v3729, 3
      %v4171 = vsel %vm2038, %v4168, %v4170
      %v4172 = vrot.slane %v3907, 3
      %v4173 = vsel %vm2038, %v4170, %v4172
      %v4175 = vsel %vm431, %v4157, 0
      %v4178 = vsel %vm431, %v4159, 0
      %v4181 = vsel %vm431, %v4161, 0
      %v4184 = vsel %vm431, %v4163, 0
      %v4187 = vsel %vm431, %v4165, 0
      %v4190 = vsel %vm431, %v4167, 0
      %v4193 = vsel %vm431, %v4169, 0
      %v4196 = vsel %vm431, %v4171, 0
      %v4199 = vsel %vm431, %v4173, 0
      %v4202 = vsel %vm459, %v4151, 0
      %4204 = vmatprep.subr.bf16.mxu0 0
      %4205 = vmatpush1.bf16.msra.mxu0 %v4202
      %4206 = vmatprep.subr.bf16.mxu0 0
      %4207 = vmatpush1.bf16.msra.mxu0 0
      %4208 = vmatprep.subr.bf16.mxu0 0
      %4209 = vmatpush1.bf16.msra.mxu0 0
      %4210 = vmatprep.subr.bf16.mxu0 0
      %4211 = vmatpush1.bf16.msra.mxu0 0
      %4212 = vmatprep.subr.bf16.mxu0 0
      %4213 = vmatpush1.bf16.msra.mxu0 0
      %4214 = vmatprep.subr.bf16.mxu0 0
      %4215 = vmatpush1.bf16.msra.mxu0 0
      %4216 = vmatprep.subr.bf16.mxu0 0
      %4217 = vmatpush1.bf16.msra.mxu0 0
      %4218 = vmatprep.subr.bf16.mxu0 0
      %4219 = vmatpush1.bf16.msra.mxu0 0
      %4220 = vmatprep.subr.bf16.mxu0 0
      %4221 = vmatpush1.bf16.msra.mxu0 0
      %4222 = vmatprep.subr.bf16.mxu0 0
      %4223 = vmatpush1.bf16.msra.mxu0 0
      %4224 = vmatprep.subr.bf16.mxu0 0
      %4225 = vmatpush1.bf16.msra.mxu0 0
      %4226 = vmatprep.subr.bf16.mxu0 0
      %4227 = vmatpush1.bf16.msra.mxu0 0
      %4228 = vmatprep.subr.bf16.mxu0 0
      %4229 = vmatpush1.bf16.msra.mxu0 0
      %4230 = vmatprep.subr.bf16.mxu0 0
      %4231 = vmatpush1.bf16.msra.mxu0 0
      %4232 = vmatprep.subr.bf16.mxu0 0
      %4233 = vmatpush1.bf16.msra.mxu0 0
      %4234 = vmatprep.subr.bf16.mxu0 0
      %4235 = vmatpush1.bf16.msra.mxu0 0
      %4236 = vmatprep.mubr.bf16.mxu0 0
      %4237 = vmatmul.mubr.bf16.gmra.mrb[0].mxu0 %v4175
      %v4238 = vpop.f32.mrb[0].mxu0
      %v4239 = vadd.f32 0.0, %v4238
      %v4240 = vpop.f32.mrb[0].mxu0
      %v4241 = vpop.f32.mrb[0].mxu0
      %v4242 = vadd.f32 0.0, %v4241
      %v4243 = vpop.f32.mrb[0].mxu0
      %4244 = vmatprep.mubr.bf16.mxu0 0
      %4245 = vmatmul.mubr.bf16.gmra.mrb[0].mxu0 %v4178
      %v4246 = vpop.f32.mrb[0].mxu0
      %v4247 = vadd.f32 0.0, %v4246
      %v4248 = vpop.f32.mrb[0].mxu0
      %v4249 = vpop.f32.mrb[0].mxu0
      %v4250 = vadd.f32 0.0, %v4249
      %v4251 = vpop.f32.mrb[0].mxu0
      %4252 = vmatprep.mubr.bf16.mxu0 0
      %4253 = vmatmul.mubr.bf16.gmra.mrb[0].mxu0 %v4181
      %v4254 = vpop.f32.mrb[0].mxu0
      %v4255 = vadd.f32 0.0, %v4254
      %v4256 = vpop.f32.mrb[0].mxu0
      %v4257 = vpop.f32.mrb[0].mxu0
      %v4258 = vadd.f32 0.0, %v4257
      %v4259 = vpop.f32.mrb[0].mxu0
      %4260 = vmatprep.mubr.bf16.mxu0 0
      %4261 = vmatmul.mubr.bf16.gmra.mrb[0].mxu0 %v4184
      %v4262 = vpop.f32.mrb[0].mxu0
      %v4263 = vadd.f32 0.0, %v4262
      %v4264 = vpop.f32.mrb[0].mxu0
      %v4265 = vpop.f32.mrb[0].mxu0
      %v4266 = vadd.f32 0.0, %v4265
      %v4267 = vpop.f32.mrb[0].mxu0
      %4268 = vmatprep.mubr.bf16.mxu0 0
      %4269 = vmatmul.mubr.bf16.gmra.mrb[0].mxu0 %v4187
      %v4270 = vpop.f32.mrb[0].mxu0
      %v4271 = vadd.f32 0.0, %v4270
      %v4272 = vpop.f32.mrb[0].mxu0
      %v4273 = vpop.f32.mrb[0].mxu0
      %v4274 = vadd.f32 0.0, %v4273
      %v4275 = vpop.f32.mrb[0].mxu0
      %4276 = vmatprep.mubr.bf16.mxu0 0
      %4277 = vmatmul.mubr.bf16.gmra.mrb[0].mxu0 %v4190
      %v4278 = vpop.f32.mrb[0].mxu0
      %v4279 = vadd.f32 0.0, %v4278
      %v4280 = vpop.f32.mrb[0].mxu0
      %v4281 = vpop.f32.mrb[0].mxu0
      %v4282 = vadd.f32 0.0, %v4281
      %v4283 = vpop.f32.mrb[0].mxu0
      %4284 = vmatprep.mubr.bf16.mxu0 0
      %4285 = vmatmul.mubr.bf16.gmra.mrb[0].mxu0 %v4193
      %v4286 = vpop.f32.mrb[0].mxu0
      %v4287 = vadd.f32 0.0, %v4286
      %v4288 = vpop.f32.mrb[0].mxu0
      %v4289 = vpop.f32.mrb[0].mxu0
      %v4290 = vadd.f32 0.0, %v4289
      %v4291 = vpop.f32.mrb[0].mxu0
      %4292 = vmatprep.mubr.bf16.mxu0 0
      %4293 = vmatmul.mubr.bf16.gmra.mrb[0].mxu0 %v4196
      %v4294 = vpop.f32.mrb[0].mxu0
      %v4295 = vadd.f32 0.0, %v4294
      %v4296 = vpop.f32.mrb[0].mxu0
      %v4297 = vpop.f32.mrb[0].mxu0
      %v4298 = vadd.f32 0.0, %v4297
      %v4299 = vpop.f32.mrb[0].mxu0
      %4300 = vmatprep.mubr.bf16.mxu0 0
      %4301 = vmatmul.mubr.bf16.gmra.mrb[0].mxu0 %v4199
      %v4302 = vpop.f32.mrb[0].mxu0
      %v4303 = vadd.f32 0.0, %v4302
      %v4304 = vpop.f32.mrb[0].mxu0
      %v4305 = vpop.f32.mrb[0].mxu0
      %v4306 = vadd.f32 0.0, %v4305
      %v4307 = vpop.f32.mrb[0].mxu0
      %4308 = vdwg.mxu0
      %v4309 = vadd.f32 %v4132, %v4239
      %v4310 = vadd.f32 %v4133, %v4242
      %v4311 = vadd.f32 %v4134, %v4247
      %v4312 = vadd.f32 %v4135, %v4250
      %v4313 = vadd.f32 %v4136, %v4255
      %v4314 = vadd.f32 %v4137, %v4258
      %v4315 = vadd.f32 %v4138, %v4263
      %v4316 = vadd.f32 %v4139, %v4266
      %v4317 = vadd.f32 %v4140, %v4271
      %v4318 = vadd.f32 %v4141, %v4274
      %v4319 = vadd.f32 %v4142, %v4279
      %v4320 = vadd.f32 %v4143, %v4282
      %v4321 = vadd.f32 %v4144, %v4287
      %v4322 = vadd.f32 %v4145, %v4290
      %v4323 = vadd.f32 %v4146, %v4295
      %v4324 = vadd.f32 %v4147, %v4298
      %v4325 = vadd.f32 %v4148, %v4303
      %v4326 = vadd.f32 %v4149, %v4306
      %v4327 = vld [vmem:[%s239] sm:$0x1]
      %v4329 = vlaneseq
      %v4330 = vshrl.u32 %v4329, 7
      %v4331 = vsub.s32 0, %v4330
      %v4332 = vrot.slane %v4327, %v4331
      %v4334 = vadd.f32 %v4309, %v4332
      %v4335 = vadd.f32 %v4310, %v4332
      %v4336 = vadd.f32 %v4311, %v4332
      %v4337 = vadd.f32 %v4312, %v4332
      %v4338 = vadd.f32 %v4313, %v4332
      %v4339 = vadd.f32 %v4314, %v4332
      %v4340 = vadd.f32 %v4315, %v4332
      %v4341 = vadd.f32 %v4316, %v4332
      %v4342 = vadd.f32 %v4317, %v4332
      %v4343 = vadd.f32 %v4318, %v4332
      %v4344 = vadd.f32 %v4319, %v4332
      %v4345 = vadd.f32 %v4320, %v4332
      %v4346 = vadd.f32 %v4321, %v4332
      %v4347 = vadd.f32 %v4322, %v4332
      %v4348 = vadd.f32 %v4323, %v4332
      %v4349 = vadd.f32 %v4324, %v4332
      %v4350 = vadd.f32 %v4325, %v4332
      %v4351 = vadd.f32 %v4326, %v4332
      %v4352 = vmax.f32 %v4334, 0.0
      %v4353 = vmax.f32 %v4335, 0.0
      %v4354 = vmax.f32 %v4336, 0.0
      %v4355 = vmax.f32 %v4337, 0.0
      %v4356 = vmax.f32 %v4338, 0.0
      %v4357 = vmax.f32 %v4339, 0.0
      %v4358 = vmax.f32 %v4340, 0.0
      %v4359 = vmax.f32 %v4341, 0.0
      %v4360 = vmax.f32 %v4342, 0.0
      %v4361 = vmax.f32 %v4343, 0.0
      %v4362 = vmax.f32 %v4344, 0.0
      %v4363 = vmax.f32 %v4345, 0.0
      %v4364 = vmax.f32 %v4346, 0.0
      %v4365 = vmax.f32 %v4347, 0.0
      %v4366 = vmax.f32 %v4348, 0.0
      %v4367 = vmax.f32 %v4349, 0.0
      %v4368 = vmax.f32 %v4350, 0.0
      %v4369 = vmax.f32 %v4351, 0.0
      %v4370 = vmul.f32 %v4352, %v2257
      %v4371 = vmul.f32 %v4353, %v2262
      %v4372 = vmul.f32 %v4354, %v2267
      %v4373 = vmul.f32 %v4355, %v2272
      %v4374 = vmul.f32 %v4356, %v2277
      %v4375 = vmul.f32 %v4357, %v2282
      %v4376 = vmul.f32 %v4358, %v2287
      %v4377 = vmul.f32 %v4359, %v2292
      %v4378 = vmul.f32 %v4360, %v2297
      %v4379 = vmul.f32 %v4361, %v2302
      %v4380 = vmul.f32 %v4362, %v2307
      %v4381 = vmul.f32 %v4363, %v2312
      %v4382 = vmul.f32 %v4364, %v2317
      %v4383 = vmul.f32 %v4365, %v2322
      %v4384 = vmul.f32 %v4366, %v2327
      %v4385 = vmul.f32 %v4367, %v2332
      %v4386 = vmul.f32 %v4368, %v2337
      %v4387 = vmul.f32 %v4369, %v2342
      %v4388 = vld [vmem:[#allocation2] sm:$0xff]
      %v4389 = vld [vmem:[#allocation2 + $0x8] sm:$0xff]
      %v4390 = vld [vmem:[#allocation2 + $0x10] sm:$0xff]
      %v4391 = vld [vmem:[#allocation2 + $0x18] sm:$0xff]
      %v4392 = vld [vmem:[#allocation2 + $0x20] sm:$0xff]
      %v4393 = vld [vmem:[#allocation2 + $0x28] sm:$0xff]
      %v4394 = vld [vmem:[#allocation2 + $0x30] sm:$0xff]
      %v4395 = vld [vmem:[#allocation2 + $0x38] sm:$0xff]
      %v4396 = vld [vmem:[#allocation2 + $0x40] sm:$0xff]
      %v4397 = vld [vmem:[#allocation2 + $0x48] sm:$0xff]
      %v4398 = vld [vmem:[#allocation2 + $0x50] sm:$0xff]
      %v4399 = vld [vmem:[#allocation2 + $0x58] sm:$0xff]
      %v4400 = vld [vmem:[#allocation2 + $0x60] sm:$0xff]
      %v4401 = vld [vmem:[#allocation2 + $0x68] sm:$0xff]
      %v4402 = vld [vmem:[#allocation2 + $0x70] sm:$0xff]
      %v4403 = vld [vmem:[#allocation2 + $0x78] sm:$0xff]
      %v4404 = vld [vmem:[#allocation2 + $0x80] sm:$0xff]
      %v4405 = vld [vmem:[#allocation2 + $0x88] sm:$0xff]
      %v4406 = vadd.f32 %v4388, %v4370
      %v4407 = vadd.f32 %v4389, %v4371
      %v4408 = vadd.f32 %v4390, %v4372
      %v4409 = vadd.f32 %v4391, %v4373
      %v4410 = vadd.f32 %v4392, %v4374
      %v4411 = vadd.f32 %v4393, %v4375
      %v4412 = vadd.f32 %v4394, %v4376
      %v4413 = vadd.f32 %v4395, %v4377
      %v4414 = vadd.f32 %v4396, %v4378
      %v4415 = vadd.f32 %v4397, %v4379
      %v4416 = vadd.f32 %v4398, %v4380
      %v4417 = vadd.f32 %v4399, %v4381
      %v4418 = vadd.f32 %v4400, %v4382
      %v4419 = vadd.f32 %v4401, %v4383
      %v4420 = vadd.f32 %v4402, %v4384
      %v4421 = vadd.f32 %v4403, %v4385
      %v4422 = vadd.f32 %v4404, %v4386
      %v4423 = vadd.f32 %v4405, %v4387
      %4424 = vst [vmem:[#allocation2] sm:$0xff] %v4406
      %4425 = vst [vmem:[#allocation2 + $0x8] sm:$0xff] %v4407
      %4426 = vst [vmem:[#allocation2 + $0x10] sm:$0xff] %v4408
      %4427 = vst [vmem:[#allocation2 + $0x18] sm:$0xff] %v4409
      %4428 = vst [vmem:[#allocation2 + $0x20] sm:$0xff] %v4410
      %4429 = vst [vmem:[#allocation2 + $0x28] sm:$0xff] %v4411
      %4430 = vst [vmem:[#allocation2 + $0x30] sm:$0xff] %v4412
      %4431 = vst [vmem:[#allocation2 + $0x38] sm:$0xff] %v4413
      %4432 = vst [vmem:[#allocation2 + $0x40] sm:$0xff] %v4414
      %4433 = vst [vmem:[#allocation2 + $0x48] sm:$0xff] %v4415
      %4434 = vst [vmem:[#allocation2 + $0x50] sm:$0xff] %v4416
      %4435 = vst [vmem:[#allocation2 + $0x58] sm:$0xff] %v4417
      %4436 = vst [vmem:[#allocation2 + $0x60] sm:$0xff] %v4418
      %4437 = vst [vmem:[#allocation2 + $0x68] sm:$0xff] %v4419
      %4438 = vst [vmem:[#allocation2 + $0x70] sm:$0xff] %v4420
      %4439 = vst [vmem:[#allocation2 + $0x78] sm:$0xff] %v4421
      %4440 = vst [vmem:[#allocation2 + $0x80] sm:$0xff] %v4422
      %4441 = vst [vmem:[#allocation2 + $0x88] sm:$0xff] %v4423
      %v4442 = vld [vmem:[#allocation2] sm:$0xff]
      %v4443 = vld [vmem:[#allocation2 + $0x8] sm:$0xff]
      %v4444 = vld [vmem:[#allocation2 + $0x10] sm:$0xff]
      %v4445 = vld [vmem:[#allocation2 + $0x18] sm:$0xff]
      %v4446 = vld [vmem:[#allocation2 + $0x20] sm:$0xff]
      %v4447 = vld [vmem:[#allocation2 + $0x28] sm:$0xff]
      %v4448 = vld [vmem:[#allocation2 + $0x30] sm:$0xff]
      %v4449 = vld [vmem:[#allocation2 + $0x38] sm:$0xff]
      %v4450 = vld [vmem:[#allocation2 + $0x40] sm:$0xff]
      %v4451 = vld [vmem:[#allocation2 + $0x48] sm:$0xff]
      %v4452 = vld [vmem:[#allocation2 + $0x50] sm:$0xff]
      %v4453 = vld [vmem:[#allocation2 + $0x58] sm:$0xff]
      %v4454 = vld [vmem:[#allocation2 + $0x60] sm:$0xff]
      %v4455 = vld [vmem:[#allocation2 + $0x68] sm:$0xff]
      %v4456 = vld [vmem:[#allocation2 + $0x70] sm:$0xff]
      %v4457 = vld [vmem:[#allocation2 + $0x78] sm:$0xff]
      %v4458 = vld [vmem:[#allocation2 + $0x80] sm:$0xff]
      %v4459 = vld [vmem:[#allocation2 + $0x88] sm:$0xff]
      %v4460 = vadd.f32 %v4442, %v4443
      %v4461 = vadd.f32 %v4460, %v4444
      %v4462 = vadd.f32 %v4461, %v4445
      %v4463 = vadd.f32 %v4462, %v4446
      %v4464 = vadd.f32 %v4463, %v4447
      %v4465 = vadd.f32 %v4464, %v4448
      %v4466 = vadd.f32 %v4465, %v4449
      %v4467 = vadd.f32 %v4466, %v4450
      %v4468 = vadd.f32 %v4467, %v4451
      %v4469 = vadd.f32 %v4468, %v4452
      %v4470 = vadd.f32 %v4469, %v4453
      %v4471 = vadd.f32 %v4470, %v4454
      %v4472 = vadd.f32 %v4471, %v4455
      %v4473 = vadd.f32 %v4472, %v4456
      %v4474 = vadd.f32 %v4473, %v4457
      %v4475 = vadd.f32 %v4474, %v4458
      %v4476 = vadd.f32 %v4475, %v4459
      %v4477 = vrot.slane %v4476, 4
      %v4478 = vadd.f32 %v4476, %v4477
      %v4479 = vrot.slane %v4478, 2
      %v4480 = vadd.f32 %v4478, %v4479
      %v4481 = vrot.slane %v4480, 1
      %v4482 = vadd.f32 %v4480, %v4481
      %v4483 = vmul.f32 %v4482, 0.00390625
      %4484 = vst [vmem:[%s246] sm:$0xff] %v4483
      %p4485 = scmp.lt.s32.totalorder %s19, 1
      %s4486 = scalar_select %p4485, %s19, 1
      %p4487 = scmp.lt.s32.totalorder %s20, 0
      %s4488 = scalar_select %p4487, %s20, 0
      %s4489 = sadd.s32 %s4488, %s4486
      %s4490 = smul.addr %s4489, 8
      %s4491 = scalar_lea.vmem %s4, %s4490
      // Predicated region
      $region37: #{img_classifier_forward.1} parent=35 // pred_check
        %p4492 = pneg %p146
      $region38: #{img_classifier_forward.1} parent=35 // pred_check_branch
        %4494 = sbr.rel (%p4492) target = $region40
      $region39: #{img_classifier_forward.1} parent=35 // pred_region
        _
      $region40: #{img_classifier_forward.1} parent=35 // pred_fallthru
        _
    $region36: #{img_classifier_forward.1} parent=5 // pred_fallthru
      _
    %p4495 = scmp.le.s32.totalorder 2, %s10
    // Predicated region
    $region41: #{img_classifier_forward.1} parent=5 // pred_check
      %p4496 = pneg %p4495
    $region42: #{img_classifier_forward.1} parent=5 // pred_check_branch
      %4498 = sbr.rel (%p4496) target = $region44
    $region43: #{img_classifier_forward.1} parent=5 // pred_region
      %s4499 = ssub.s32 %s10, 2
      // Predicated region
      $region45: #{img_classifier_forward.1} parent=43 // pred_check
        %p4500 = pneg %p152
      $region46: #{img_classifier_forward.1} parent=43 // pred_check_branch
        %4502 = sbr.rel (%p4500) target = $region48
      $region47: #{img_classifier_forward.1} parent=43 // pred_region
        %p4503 = scmp.lt.s32.totalorder %s21, 1
        %s4504 = scalar_select %p4503, %s21, 1
        %p4505 = scmp.lt.s32.totalorder %s22, 0
        %s4506 = scalar_select %p4505, %s22, 0
        %s4507 = sadd.s32 %s4506, %s4504
        %s4508 = smul.addr %s4507, 8
        %s4509 = scalar_lea.vmem %s4, %s4508
      $region48: #{img_classifier_forward.1} parent=43 // pred_fallthru
        _
    $region44: #{img_classifier_forward.1} parent=5 // pred_fallthru
      _
  $region6: #{img_classifier_forward.1} parent=0 // loop_footer
    %s14 = sadd.s32 1, %s10
  $region7: #{img_classifier_forward.1} parent=0 // loop_footer_branch
    %9 = sbr.rel target = $region3
  $region8: #{img_classifier_forward.1} parent=0 // loop_exit
    _

</llo_original>
